<compile_context>
chip_gen: v5e
topology: v5e:2x2
jax: 0.10.0
libtpu: 0.0.40
codegen_flags: <defaults>
</compile_context>

<pallas_src>
import jax
import jax.numpy as jnp
from jax.experimental import pallas as pl
from jax.experimental.pallas import tpu as pltpu

LANE = 128


def _round_up(x, m):
    return ((x + m - 1) // m) * m


def _pad2(a, rows, cols):
    r, c = a.shape
    return jnp.pad(a, ((0, rows - r), (0, cols - c)))


def _compiler_params():
    # Single grid axis over M tiles; "parallel" lets v7x shard it across its
    # two TensorCores (harmless on 1-TC v5e/v6e).
    return pltpu.CompilerParams(dimension_semantics=("parallel",))


# ----------------------------------------------------------------------------
# Pallas kernels
# ----------------------------------------------------------------------------
def _conv1_pool_kernel(x00_ref, x01_ref, x10_ref, x11_ref, w_ref, b_ref, o_ref):
    """conv1 as matmul over the 4 pooling-candidate patch matrices,
    bias + ReLU + 2x2 max-pool fused while the tile is in VMEM."""
    w = w_ref[...]
    b = b_ref[...]

    def branch(x_ref):
        acc = jnp.dot(x_ref[...], w, preferred_element_type=jnp.float32)
        return jnp.maximum(acc + b, 0.0)          # f32 epilogue

    o_ref[...] = jnp.maximum(
        jnp.maximum(branch(x00_ref), branch(x01_ref)),
        jnp.maximum(branch(x10_ref), branch(x11_ref)),
    ).astype(o_ref.dtype)


def _matmul_bias_relu_kernel(x_ref, w_ref, b_ref, o_ref):
    acc = jnp.dot(x_ref[...], w_ref[...], preferred_element_type=jnp.float32)
    o_ref[...] = jnp.maximum(acc + b_ref[...], 0.0).astype(o_ref.dtype)


def _fc_fused_kernel(x_ref, w1_ref, b1_ref, w2_ref, b2_ref, o_ref):
    """fc1 (bf16 in, f32 acc) + ReLU + fc2 (f32) in one call; the hidden
    activation stays in VMEM/vregs."""
    h = jnp.dot(x_ref[...], w1_ref[...], preferred_element_type=jnp.float32)
    h = jnp.maximum(h + b1_ref[...], 0.0)
    out = jnp.dot(h, w2_ref[...], preferred_element_type=jnp.float32)
    o_ref[...] = (out + b2_ref[...]).astype(o_ref.dtype)


# ----------------------------------------------------------------------------
# pallas_call wrappers (M-tiled, lane-dense N, bf16 inputs / f32 accumulation)
# ----------------------------------------------------------------------------
def conv1_relu_pool(cands, w, b, *, tile_m=512):
    M, K = cands[0].shape                 # M = B*12*12 pooled rows
    N = w.shape[1]                        # 128 (padded)
    tm = min(tile_m, _round_up(M, 16))
    Mp = _round_up(M, tm)
    cands = [jnp.pad(c, ((0, Mp - M), (0, 0))).astype(jnp.bfloat16) for c in cands]
    out = pl.pallas_call(
        _conv1_pool_kernel,
        grid=(Mp // tm,),
        in_specs=[pl.BlockSpec((tm, K), lambda i: (i, 0)) for _ in range(4)]
        + [
            pl.BlockSpec((K, N), lambda i: (0, 0)),
            pl.BlockSpec((1, N), lambda i: (0, 0)),
        ],
        out_specs=pl.BlockSpec((tm, N), lambda i: (i, 0)),
        out_shape=jax.ShapeDtypeStruct((Mp, N), jnp.float32),
        compiler_params=_compiler_params(),
    )(*cands, w, b)
    return out[:M]


def matmul_bias_relu(x, w, b, *, tile_m=512):
    M, K = x.shape
    N = w.shape[1]
    tm = min(tile_m, _round_up(M, 16))
    Mp = _round_up(M, tm)
    xp = jnp.pad(x, ((0, Mp - M), (0, 0))).astype(jnp.bfloat16)
    out = pl.pallas_call(
        _matmul_bias_relu_kernel,
        grid=(Mp // tm,),
        in_specs=[
            pl.BlockSpec((tm, K), lambda i: (i, 0)),
            pl.BlockSpec((K, N), lambda i: (0, 0)),
            pl.BlockSpec((1, N), lambda i: (0, 0)),
        ],
        out_specs=pl.BlockSpec((tm, N), lambda i: (i, 0)),
        out_shape=jax.ShapeDtypeStruct((Mp, N), jnp.float32),
        compiler_params=_compiler_params(),
    )(xp, w, b)
    return out[:M]


def fc1_relu_fc2(x, w1, b1, w2, b2, *, tile_m=256):
    # Per-tile VMEM: x(256,2000)bf16 + w1(2000,512)bf16 + w2(512,128)f32
    # + h/out f32 ≈ 4 MB incl. double-buffering — well under v7x's 32 MiB
    # scoped-VMEM default, so no vmem_limit override needed.
    M, K = x.shape
    N1 = w1.shape[1]
    N2 = w2.shape[1]
    tm = min(tile_m, _round_up(M, 16))
    Mp = _round_up(M, tm)
    xp = jnp.pad(x, ((0, Mp - M), (0, 0))).astype(jnp.bfloat16)
    out = pl.pallas_call(
        _fc_fused_kernel,
        grid=(Mp // tm,),
        in_specs=[
            pl.BlockSpec((tm, K), lambda i: (i, 0)),
            pl.BlockSpec((K, N1), lambda i: (0, 0)),
            pl.BlockSpec((1, N1), lambda i: (0, 0)),
            pl.BlockSpec((N1, N2), lambda i: (0, 0)),
            pl.BlockSpec((1, N2), lambda i: (0, 0)),
        ],
        out_specs=pl.BlockSpec((tm, N2), lambda i: (i, 0)),
        out_shape=jax.ShapeDtypeStruct((Mp, N2), jnp.float32),
        compiler_params=_compiler_params(),
    )(xp, w1, b1, w2, b2)
    return out[:M]


# ----------------------------------------------------------------------------
# Parameters (torch layout) + one-time repack for the kernels
# ----------------------------------------------------------------------------
def init_params(key):
    """Deterministic PyTorch-style uniform(-1/sqrt(fan_in), 1/sqrt(fan_in))."""
    ks = jax.random.split(key, 8)

    def u(k, shape, fan_in):
        bound = 1.0 / jnp.sqrt(jnp.float32(fan_in))
        return jax.random.uniform(k, shape, jnp.float32, -bound, bound)

    return {
        "w1": u(ks[0], (10, 1, 5, 5), 25), "b1": u(ks[1], (10,), 25),
        "w2": u(ks[2], (20, 10, 3, 3), 90), "b2": u(ks[3], (20,), 90),
        "wfc1": u(ks[4], (500, 2000), 2000), "bfc1": u(ks[5], (500,), 2000),
        "wfc2": u(ks[6], (10, 500), 500), "bfc2": u(ks[7], (10,), 500),
    }


def prepare_params(p):
    """One-time repack: channels-last patch K ordering, lane-padded N (and fc
    K), bf16 matmul weights with f32 biases."""
    # conv1: (10,1,5,5) -> (25,10), K order (kh,kw); pad N 10 -> 128.
    w1 = _pad2(p["w1"].reshape(10, 25).T, 25, LANE).astype(jnp.bfloat16)
    b1 = jnp.pad(p["b1"], (0, LANE - 10)).reshape(1, LANE)
    # conv2: (20,10,3,3) -> (kh,kw,cin,cout) -> (90,20); pad N 20 -> 128.
    w2 = _pad2(p["w2"].transpose(2, 3, 1, 0).reshape(90, 20), 90, LANE).astype(jnp.bfloat16)
    b2 = jnp.pad(p["b2"], (0, LANE - 20)).reshape(1, LANE)
    # fc1: permute input dim from torch NCHW flatten (c,h,w) to our (h,w,c)
    # channels-last flatten; pad N 500 -> 512.
    wfc1 = p["wfc1"].reshape(500, 20, 10, 10).transpose(0, 2, 3, 1).reshape(500, 2000).T
    wfc1 = _pad2(wfc1, 2000, 512).astype(jnp.bfloat16)
    bfc1 = jnp.pad(p["bfc1"], (0, 512 - 500)).reshape(1, 512)
    # fc2 stays f32 (tiny): K 500 -> 512 (zero rows), N 10 -> 128 (zero cols).
    wfc2 = _pad2(p["wfc2"].T, 512, LANE)
    bfc2 = jnp.pad(p["bfc2"], (0, LANE - 10)).reshape(1, LANE)
    return {"w1": w1, "b1": b1, "w2": w2, "b2": b2,
            "wfc1": wfc1, "bfc1": bfc1, "wfc2": wfc2, "bfc2": bfc2}


# ----------------------------------------------------------------------------
# Forward pass (3 pallas_calls; all other ops are thin XLA glue)
# ----------------------------------------------------------------------------
def conv2d_mnist_forward(x, pp):
    B = x.shape[0]
    xi = x[:, 0]                                             # (B,28,28), Cin=1

    # conv1 im2col, channels-last, K order (kh,kw): (B,24,24,25)
    p1 = jnp.stack(
        [xi[:, i:i + 24, j:j + 24] for i in range(5) for j in range(5)], axis=-1)
    # 2x2 pooling candidates as four row-aligned (B*144, 25) patch matrices.
    cands = [p1[:, di::2, dj::2, :].reshape(B * 144, 25)
             for di in (0, 1) for dj in (0, 1)]
    y1 = conv1_relu_pool(cands, pp["w1"], pp["b1"])          # (B*144, 128)
    y1 = y1[:, :10].reshape(B, 12, 12, 10)                   # pooled, channels-last

    # conv2 im2col, K order (kh,kw,cin): (B,10,10,90) -> (B*100, 90)
    p2 = jnp.concatenate(
        [y1[:, i:i + 10, j:j + 10, :] for i in range(3) for j in range(3)], axis=-1)
    y2 = matmul_bias_relu(p2.reshape(B * 100, 90), pp["w2"], pp["b2"])  # (B*100,128)

    # flatten in (h,w,c) order; fc1 columns were pre-permuted to match torch .view
    flat = y2[:, :20].reshape(B, 2000)
    out = fc1_relu_fc2(flat, pp["wfc1"], pp["bfc1"], pp["wfc2"], pp["bfc2"])
    return out[:, :10]


if __name__ == "__main__":
    key = jax.random.PRNGKey(0)
    k_param, k_x = jax.random.split(key)
    params = prepare_params(init_params(k_param))
    # MNIST-shaped input (28x28 with 1 channel is required by fc1 = 20*10*10)
    x = jax.random.normal(k_x, (2, 1, 28, 28), dtype=jnp.float32)

    fwd = jax.jit(conv2d_mnist_forward)
    logits = fwd(x, params)
    jax.block_until_ready(logits)
    assert logits.shape == (2, 10), logits.shape
    print("KERNEL_OK")
</pallas_src>

<mosaic_0001>
module attributes {stable_mosaic.version = 11 : i64} {
  func.func @_conv1_pool_kernel(%arg0: i32, %arg1: memref<288x25xbf16, #tpu.memory_space<vmem>>, %arg2: memref<288x25xbf16, #tpu.memory_space<vmem>>, %arg3: memref<288x25xbf16, #tpu.memory_space<vmem>>, %arg4: memref<288x25xbf16, #tpu.memory_space<vmem>>, %arg5: memref<25x128xbf16, #tpu.memory_space<vmem>>, %arg6: memref<1x128xf32, #tpu.memory_space<vmem>>, %arg7: memref<288x128xf32, #tpu.memory_space<vmem>>) attributes {dimension_semantics = [#tpu.dimension_semantics<parallel>], iteration_bounds = array<i64: 1>, scalar_prefetch = 0 : i64, scratch_operands = 0 : i64, tpu.core_type = #tpu.core_type<tc>, window_params = [{transform_indices = @transform_0, window_bounds = array<i64: 288, 25>}, {transform_indices = @transform_1, window_bounds = array<i64: 288, 25>}, {transform_indices = @transform_2, window_bounds = array<i64: 288, 25>}, {transform_indices = @transform_3, window_bounds = array<i64: 288, 25>}, {pipeline_mode = #tpu.pipeline_mode<synchronous>, transform_indices = @transform_4, window_bounds = array<i64: 25, 128>}, {pipeline_mode = #tpu.pipeline_mode<synchronous>, transform_indices = @transform_5, window_bounds = array<i64: 1, 128>}, {transform_indices = @transform_6, window_bounds = array<i64: 288, 128>}]} {
    %c0 = arith.constant 0 : index
    %c0_0 = arith.constant 0 : index
    %0 = vector.load %arg5[%c0, %c0_0] : memref<25x128xbf16, #tpu.memory_space<vmem>>, vector<25x128xbf16>
    %c0_1 = arith.constant 0 : index
    %c0_2 = arith.constant 0 : index
    %1 = vector.load %arg6[%c0_1, %c0_2] : memref<1x128xf32, #tpu.memory_space<vmem>>, vector<1x128xf32>
    %c0_3 = arith.constant 0 : index
    %c0_4 = arith.constant 0 : index
    %2 = vector.load %arg1[%c0_3, %c0_4] : memref<288x25xbf16, #tpu.memory_space<vmem>>, vector<288x25xbf16>
    %cst = arith.constant dense<0.000000e+00> : vector<288x128xf32>
    %3 = tpu.matmul %2, %0, %cst {dimension_numbers = #tpu.dot_dimension_numbers<[1], [0], [0], [1], [0, 0, 1, 1], [], []>} : vector<288x25xbf16>, vector<25x128xbf16>, vector<288x128xf32> -> vector<288x128xf32>
    %4 = vector.broadcast %1 : vector<1x128xf32> to vector<288x128xf32>
    %5 = arith.addf %3, %4 : vector<288x128xf32>
    %cst_5 = arith.constant 0.000000e+00 : f32
    %6 = vector.broadcast %cst_5 : f32 to vector<288x128xf32>
    %7 = arith.maximumf %5, %6 : vector<288x128xf32>
    %c0_6 = arith.constant 0 : index
    %c0_7 = arith.constant 0 : index
    %8 = vector.load %arg2[%c0_6, %c0_7] : memref<288x25xbf16, #tpu.memory_space<vmem>>, vector<288x25xbf16>
    %cst_8 = arith.constant dense<0.000000e+00> : vector<288x128xf32>
    %9 = tpu.matmul %8, %0, %cst_8 {dimension_numbers = #tpu.dot_dimension_numbers<[1], [0], [0], [1], [0, 0, 1, 1], [], []>} : vector<288x25xbf16>, vector<25x128xbf16>, vector<288x128xf32> -> vector<288x128xf32>
    %10 = vector.broadcast %1 : vector<1x128xf32> to vector<288x128xf32>
    %11 = arith.addf %9, %10 : vector<288x128xf32>
    %cst_9 = arith.constant 0.000000e+00 : f32
    %12 = vector.broadcast %cst_9 : f32 to vector<288x128xf32>
    %13 = arith.maximumf %11, %12 : vector<288x128xf32>
    %14 = arith.maximumf %7, %13 : vector<288x128xf32>
    %c0_10 = arith.constant 0 : index
    %c0_11 = arith.constant 0 : index
    %15 = vector.load %arg3[%c0_10, %c0_11] : memref<288x25xbf16, #tpu.memory_space<vmem>>, vector<288x25xbf16>
    %cst_12 = arith.constant dense<0.000000e+00> : vector<288x128xf32>
    %16 = tpu.matmul %15, %0, %cst_12 {dimension_numbers = #tpu.dot_dimension_numbers<[1], [0], [0], [1], [0, 0, 1, 1], [], []>} : vector<288x25xbf16>, vector<25x128xbf16>, vector<288x128xf32> -> vector<288x128xf32>
    %17 = vector.broadcast %1 : vector<1x128xf32> to vector<288x128xf32>
    %18 = arith.addf %16, %17 : vector<288x128xf32>
    %cst_13 = arith.constant 0.000000e+00 : f32
    %19 = vector.broadcast %cst_13 : f32 to vector<288x128xf32>
    %20 = arith.maximumf %18, %19 : vector<288x128xf32>
    %c0_14 = arith.constant 0 : index
    %c0_15 = arith.constant 0 : index
    %21 = vector.load %arg4[%c0_14, %c0_15] : memref<288x25xbf16, #tpu.memory_space<vmem>>, vector<288x25xbf16>
    %cst_16 = arith.constant dense<0.000000e+00> : vector<288x128xf32>
    %22 = tpu.matmul %21, %0, %cst_16 {dimension_numbers = #tpu.dot_dimension_numbers<[1], [0], [0], [1], [0, 0, 1, 1], [], []>} : vector<288x25xbf16>, vector<25x128xbf16>, vector<288x128xf32> -> vector<288x128xf32>
    %23 = vector.broadcast %1 : vector<1x128xf32> to vector<288x128xf32>
    %24 = arith.addf %22, %23 : vector<288x128xf32>
    %cst_17 = arith.constant 0.000000e+00 : f32
    %25 = vector.broadcast %cst_17 : f32 to vector<288x128xf32>
    %26 = arith.maximumf %24, %25 : vector<288x128xf32>
    %27 = arith.maximumf %20, %26 : vector<288x128xf32>
    %28 = arith.maximumf %14, %27 : vector<288x128xf32>
    %c0_18 = arith.constant 0 : index
    %c0_19 = arith.constant 0 : index
    %29 = vector.load %arg7[%c0_18, %c0_19] : memref<288x128xf32, #tpu.memory_space<vmem>>, vector<288x128xf32>
    tpu.vector_store %arg7[%c0_18, %c0_19], %28 {strides = array<i32>} : memref<288x128xf32, #tpu.memory_space<vmem>>, vector<288x128xf32>,
    return
  }
  func.func @transform_0(%arg0: i32) -> (i32, i32) {
    %c0_i32 = arith.constant 0 : i32
    %c0_i32_0 = arith.constant 0 : i32
    return %arg0, %c0_i32 : i32, i32
  }
  func.func @transform_1(%arg0: i32) -> (i32, i32) {
    %c0_i32 = arith.constant 0 : i32
    %c0_i32_0 = arith.constant 0 : i32
    return %arg0, %c0_i32 : i32, i32
  }
  func.func @transform_2(%arg0: i32) -> (i32, i32) {
    %c0_i32 = arith.constant 0 : i32
    %c0_i32_0 = arith.constant 0 : i32
    return %arg0, %c0_i32 : i32, i32
  }
  func.func @transform_3(%arg0: i32) -> (i32, i32) {
    %c0_i32 = arith.constant 0 : i32
    %c0_i32_0 = arith.constant 0 : i32
    return %arg0, %c0_i32 : i32, i32
  }
  func.func @transform_4(%arg0: i32) -> (i32, i32) {
    %c0_i32 = arith.constant 0 : i32
    %c0_i32_0 = arith.constant 0 : i32
    %c0_i32_1 = arith.constant 0 : i32
    return %c0_i32, %c0_i32_0 : i32, i32
  }
  func.func @transform_5(%arg0: i32) -> (i32, i32) {
    %c0_i32 = arith.constant 0 : i32
    %c0_i32_0 = arith.constant 0 : i32
    %c0_i32_1 = arith.constant 0 : i32
    return %c0_i32, %c0_i32_0 : i32, i32
  }
  func.func @transform_6(%arg0: i32) -> (i32, i32) {
    %c0_i32 = arith.constant 0 : i32
    %c0_i32_0 = arith.constant 0 : i32
    return %arg0, %c0_i32 : i32, i32
  }
}

module attributes {stable_mosaic.version = 11 : i64} {
  func.func @_matmul_bias_relu_kernel(%arg0: i32, %arg1: memref<208x90xbf16, #tpu.memory_space<vmem>>, %arg2: memref<90x128xbf16, #tpu.memory_space<vmem>>, %arg3: memref<1x128xf32, #tpu.memory_space<vmem>>, %arg4: memref<208x128xf32, #tpu.memory_space<vmem>>) attributes {dimension_semantics = [#tpu.dimension_semantics<parallel>], iteration_bounds = array<i64: 1>, scalar_prefetch = 0 : i64, scratch_operands = 0 : i64, tpu.core_type = #tpu.core_type<tc>, window_params = [{transform_indices = @transform_0, window_bounds = array<i64: 208, 90>}, {pipeline_mode = #tpu.pipeline_mode<synchronous>, transform_indices = @transform_1, window_bounds = array<i64: 90, 128>}, {pipeline_mode = #tpu.pipeline_mode<synchronous>, transform_indices = @transform_2, window_bounds = array<i64: 1, 128>}, {transform_indices = @transform_3, window_bounds = array<i64: 208, 128>}]} {
    %c0 = arith.constant 0 : index
    %c0_0 = arith.constant 0 : index
    %0 = vector.load %arg1[%c0, %c0_0] : memref<208x90xbf16, #tpu.memory_space<vmem>>, vector<208x90xbf16>
    %c0_1 = arith.constant 0 : index
    %c0_2 = arith.constant 0 : index
    %1 = vector.load %arg2[%c0_1, %c0_2] : memref<90x128xbf16, #tpu.memory_space<vmem>>, vector<90x128xbf16>
    %cst = arith.constant dense<0.000000e+00> : vector<208x128xf32>
    %2 = tpu.matmul %0, %1, %cst {dimension_numbers = #tpu.dot_dimension_numbers<[1], [0], [0], [1], [0, 0, 1, 1], [], []>} : vector<208x90xbf16>, vector<90x128xbf16>, vector<208x128xf32> -> vector<208x128xf32>
    %c0_3 = arith.constant 0 : index
    %c0_4 = arith.constant 0 : index
    %3 = vector.load %arg3[%c0_3, %c0_4] : memref<1x128xf32, #tpu.memory_space<vmem>>, vector<1x128xf32>
    %4 = vector.broadcast %3 : vector<1x128xf32> to vector<208x128xf32>
    %5 = arith.addf %2, %4 : vector<208x128xf32>
    %cst_5 = arith.constant 0.000000e+00 : f32
    %6 = vector.broadcast %cst_5 : f32 to vector<208x128xf32>
    %7 = arith.maximumf %5, %6 : vector<208x128xf32>
    %c0_6 = arith.constant 0 : index
    %c0_7 = arith.constant 0 : index
    %8 = vector.load %arg4[%c0_6, %c0_7] : memref<208x128xf32, #tpu.memory_space<vmem>>, vector<208x128xf32>
    tpu.vector_store %arg4[%c0_6, %c0_7], %7 {strides = array<i32>} : memref<208x128xf32, #tpu.memory_space<vmem>>, vector<208x128xf32>,
    return
  }
  func.func @transform_0(%arg0: i32) -> (i32, i32) {
    %c0_i32 = arith.constant 0 : i32
    %c0_i32_0 = arith.constant 0 : i32
    return %arg0, %c0_i32 : i32, i32
  }
  func.func @transform_1(%arg0: i32) -> (i32, i32) {
    %c0_i32 = arith.constant 0 : i32
    %c0_i32_0 = arith.constant 0 : i32
    %c0_i32_1 = arith.constant 0 : i32
    return %c0_i32, %c0_i32_0 : i32, i32
  }
  func.func @transform_2(%arg0: i32) -> (i32, i32) {
    %c0_i32 = arith.constant 0 : i32
    %c0_i32_0 = arith.constant 0 : i32
    %c0_i32_1 = arith.constant 0 : i32
    return %c0_i32, %c0_i32_0 : i32, i32
  }
  func.func @transform_3(%arg0: i32) -> (i32, i32) {
    %c0_i32 = arith.constant 0 : i32
    %c0_i32_0 = arith.constant 0 : i32
    return %arg0, %c0_i32 : i32, i32
  }
}

module attributes {stable_mosaic.version = 11 : i64} {
  func.func @_fc_fused_kernel(%arg0: i32, %arg1: memref<16x2000xbf16, #tpu.memory_space<vmem>>, %arg2: memref<2000x512xbf16, #tpu.memory_space<vmem>>, %arg3: memref<1x512xf32, #tpu.memory_space<vmem>>, %arg4: memref<512x128xf32, #tpu.memory_space<vmem>>, %arg5: memref<1x128xf32, #tpu.memory_space<vmem>>, %arg6: memref<16x128xf32, #tpu.memory_space<vmem>>) attributes {dimension_semantics = [#tpu.dimension_semantics<parallel>], iteration_bounds = array<i64: 1>, scalar_prefetch = 0 : i64, scratch_operands = 0 : i64, tpu.core_type = #tpu.core_type<tc>, window_params = [{transform_indices = @transform_0, window_bounds = array<i64: 16, 2000>}, {pipeline_mode = #tpu.pipeline_mode<synchronous>, transform_indices = @transform_1, window_bounds = array<i64: 2000, 512>}, {pipeline_mode = #tpu.pipeline_mode<synchronous>, transform_indices = @transform_2, window_bounds = array<i64: 1, 512>}, {pipeline_mode = #tpu.pipeline_mode<synchronous>, transform_indices = @transform_3, window_bounds = array<i64: 512, 128>}, {pipeline_mode = #tpu.pipeline_mode<synchronous>, transform_indices = @transform_4, window_bounds = array<i64: 1, 128>}, {transform_indices = @transform_5, window_bounds = array<i64: 16, 128>}]} {
    %c0 = arith.constant 0 : index
    %c0_0 = arith.constant 0 : index
    %0 = vector.load %arg1[%c0, %c0_0] : memref<16x2000xbf16, #tpu.memory_space<vmem>>, vector<16x2000xbf16>
    %c0_1 = arith.constant 0 : index
    %c0_2 = arith.constant 0 : index
    %1 = vector.load %arg2[%c0_1, %c0_2] : memref<2000x512xbf16, #tpu.memory_space<vmem>>, vector<2000x512xbf16>
    %cst = arith.constant dense<0.000000e+00> : vector<16x512xf32>
    %2 = tpu.matmul %0, %1, %cst {dimension_numbers = #tpu.dot_dimension_numbers<[1], [0], [0], [1], [0, 0, 1, 1], [], []>} : vector<16x2000xbf16>, vector<2000x512xbf16>, vector<16x512xf32> -> vector<16x512xf32>
    %c0_3 = arith.constant 0 : index
    %c0_4 = arith.constant 0 : index
    %3 = vector.load %arg3[%c0_3, %c0_4] : memref<1x512xf32, #tpu.memory_space<vmem>>, vector<1x512xf32>
    %4 = vector.broadcast %3 : vector<1x512xf32> to vector<16x512xf32>
    %5 = arith.addf %2, %4 : vector<16x512xf32>
    %cst_5 = arith.constant 0.000000e+00 : f32
    %6 = vector.broadcast %cst_5 : f32 to vector<16x512xf32>
    %7 = arith.maximumf %5, %6 : vector<16x512xf32>
    %c0_6 = arith.constant 0 : index
    %c0_7 = arith.constant 0 : index
    %8 = vector.load %arg4[%c0_6, %c0_7] : memref<512x128xf32, #tpu.memory_space<vmem>>, vector<512x128xf32>
    %cst_8 = arith.constant dense<0.000000e+00> : vector<16x128xf32>
    %9 = tpu.matmul %7, %8, %cst_8 {dimension_numbers = #tpu.dot_dimension_numbers<[1], [0], [0], [1], [0, 0, 1, 1], [], []>} : vector<16x512xf32>, vector<512x128xf32>, vector<16x128xf32> -> vector<16x128xf32>
    %c0_9 = arith.constant 0 : index
    %c0_10 = arith.constant 0 : index
    %10 = vector.load %arg5[%c0_9, %c0_10] : memref<1x128xf32, #tpu.memory_space<vmem>>, vector<1x128xf32>
    %11 = vector.broadcast %10 : vector<1x128xf32> to vector<16x128xf32>
    %12 = arith.addf %9, %11 : vector<16x128xf32>
    %c0_11 = arith.constant 0 : index
    %c0_12 = arith.constant 0 : index
    %13 = vector.load %arg6[%c0_11, %c0_12] : memref<16x128xf32, #tpu.memory_space<vmem>>, vector<16x128xf32>
    tpu.vector_store %arg6[%c0_11, %c0_12], %12 {strides = array<i32>} : memref<16x128xf32, #tpu.memory_space<vmem>>, vector<16x128xf32>,
    return
  }
  func.func @transform_0(%arg0: i32) -> (i32, i32) {
    %c0_i32 = arith.constant 0 : i32
    %c0_i32_0 = arith.constant 0 : i32
    return %arg0, %c0_i32 : i32, i32
  }
  func.func @transform_1(%arg0: i32) -> (i32, i32) {
    %c0_i32 = arith.constant 0 : i32
    %c0_i32_0 = arith.constant 0 : i32
    %c0_i32_1 = arith.constant 0 : i32
    return %c0_i32, %c0_i32_0 : i32, i32
  }
  func.func @transform_2(%arg0: i32) -> (i32, i32) {
    %c0_i32 = arith.constant 0 : i32
    %c0_i32_0 = arith.constant 0 : i32
    %c0_i32_1 = arith.constant 0 : i32
    return %c0_i32, %c0_i32_0 : i32, i32
  }
  func.func @transform_3(%arg0: i32) -> (i32, i32) {
    %c0_i32 = arith.constant 0 : i32
    %c0_i32_0 = arith.constant 0 : i32
    %c0_i32_1 = arith.constant 0 : i32
    return %c0_i32, %c0_i32_0 : i32, i32
  }
  func.func @transform_4(%arg0: i32) -> (i32, i32) {
    %c0_i32 = arith.constant 0 : i32
    %c0_i32_0 = arith.constant 0 : i32
    %c0_i32_1 = arith.constant 0 : i32
    return %c0_i32, %c0_i32_0 : i32, i32
  }
  func.func @transform_5(%arg0: i32) -> (i32, i32) {
    %c0_i32 = arith.constant 0 : i32
    %c0_i32_0 = arith.constant 0 : i32
    return %arg0, %c0_i32 : i32, i32
  }
}

</mosaic_0001>

<llo_original>
// kernel: conv2d_mnist_forward.3
$region0: #{conv2d_mnist_forward.3}
  #allocation0 [shape = 'u32[]', space=smem, size = 0x4, offset = 0x4, fixed_abs, tag = 'smem constant byte address 0x4 - core index']
  #allocation1 [shape = 'u32[72,128]{1,0:T(1,128)}', space=vmem, size = 0x9000, scoped, tag = 'internal scratch']
  %s0 = inlined_call_operand.vmem [shape: bf16[288,25], index: 0, kind: input, shape index: {}]
  %s1 = inlined_call_operand.vmem [shape: bf16[288,25], index: 1, kind: input, shape index: {}]
  %s2 = inlined_call_operand.vmem [shape: bf16[288,25], index: 2, kind: input, shape index: {}]
  %s3 = inlined_call_operand.vmem [shape: bf16[288,25], index: 3, kind: input, shape index: {}]
  %s4 = inlined_call_operand.vmem [shape: bf16[25,128], index: 4, kind: input, shape index: {}]
  %s5 = inlined_call_operand.vmem [shape: f32[1,128], index: 5, kind: input, shape index: {}]
  %s6 = inlined_call_operand.vmem [shape: f32[288,128], index: 6, kind: output, shape index: {}]
  %s7 = sld [smem:[#allocation0]]
  $region34: #{conv2d_mnist_forward.3} parent=0
    _
  %s9 = ssub.s32 1, %s7
  %s10 = scalar_select 0, %s9, %s7
  // Predicated region
  $region2: #{conv2d_mnist_forward.3} parent=0 // pred_check
    _
  $region3: #{conv2d_mnist_forward.3} parent=0 // pred_check_branch
    %12 = sbr.rel (0) target = $region5
  $region4: #{conv2d_mnist_forward.3} parent=0 // pred_region
    _
  $region5: #{conv2d_mnist_forward.3} parent=0 // pred_fallthru
    _
  // Predicated region
  $region6: #{conv2d_mnist_forward.3} parent=0 // pred_check
    _
  $region7: #{conv2d_mnist_forward.3} parent=0 // pred_check_branch
    %14 = sbr.rel (0) target = $region9
  $region8: #{conv2d_mnist_forward.3} parent=0 // pred_region
    _
  $region9: #{conv2d_mnist_forward.3} parent=0 // pred_fallthru
    _
  // Predicated region
  $region10: #{conv2d_mnist_forward.3} parent=0 // pred_check
    _
  $region11: #{conv2d_mnist_forward.3} parent=0 // pred_check_branch
    %16 = sbr.rel (0) target = $region13
  $region12: #{conv2d_mnist_forward.3} parent=0 // pred_region
    _
  $region13: #{conv2d_mnist_forward.3} parent=0 // pred_fallthru
    _
  // Predicated region
  $region14: #{conv2d_mnist_forward.3} parent=0 // pred_check
    _
  $region15: #{conv2d_mnist_forward.3} parent=0 // pred_check_branch
    %18 = sbr.rel (0) target = $region17
  $region16: #{conv2d_mnist_forward.3} parent=0 // pred_region
    _
  $region17: #{conv2d_mnist_forward.3} parent=0 // pred_fallthru
    _
  // Predicated region
  $region18: #{conv2d_mnist_forward.3} parent=0 // pred_check
    _
  $region19: #{conv2d_mnist_forward.3} parent=0 // pred_check_branch
    %20 = sbr.rel (0) target = $region21
  $region20: #{conv2d_mnist_forward.3} parent=0 // pred_region
    _
  $region21: #{conv2d_mnist_forward.3} parent=0 // pred_fallthru
    _
  // Predicated region
  $region22: #{conv2d_mnist_forward.3} parent=0 // pred_check
    _
  $region23: #{conv2d_mnist_forward.3} parent=0 // pred_check_branch
    %22 = sbr.rel (0) target = $region25
  $region24: #{conv2d_mnist_forward.3} parent=0 // pred_region
    _
  $region25: #{conv2d_mnist_forward.3} parent=0 // pred_fallthru
    _
  %v24 = vld [vmem:[%s4] sm:$0xf]
  %v25 = vld [vmem:[%s4 + $0x4] sm:$0xf]
  %v26 = vld [vmem:[%s4 + $0x8] sm:$0xf]
  %v27 = vld [vmem:[%s4 + $0xc] sm:$0x1]
  %v28 = vld [vmem:[%s5] sm:$0x1]
  %v29 = vld [vmem:[%s0] sm:$0xf]
  %v30 = vld [vmem:[%s0 + $0x4] sm:$0xf]
  %v31 = vld [vmem:[%s0 + $0x8] sm:$0xf]
  %v32 = vld [vmem:[%s0 + $0xc] sm:$0xf]
  %v33 = vld [vmem:[%s0 + $0x10] sm:$0xf]
  %v34 = vld [vmem:[%s0 + $0x14] sm:$0xf]
  %v35 = vld [vmem:[%s0 + $0x18] sm:$0xf]
  %v36 = vld [vmem:[%s0 + $0x1c] sm:$0xf]
  %v37 = vld [vmem:[%s0 + $0x20] sm:$0xf]
  %v38 = vld [vmem:[%s0 + $0x24] sm:$0xf]
  %v39 = vld [vmem:[%s0 + $0x28] sm:$0xf]
  %v40 = vld [vmem:[%s0 + $0x2c] sm:$0xf]
  %v41 = vld [vmem:[%s0 + $0x30] sm:$0xf]
  %v42 = vld [vmem:[%s0 + $0x34] sm:$0xf]
  %v43 = vld [vmem:[%s0 + $0x38] sm:$0xf]
  %v44 = vld [vmem:[%s0 + $0x3c] sm:$0xf]
  %v45 = vld [vmem:[%s0 + $0x40] sm:$0xf]
  %v46 = vld [vmem:[%s0 + $0x44] sm:$0xf]
  %v47 = vld [vmem:[%s0 + $0x48] sm:$0xf]
  %v48 = vld [vmem:[%s0 + $0x4c] sm:$0xf]
  %v49 = vld [vmem:[%s0 + $0x50] sm:$0xf]
  %v50 = vld [vmem:[%s0 + $0x54] sm:$0xf]
  %v51 = vld [vmem:[%s0 + $0x58] sm:$0xf]
  %v52 = vld [vmem:[%s0 + $0x5c] sm:$0xf]
  %v53 = vld [vmem:[%s0 + $0x60] sm:$0xf]
  %v54 = vld [vmem:[%s0 + $0x64] sm:$0xf]
  %v55 = vld [vmem:[%s0 + $0x68] sm:$0xf]
  %v56 = vld [vmem:[%s0 + $0x6c] sm:$0xf]
  %v57 = vld [vmem:[%s0 + $0x70] sm:$0xf]
  %v58 = vld [vmem:[%s0 + $0x74] sm:$0xf]
  %v59 = vld [vmem:[%s0 + $0x78] sm:$0xf]
  %v60 = vld [vmem:[%s0 + $0x7c] sm:$0xf]
  %v61 = vld [vmem:[%s0 + $0x80] sm:$0xf]
  %v62 = vld [vmem:[%s0 + $0x84] sm:$0xf]
  %v63 = vld [vmem:[%s0 + $0x88] sm:$0xf]
  %v64 = vld [vmem:[%s0 + $0x8c] sm:$0xf]
  %v66 = vperm.slane %v28, 0
  %v104 = vunpack.c.l.b16 %v29
  %v105 = vunpack.c.l.b16 %v30
  %v106 = vunpack.c.l.b16 %v31
  %v107 = vunpack.c.l.b16 %v32
  %v108 = vunpack.c.l.b16 %v33
  %v109 = vunpack.c.l.b16 %v34
  %v110 = vunpack.c.l.b16 %v35
  %v111 = vunpack.c.l.b16 %v36
  %v112 = vunpack.c.l.b16 %v37
  %v113 = vunpack.c.l.b16 %v38
  %v114 = vunpack.c.l.b16 %v39
  %v115 = vunpack.c.l.b16 %v40
  %v116 = vunpack.c.l.b16 %v41
  %v117 = vunpack.c.l.b16 %v42
  %v118 = vunpack.c.l.b16 %v43
  %v119 = vunpack.c.l.b16 %v44
  %v120 = vunpack.c.l.b16 %v45
  %v121 = vunpack.c.l.b16 %v46
  %v122 = vunpack.c.l.b16 %v47
  %v123 = vunpack.c.l.b16 %v48
  %v124 = vunpack.c.l.b16 %v49
  %v125 = vunpack.c.l.b16 %v50
  %v126 = vunpack.c.l.b16 %v51
  %v127 = vunpack.c.l.b16 %v52
  %v128 = vunpack.c.l.b16 %v53
  %v129 = vunpack.c.l.b16 %v54
  %v130 = vunpack.c.l.b16 %v55
  %v131 = vunpack.c.l.b16 %v56
  %v132 = vunpack.c.l.b16 %v57
  %v133 = vunpack.c.l.b16 %v58
  %v134 = vunpack.c.l.b16 %v59
  %v135 = vunpack.c.l.b16 %v60
  %v136 = vunpack.c.l.b16 %v61
  %v137 = vunpack.c.l.b16 %v62
  %v138 = vunpack.c.l.b16 %v63
  %v139 = vunpack.c.l.b16 %v64
  %v140 = vpack.c.b16 %v105, %v104
  %v141 = vpack.c.b16 %v107, %v106
  %v142 = vpack.c.b16 %v109, %v108
  %v143 = vpack.c.b16 %v111, %v110
  %v144 = vpack.c.b16 %v113, %v112
  %v145 = vpack.c.b16 %v115, %v114
  %v146 = vpack.c.b16 %v117, %v116
  %v147 = vpack.c.b16 %v119, %v118
  %v148 = vpack.c.b16 %v121, %v120
  %v149 = vpack.c.b16 %v123, %v122
  %v150 = vpack.c.b16 %v125, %v124
  %v151 = vpack.c.b16 %v127, %v126
  %v152 = vpack.c.b16 %v129, %v128
  %v153 = vpack.c.b16 %v131, %v130
  %v154 = vpack.c.b16 %v133, %v132
  %v155 = vpack.c.b16 %v135, %v134
  %v156 = vpack.c.b16 %v137, %v136
  %v157 = vpack.c.b16 %v139, %v138
  %v162 = vunpack.c.l.b16 %v24
  %v163 = vunpack.c.l.b16 %v25
  %v164 = vunpack.c.l.b16 %v26
  %v165 = vunpack.c.l.b16 %v27
  %v166 = vpack.c.b16 %v163, %v162
  %v167 = vpack.c.b16 %v165, %v164
  %vm169 = vcmask 203776
  %v171 = vsel %vm169, %v140, 0
  %v174 = vsel %vm169, %v141, 0
  %v177 = vsel %vm169, %v142, 0
  %v180 = vsel %vm169, %v143, 0
  %v183 = vsel %vm169, %v144, 0
  %v186 = vsel %vm169, %v145, 0
  %v189 = vsel %vm169, %v146, 0
  %v192 = vsel %vm169, %v147, 0
  %v195 = vsel %vm169, %v148, 0
  %v198 = vsel %vm169, %v149, 0
  %v201 = vsel %vm169, %v150, 0
  %v204 = vsel %vm169, %v151, 0
  %v207 = vsel %vm169, %v152, 0
  %v210 = vsel %vm169, %v153, 0
  %v213 = vsel %vm169, %v154, 0
  %v216 = vsel %vm169, %v155, 0
  %v219 = vsel %vm169, %v156, 0
  %v222 = vsel %vm169, %v157, 0
  %vm224 = vcmask 1043456
  %vm225 = vcmask 1044480
  %v226 = vsel %vm224, 4294967295, 65535
  %v227 = vsel %vm225, %v226, 0
  %v229 = vand.u32 %v167, %v227
  %231 = vmatpush.bf16.msra.mxu0 0
  %232 = vmatpush.bf16.msra.mxu0 0
  %233 = vmatpush.bf16.msra.mxu0 0
  %234 = vmatpush.bf16.msra.mxu0 0
  %235 = vmatpush.bf16.msra.mxu0 0
  %236 = vmatpush.bf16.msra.mxu0 0
  %237 = vmatpush.bf16.msra.mxu0 %v229
  %238 = vmatpush.bf16.msra.mxu0 %v166
  %239 = vmatmul.bf16.gmra.mxu0 %v171
  %v240 = vpop.f32.mrf.mxu0
  %v241 = vadd.f32 %v66, %v240
  %v242 = vpop.f32.mrf.mxu0
  %v243 = vadd.f32 %v66, %v242
  %244 = vmatmul.bf16.gmra.mxu0 %v174
  %v245 = vpop.f32.mrf.mxu0
  %v246 = vadd.f32 %v66, %v245
  %v247 = vpop.f32.mrf.mxu0
  %v248 = vadd.f32 %v66, %v247
  %249 = vmatmul.bf16.gmra.mxu0 %v177
  %v250 = vpop.f32.mrf.mxu0
  %v251 = vadd.f32 %v66, %v250
  %v252 = vpop.f32.mrf.mxu0
  %v253 = vadd.f32 %v66, %v252
  %254 = vmatmul.bf16.gmra.mxu0 %v180
  %v255 = vpop.f32.mrf.mxu0
  %v256 = vadd.f32 %v66, %v255
  %v257 = vpop.f32.mrf.mxu0
  %v258 = vadd.f32 %v66, %v257
  %259 = vmatmul.bf16.gmra.mxu0 %v183
  %v260 = vpop.f32.mrf.mxu0
  %v261 = vadd.f32 %v66, %v260
  %v262 = vpop.f32.mrf.mxu0
  %v263 = vadd.f32 %v66, %v262
  %264 = vmatmul.bf16.gmra.mxu0 %v186
  %v265 = vpop.f32.mrf.mxu0
  %v266 = vadd.f32 %v66, %v265
  %v267 = vpop.f32.mrf.mxu0
  %v268 = vadd.f32 %v66, %v267
  %269 = vmatmul.bf16.gmra.mxu0 %v189
  %v270 = vpop.f32.mrf.mxu0
  %v271 = vadd.f32 %v66, %v270
  %v272 = vpop.f32.mrf.mxu0
  %v273 = vadd.f32 %v66, %v272
  %274 = vmatmul.bf16.gmra.mxu0 %v192
  %v275 = vpop.f32.mrf.mxu0
  %v276 = vadd.f32 %v66, %v275
  %v277 = vpop.f32.mrf.mxu0
  %v278 = vadd.f32 %v66, %v277
  %279 = vmatmul.bf16.gmra.mxu0 %v195
  %v280 = vpop.f32.mrf.mxu0
  %v281 = vadd.f32 %v66, %v280
  %v282 = vpop.f32.mrf.mxu0
  %v283 = vadd.f32 %v66, %v282
  %284 = vmatmul.bf16.gmra.mxu0 %v198
  %v285 = vpop.f32.mrf.mxu0
  %v286 = vadd.f32 %v66, %v285
  %v287 = vpop.f32.mrf.mxu0
  %v288 = vadd.f32 %v66, %v287
  %289 = vmatmul.bf16.gmra.mxu0 %v201
  %v290 = vpop.f32.mrf.mxu0
  %v291 = vadd.f32 %v66, %v290
  %v292 = vpop.f32.mrf.mxu0
  %v293 = vadd.f32 %v66, %v292
  %294 = vmatmul.bf16.gmra.mxu0 %v204
  %v295 = vpop.f32.mrf.mxu0
  %v296 = vadd.f32 %v66, %v295
  %v297 = vpop.f32.mrf.mxu0
  %v298 = vadd.f32 %v66, %v297
  %299 = vmatmul.bf16.gmra.mxu0 %v207
  %v300 = vpop.f32.mrf.mxu0
  %v301 = vadd.f32 %v66, %v300
  %v302 = vpop.f32.mrf.mxu0
  %v303 = vadd.f32 %v66, %v302
  %304 = vmatmul.bf16.gmra.mxu0 %v210
  %v305 = vpop.f32.mrf.mxu0
  %v306 = vadd.f32 %v66, %v305
  %v307 = vpop.f32.mrf.mxu0
  %v308 = vadd.f32 %v66, %v307
  %309 = vmatmul.bf16.gmra.mxu0 %v213
  %v310 = vpop.f32.mrf.mxu0
  %v311 = vadd.f32 %v66, %v310
  %v312 = vpop.f32.mrf.mxu0
  %v313 = vadd.f32 %v66, %v312
  %314 = vmatmul.bf16.gmra.mxu0 %v216
  %v315 = vpop.f32.mrf.mxu0
  %v316 = vadd.f32 %v66, %v315
  %v317 = vpop.f32.mrf.mxu0
  %v318 = vadd.f32 %v66, %v317
  %319 = vmatmul.bf16.gmra.mxu0 %v219
  %v320 = vpop.f32.mrf.mxu0
  %v321 = vadd.f32 %v66, %v320
  %v322 = vpop.f32.mrf.mxu0
  %v323 = vadd.f32 %v66, %v322
  %324 = vmatmul.bf16.gmra.mxu0 %v222
  %v325 = vpop.f32.mrf.mxu0
  %v326 = vadd.f32 %v66, %v325
  %v327 = vpop.f32.mrf.mxu0
  %v328 = vadd.f32 %v66, %v327
  %329 = vdwg.mxu0
  %v330 = vmax.f32 %v241, 0.0
  %v331 = vmax.f32 %v243, 0.0
  %v332 = vmax.f32 %v246, 0.0
  %v333 = vmax.f32 %v248, 0.0
  %v334 = vmax.f32 %v251, 0.0
  %v335 = vmax.f32 %v253, 0.0
  %v336 = vmax.f32 %v256, 0.0
  %v337 = vmax.f32 %v258, 0.0
  %v338 = vmax.f32 %v261, 0.0
  %v339 = vmax.f32 %v263, 0.0
  %v340 = vmax.f32 %v266, 0.0
  %v341 = vmax.f32 %v268, 0.0
  %v342 = vmax.f32 %v271, 0.0
  %v343 = vmax.f32 %v273, 0.0
  %v344 = vmax.f32 %v276, 0.0
  %v345 = vmax.f32 %v278, 0.0
  %v346 = vmax.f32 %v281, 0.0
  %v347 = vmax.f32 %v283, 0.0
  %v348 = vmax.f32 %v286, 0.0
  %v349 = vmax.f32 %v288, 0.0
  %v350 = vmax.f32 %v291, 0.0
  %v351 = vmax.f32 %v293, 0.0
  %v352 = vmax.f32 %v296, 0.0
  %v353 = vmax.f32 %v298, 0.0
  %v354 = vmax.f32 %v301, 0.0
  %v355 = vmax.f32 %v303, 0.0
  %v356 = vmax.f32 %v306, 0.0
  %v357 = vmax.f32 %v308, 0.0
  %v358 = vmax.f32 %v311, 0.0
  %v359 = vmax.f32 %v313, 0.0
  %v360 = vmax.f32 %v316, 0.0
  %v361 = vmax.f32 %v318, 0.0
  %v362 = vmax.f32 %v321, 0.0
  %v363 = vmax.f32 %v323, 0.0
  %v364 = vmax.f32 %v326, 0.0
  %v365 = vmax.f32 %v328, 0.0
  %v366 = vld [vmem:[%s1] sm:$0xf]
  %v367 = vld [vmem:[%s1 + $0x4] sm:$0xf]
  %v368 = vld [vmem:[%s1 + $0x8] sm:$0xf]
  %v369 = vld [vmem:[%s1 + $0xc] sm:$0xf]
  %v370 = vld [vmem:[%s1 + $0x10] sm:$0xf]
  %v371 = vld [vmem:[%s1 + $0x14] sm:$0xf]
  %v372 = vld [vmem:[%s1 + $0x18] sm:$0xf]
  %v373 = vld [vmem:[%s1 + $0x1c] sm:$0xf]
  %v374 = vld [vmem:[%s1 + $0x20] sm:$0xf]
  %v375 = vld [vmem:[%s1 + $0x24] sm:$0xf]
  %v376 = vld [vmem:[%s1 + $0x28] sm:$0xf]
  %v377 = vld [vmem:[%s1 + $0x2c] sm:$0xf]
  %v378 = vld [vmem:[%s1 + $0x30] sm:$0xf]
  %v379 = vld [vmem:[%s1 + $0x34] sm:$0xf]
  %v380 = vld [vmem:[%s1 + $0x38] sm:$0xf]
  %v381 = vld [vmem:[%s1 + $0x3c] sm:$0xf]
  %v382 = vld [vmem:[%s1 + $0x40] sm:$0xf]
  %v383 = vld [vmem:[%s1 + $0x44] sm:$0xf]
  %v384 = vld [vmem:[%s1 + $0x48] sm:$0xf]
  %v385 = vld [vmem:[%s1 + $0x4c] sm:$0xf]
  %v386 = vld [vmem:[%s1 + $0x50] sm:$0xf]
  %v387 = vld [vmem:[%s1 + $0x54] sm:$0xf]
  %v388 = vld [vmem:[%s1 + $0x58] sm:$0xf]
  %v389 = vld [vmem:[%s1 + $0x5c] sm:$0xf]
  %v390 = vld [vmem:[%s1 + $0x60] sm:$0xf]
  %v391 = vld [vmem:[%s1 + $0x64] sm:$0xf]
  %v392 = vld [vmem:[%s1 + $0x68] sm:$0xf]
  %v393 = vld [vmem:[%s1 + $0x6c] sm:$0xf]
  %v394 = vld [vmem:[%s1 + $0x70] sm:$0xf]
  %v395 = vld [vmem:[%s1 + $0x74] sm:$0xf]
  %v396 = vld [vmem:[%s1 + $0x78] sm:$0xf]
  %v397 = vld [vmem:[%s1 + $0x7c] sm:$0xf]
  %v398 = vld [vmem:[%s1 + $0x80] sm:$0xf]
  %v399 = vld [vmem:[%s1 + $0x84] sm:$0xf]
  %v400 = vld [vmem:[%s1 + $0x88] sm:$0xf]
  %v401 = vld [vmem:[%s1 + $0x8c] sm:$0xf]
  %v438 = vunpack.c.l.b16 %v366
  %v439 = vunpack.c.l.b16 %v367
  %v440 = vunpack.c.l.b16 %v368
  %v441 = vunpack.c.l.b16 %v369
  %v442 = vunpack.c.l.b16 %v370
  %v443 = vunpack.c.l.b16 %v371
  %v444 = vunpack.c.l.b16 %v372
  %v445 = vunpack.c.l.b16 %v373
  %v446 = vunpack.c.l.b16 %v374
  %v447 = vunpack.c.l.b16 %v375
  %v448 = vunpack.c.l.b16 %v376
  %v449 = vunpack.c.l.b16 %v377
  %v450 = vunpack.c.l.b16 %v378
  %v451 = vunpack.c.l.b16 %v379
  %v452 = vunpack.c.l.b16 %v380
  %v453 = vunpack.c.l.b16 %v381
  %v454 = vunpack.c.l.b16 %v382
  %v455 = vunpack.c.l.b16 %v383
  %v456 = vunpack.c.l.b16 %v384
  %v457 = vunpack.c.l.b16 %v385
  %v458 = vunpack.c.l.b16 %v386
  %v459 = vunpack.c.l.b16 %v387
  %v460 = vunpack.c.l.b16 %v388
  %v461 = vunpack.c.l.b16 %v389
  %v462 = vunpack.c.l.b16 %v390
  %v463 = vunpack.c.l.b16 %v391
  %v464 = vunpack.c.l.b16 %v392
  %v465 = vunpack.c.l.b16 %v393
  %v466 = vunpack.c.l.b16 %v394
  %v467 = vunpack.c.l.b16 %v395
  %v468 = vunpack.c.l.b16 %v396
  %v469 = vunpack.c.l.b16 %v397
  %v470 = vunpack.c.l.b16 %v398
  %v471 = vunpack.c.l.b16 %v399
  %v472 = vunpack.c.l.b16 %v400
  %v473 = vunpack.c.l.b16 %v401
  %v474 = vpack.c.b16 %v439, %v438
  %v475 = vpack.c.b16 %v441, %v440
  %v476 = vpack.c.b16 %v443, %v442
  %v477 = vpack.c.b16 %v445, %v444
  %v478 = vpack.c.b16 %v447, %v446
  %v479 = vpack.c.b16 %v449, %v448
  %v480 = vpack.c.b16 %v451, %v450
  %v481 = vpack.c.b16 %v453, %v452
  %v482 = vpack.c.b16 %v455, %v454
  %v483 = vpack.c.b16 %v457, %v456
  %v484 = vpack.c.b16 %v459, %v458
  %v485 = vpack.c.b16 %v461, %v460
  %v486 = vpack.c.b16 %v463, %v462
  %v487 = vpack.c.b16 %v465, %v464
  %v488 = vpack.c.b16 %v467, %v466
  %v489 = vpack.c.b16 %v469, %v468
  %v490 = vpack.c.b16 %v471, %v470
  %v491 = vpack.c.b16 %v473, %v472
  %v493 = vsel %vm169, %v474, 0
  %v496 = vsel %vm169, %v475, 0
  %v499 = vsel %vm169, %v476, 0
  %v502 = vsel %vm169, %v477, 0
  %v505 = vsel %vm169, %v478, 0
  %v508 = vsel %vm169, %v479, 0
  %v511 = vsel %vm169, %v480, 0
  %v514 = vsel %vm169, %v481, 0
  %v517 = vsel %vm169, %v482, 0
  %v520 = vsel %vm169, %v483, 0
  %v523 = vsel %vm169, %v484, 0
  %v526 = vsel %vm169, %v485, 0
  %v529 = vsel %vm169, %v486, 0
  %v532 = vsel %vm169, %v487, 0
  %v535 = vsel %vm169, %v488, 0
  %v538 = vsel %vm169, %v489, 0
  %v541 = vsel %vm169, %v490, 0
  %v544 = vsel %vm169, %v491, 0
  %546 = vmatpush.bf16.msra.mxu0 0
  %547 = vmatpush.bf16.msra.mxu0 0
  %548 = vmatpush.bf16.msra.mxu0 0
  %549 = vmatpush.bf16.msra.mxu0 0
  %550 = vmatpush.bf16.msra.mxu0 0
  %551 = vmatpush.bf16.msra.mxu0 0
  %552 = vmatpush.bf16.msra.mxu0 %v229
  %553 = vmatpush.bf16.msra.mxu0 %v166
  %554 = vmatmul.bf16.gmra.mxu0 %v493
  %v555 = vpop.f32.mrf.mxu0
  %v556 = vadd.f32 %v66, %v555
  %v557 = vpop.f32.mrf.mxu0
  %v558 = vadd.f32 %v66, %v557
  %559 = vmatmul.bf16.gmra.mxu0 %v496
  %v560 = vpop.f32.mrf.mxu0
  %v561 = vadd.f32 %v66, %v560
  %v562 = vpop.f32.mrf.mxu0
  %v563 = vadd.f32 %v66, %v562
  %564 = vmatmul.bf16.gmra.mxu0 %v499
  %v565 = vpop.f32.mrf.mxu0
  %v566 = vadd.f32 %v66, %v565
  %v567 = vpop.f32.mrf.mxu0
  %v568 = vadd.f32 %v66, %v567
  %569 = vmatmul.bf16.gmra.mxu0 %v502
  %v570 = vpop.f32.mrf.mxu0
  %v571 = vadd.f32 %v66, %v570
  %v572 = vpop.f32.mrf.mxu0
  %v573 = vadd.f32 %v66, %v572
  %574 = vmatmul.bf16.gmra.mxu0 %v505
  %v575 = vpop.f32.mrf.mxu0
  %v576 = vadd.f32 %v66, %v575
  %v577 = vpop.f32.mrf.mxu0
  %v578 = vadd.f32 %v66, %v577
  %579 = vmatmul.bf16.gmra.mxu0 %v508
  %v580 = vpop.f32.mrf.mxu0
  %v581 = vadd.f32 %v66, %v580
  %v582 = vpop.f32.mrf.mxu0
  %v583 = vadd.f32 %v66, %v582
  %584 = vmatmul.bf16.gmra.mxu0 %v511
  %v585 = vpop.f32.mrf.mxu0
  %v586 = vadd.f32 %v66, %v585
  %v587 = vpop.f32.mrf.mxu0
  %v588 = vadd.f32 %v66, %v587
  %589 = vmatmul.bf16.gmra.mxu0 %v514
  %v590 = vpop.f32.mrf.mxu0
  %v591 = vadd.f32 %v66, %v590
  %v592 = vpop.f32.mrf.mxu0
  %v593 = vadd.f32 %v66, %v592
  %594 = vmatmul.bf16.gmra.mxu0 %v517
  %v595 = vpop.f32.mrf.mxu0
  %v596 = vadd.f32 %v66, %v595
  %v597 = vpop.f32.mrf.mxu0
  %v598 = vadd.f32 %v66, %v597
  %599 = vmatmul.bf16.gmra.mxu0 %v520
  %v600 = vpop.f32.mrf.mxu0
  %v601 = vadd.f32 %v66, %v600
  %v602 = vpop.f32.mrf.mxu0
  %v603 = vadd.f32 %v66, %v602
  %604 = vmatmul.bf16.gmra.mxu0 %v523
  %v605 = vpop.f32.mrf.mxu0
  %v606 = vadd.f32 %v66, %v605
  %v607 = vpop.f32.mrf.mxu0
  %v608 = vadd.f32 %v66, %v607
  %609 = vmatmul.bf16.gmra.mxu0 %v526
  %v610 = vpop.f32.mrf.mxu0
  %v611 = vadd.f32 %v66, %v610
  %v612 = vpop.f32.mrf.mxu0
  %v613 = vadd.f32 %v66, %v612
  %614 = vmatmul.bf16.gmra.mxu0 %v529
  %v615 = vpop.f32.mrf.mxu0
  %v616 = vadd.f32 %v66, %v615
  %v617 = vpop.f32.mrf.mxu0
  %v618 = vadd.f32 %v66, %v617
  %619 = vmatmul.bf16.gmra.mxu0 %v532
  %v620 = vpop.f32.mrf.mxu0
  %v621 = vadd.f32 %v66, %v620
  %v622 = vpop.f32.mrf.mxu0
  %v623 = vadd.f32 %v66, %v622
  %624 = vmatmul.bf16.gmra.mxu0 %v535
  %v625 = vpop.f32.mrf.mxu0
  %v626 = vadd.f32 %v66, %v625
  %v627 = vpop.f32.mrf.mxu0
  %v628 = vadd.f32 %v66, %v627
  %629 = vmatmul.bf16.gmra.mxu0 %v538
  %v630 = vpop.f32.mrf.mxu0
  %v631 = vadd.f32 %v66, %v630
  %v632 = vpop.f32.mrf.mxu0
  %v633 = vadd.f32 %v66, %v632
  %634 = vmatmul.bf16.gmra.mxu0 %v541
  %v635 = vpop.f32.mrf.mxu0
  %v636 = vadd.f32 %v66, %v635
  %v637 = vpop.f32.mrf.mxu0
  %v638 = vadd.f32 %v66, %v637
  %639 = vmatmul.bf16.gmra.mxu0 %v544
  %v640 = vpop.f32.mrf.mxu0
  %v641 = vadd.f32 %v66, %v640
  %v642 = vpop.f32.mrf.mxu0
  %v643 = vadd.f32 %v66, %v642
  %644 = vdwg.mxu0
  %v645 = vmax.f32 %v556, 0.0
  %v646 = vmax.f32 %v558, 0.0
  %v647 = vmax.f32 %v561, 0.0
  %v648 = vmax.f32 %v563, 0.0
  %v649 = vmax.f32 %v566, 0.0
  %v650 = vmax.f32 %v568, 0.0
  %v651 = vmax.f32 %v571, 0.0
  %v652 = vmax.f32 %v573, 0.0
  %v653 = vmax.f32 %v576, 0.0
  %v654 = vmax.f32 %v578, 0.0
  %v655 = vmax.f32 %v581, 0.0
  %v656 = vmax.f32 %v583, 0.0
  %v657 = vmax.f32 %v586, 0.0
  %v658 = vmax.f32 %v588, 0.0
  %v659 = vmax.f32 %v591, 0.0
  %v660 = vmax.f32 %v593, 0.0
  %v661 = vmax.f32 %v596, 0.0
  %v662 = vmax.f32 %v598, 0.0
  %v663 = vmax.f32 %v601, 0.0
  %v664 = vmax.f32 %v603, 0.0
  %v665 = vmax.f32 %v606, 0.0
  %v666 = vmax.f32 %v608, 0.0
  %v667 = vmax.f32 %v611, 0.0
  %v668 = vmax.f32 %v613, 0.0
  %v669 = vmax.f32 %v616, 0.0
  %v670 = vmax.f32 %v618, 0.0
  %v671 = vmax.f32 %v621, 0.0
  %v672 = vmax.f32 %v623, 0.0
  %v673 = vmax.f32 %v626, 0.0
  %v674 = vmax.f32 %v628, 0.0
  %v675 = vmax.f32 %v631, 0.0
  %v676 = vmax.f32 %v633, 0.0
  %v677 = vmax.f32 %v636, 0.0
  %v678 = vmax.f32 %v638, 0.0
  %v679 = vmax.f32 %v641, 0.0
  %v680 = vmax.f32 %v643, 0.0
  %v681 = vmax.f32 %v330, %v645
  %v682 = vmax.f32 %v331, %v646
  %v683 = vmax.f32 %v332, %v647
  %v684 = vmax.f32 %v333, %v648
  %v685 = vmax.f32 %v334, %v649
  %v686 = vmax.f32 %v335, %v650
  %v687 = vmax.f32 %v336, %v651
  %v688 = vmax.f32 %v337, %v652
  %v689 = vmax.f32 %v338, %v653
  %v690 = vmax.f32 %v339, %v654
  %v691 = vmax.f32 %v340, %v655
  %v692 = vmax.f32 %v341, %v656
  %v693 = vmax.f32 %v342, %v657
  %v694 = vmax.f32 %v343, %v658
  %v695 = vmax.f32 %v344, %v659
  %v696 = vmax.f32 %v345, %v660
  %v697 = vmax.f32 %v346, %v661
  %v698 = vmax.f32 %v347, %v662
  %v699 = vmax.f32 %v348, %v663
  %v700 = vmax.f32 %v349, %v664
  %v701 = vmax.f32 %v350, %v665
  %v702 = vmax.f32 %v351, %v666
  %v703 = vmax.f32 %v352, %v667
  %v704 = vmax.f32 %v353, %v668
  %v705 = vmax.f32 %v354, %v669
  %v706 = vmax.f32 %v355, %v670
  %v707 = vmax.f32 %v356, %v671
  %v708 = vmax.f32 %v357, %v672
  %v709 = vmax.f32 %v358, %v673
  %v710 = vmax.f32 %v359, %v674
  %v711 = vmax.f32 %v360, %v675
  %v712 = vmax.f32 %v361, %v676
  %v713 = vmax.f32 %v362, %v677
  %v714 = vmax.f32 %v363, %v678
  %v715 = vmax.f32 %v364, %v679
  %v716 = vmax.f32 %v365, %v680
  %v717 = vld [vmem:[%s2] sm:$0xf]
  %v718 = vld [vmem:[%s2 + $0x4] sm:$0xf]
  %v719 = vld [vmem:[%s2 + $0x8] sm:$0xf]
  %v720 = vld [vmem:[%s2 + $0xc] sm:$0xf]
  %v721 = vld [vmem:[%s2 + $0x10] sm:$0xf]
  %v722 = vld [vmem:[%s2 + $0x14] sm:$0xf]
  %v723 = vld [vmem:[%s2 + $0x18] sm:$0xf]
  %v724 = vld [vmem:[%s2 + $0x1c] sm:$0xf]
  %v725 = vld [vmem:[%s2 + $0x20] sm:$0xf]
  %v726 = vld [vmem:[%s2 + $0x24] sm:$0xf]
  %v727 = vld [vmem:[%s2 + $0x28] sm:$0xf]
  %v728 = vld [vmem:[%s2 + $0x2c] sm:$0xf]
  %v729 = vld [vmem:[%s2 + $0x30] sm:$0xf]
  %v730 = vld [vmem:[%s2 + $0x34] sm:$0xf]
  %v731 = vld [vmem:[%s2 + $0x38] sm:$0xf]
  %v732 = vld [vmem:[%s2 + $0x3c] sm:$0xf]
  %v733 = vld [vmem:[%s2 + $0x40] sm:$0xf]
  %v734 = vld [vmem:[%s2 + $0x44] sm:$0xf]
  %v735 = vld [vmem:[%s2 + $0x48] sm:$0xf]
  %v736 = vld [vmem:[%s2 + $0x4c] sm:$0xf]
  %v737 = vld [vmem:[%s2 + $0x50] sm:$0xf]
  %v738 = vld [vmem:[%s2 + $0x54] sm:$0xf]
  %v739 = vld [vmem:[%s2 + $0x58] sm:$0xf]
  %v740 = vld [vmem:[%s2 + $0x5c] sm:$0xf]
  %v741 = vld [vmem:[%s2 + $0x60] sm:$0xf]
  %v742 = vld [vmem:[%s2 + $0x64] sm:$0xf]
  %v743 = vld [vmem:[%s2 + $0x68] sm:$0xf]
  %v744 = vld [vmem:[%s2 + $0x6c] sm:$0xf]
  %v745 = vld [vmem:[%s2 + $0x70] sm:$0xf]
  %v746 = vld [vmem:[%s2 + $0x74] sm:$0xf]
  %v747 = vld [vmem:[%s2 + $0x78] sm:$0xf]
  %v748 = vld [vmem:[%s2 + $0x7c] sm:$0xf]
  %v749 = vld [vmem:[%s2 + $0x80] sm:$0xf]
  %v750 = vld [vmem:[%s2 + $0x84] sm:$0xf]
  %v751 = vld [vmem:[%s2 + $0x88] sm:$0xf]
  %v752 = vld [vmem:[%s2 + $0x8c] sm:$0xf]
  %v789 = vunpack.c.l.b16 %v717
  %v790 = vunpack.c.l.b16 %v718
  %v791 = vunpack.c.l.b16 %v719
  %v792 = vunpack.c.l.b16 %v720
  %v793 = vunpack.c.l.b16 %v721
  %v794 = vunpack.c.l.b16 %v722
  %v795 = vunpack.c.l.b16 %v723
  %v796 = vunpack.c.l.b16 %v724
  %v797 = vunpack.c.l.b16 %v725
  %v798 = vunpack.c.l.b16 %v726
  %v799 = vunpack.c.l.b16 %v727
  %v800 = vunpack.c.l.b16 %v728
  %v801 = vunpack.c.l.b16 %v729
  %v802 = vunpack.c.l.b16 %v730
  %v803 = vunpack.c.l.b16 %v731
  %v804 = vunpack.c.l.b16 %v732
  %v805 = vunpack.c.l.b16 %v733
  %v806 = vunpack.c.l.b16 %v734
  %v807 = vunpack.c.l.b16 %v735
  %v808 = vunpack.c.l.b16 %v736
  %v809 = vunpack.c.l.b16 %v737
  %v810 = vunpack.c.l.b16 %v738
  %v811 = vunpack.c.l.b16 %v739
  %v812 = vunpack.c.l.b16 %v740
  %v813 = vunpack.c.l.b16 %v741
  %v814 = vunpack.c.l.b16 %v742
  %v815 = vunpack.c.l.b16 %v743
  %v816 = vunpack.c.l.b16 %v744
  %v817 = vunpack.c.l.b16 %v745
  %v818 = vunpack.c.l.b16 %v746
  %v819 = vunpack.c.l.b16 %v747
  %v820 = vunpack.c.l.b16 %v748
  %v821 = vunpack.c.l.b16 %v749
  %v822 = vunpack.c.l.b16 %v750
  %v823 = vunpack.c.l.b16 %v751
  %v824 = vunpack.c.l.b16 %v752
  %v825 = vpack.c.b16 %v790, %v789
  %v826 = vpack.c.b16 %v792, %v791
  %v827 = vpack.c.b16 %v794, %v793
  %v828 = vpack.c.b16 %v796, %v795
  %v829 = vpack.c.b16 %v798, %v797
  %v830 = vpack.c.b16 %v800, %v799
  %v831 = vpack.c.b16 %v802, %v801
  %v832 = vpack.c.b16 %v804, %v803
  %v833 = vpack.c.b16 %v806, %v805
  %v834 = vpack.c.b16 %v808, %v807
  %v835 = vpack.c.b16 %v810, %v809
  %v836 = vpack.c.b16 %v812, %v811
  %v837 = vpack.c.b16 %v814, %v813
  %v838 = vpack.c.b16 %v816, %v815
  %v839 = vpack.c.b16 %v818, %v817
  %v840 = vpack.c.b16 %v820, %v819
  %v841 = vpack.c.b16 %v822, %v821
  %v842 = vpack.c.b16 %v824, %v823
  %v844 = vsel %vm169, %v825, 0
  %v847 = vsel %vm169, %v826, 0
  %v850 = vsel %vm169, %v827, 0
  %v853 = vsel %vm169, %v828, 0
  %v856 = vsel %vm169, %v829, 0
  %v859 = vsel %vm169, %v830, 0
  %v862 = vsel %vm169, %v831, 0
  %v865 = vsel %vm169, %v832, 0
  %v868 = vsel %vm169, %v833, 0
  %v871 = vsel %vm169, %v834, 0
  %v874 = vsel %vm169, %v835, 0
  %v877 = vsel %vm169, %v836, 0
  %v880 = vsel %vm169, %v837, 0
  %v883 = vsel %vm169, %v838, 0
  %v886 = vsel %vm169, %v839, 0
  %v889 = vsel %vm169, %v840, 0
  %v892 = vsel %vm169, %v841, 0
  %v895 = vsel %vm169, %v842, 0
  %897 = vmatpush.bf16.msra.mxu0 0
  %898 = vmatpush.bf16.msra.mxu0 0
  %899 = vmatpush.bf16.msra.mxu0 0
  %900 = vmatpush.bf16.msra.mxu0 0
  %901 = vmatpush.bf16.msra.mxu0 0
  %902 = vmatpush.bf16.msra.mxu0 0
  %903 = vmatpush.bf16.msra.mxu0 %v229
  %904 = vmatpush.bf16.msra.mxu0 %v166
  %905 = vmatmul.bf16.gmra.mxu0 %v844
  %v906 = vpop.f32.mrf.mxu0
  %v907 = vadd.f32 %v66, %v906
  %v908 = vpop.f32.mrf.mxu0
  %v909 = vadd.f32 %v66, %v908
  %910 = vmatmul.bf16.gmra.mxu0 %v847
  %v911 = vpop.f32.mrf.mxu0
  %v912 = vadd.f32 %v66, %v911
  %v913 = vpop.f32.mrf.mxu0
  %v914 = vadd.f32 %v66, %v913
  %915 = vmatmul.bf16.gmra.mxu0 %v850
  %v916 = vpop.f32.mrf.mxu0
  %v917 = vadd.f32 %v66, %v916
  %v918 = vpop.f32.mrf.mxu0
  %v919 = vadd.f32 %v66, %v918
  %920 = vmatmul.bf16.gmra.mxu0 %v853
  %v921 = vpop.f32.mrf.mxu0
  %v922 = vadd.f32 %v66, %v921
  %v923 = vpop.f32.mrf.mxu0
  %v924 = vadd.f32 %v66, %v923
  %925 = vmatmul.bf16.gmra.mxu0 %v856
  %v926 = vpop.f32.mrf.mxu0
  %v927 = vadd.f32 %v66, %v926
  %v928 = vpop.f32.mrf.mxu0
  %v929 = vadd.f32 %v66, %v928
  %930 = vmatmul.bf16.gmra.mxu0 %v859
  %v931 = vpop.f32.mrf.mxu0
  %v932 = vadd.f32 %v66, %v931
  %v933 = vpop.f32.mrf.mxu0
  %v934 = vadd.f32 %v66, %v933
  %935 = vmatmul.bf16.gmra.mxu0 %v862
  %v936 = vpop.f32.mrf.mxu0
  %v937 = vadd.f32 %v66, %v936
  %v938 = vpop.f32.mrf.mxu0
  %v939 = vadd.f32 %v66, %v938
  %940 = vmatmul.bf16.gmra.mxu0 %v865
  %v941 = vpop.f32.mrf.mxu0
  %v942 = vadd.f32 %v66, %v941
  %v943 = vpop.f32.mrf.mxu0
  %v944 = vadd.f32 %v66, %v943
  %945 = vmatmul.bf16.gmra.mxu0 %v868
  %v946 = vpop.f32.mrf.mxu0
  %v947 = vadd.f32 %v66, %v946
  %v948 = vpop.f32.mrf.mxu0
  %v949 = vadd.f32 %v66, %v948
  %950 = vmatmul.bf16.gmra.mxu0 %v871
  %v951 = vpop.f32.mrf.mxu0
  %v952 = vadd.f32 %v66, %v951
  %v953 = vpop.f32.mrf.mxu0
  %v954 = vadd.f32 %v66, %v953
  %955 = vmatmul.bf16.gmra.mxu0 %v874
  %v956 = vpop.f32.mrf.mxu0
  %v957 = vadd.f32 %v66, %v956
  %v958 = vpop.f32.mrf.mxu0
  %v959 = vadd.f32 %v66, %v958
  %960 = vmatmul.bf16.gmra.mxu0 %v877
  %v961 = vpop.f32.mrf.mxu0
  %v962 = vadd.f32 %v66, %v961
  %v963 = vpop.f32.mrf.mxu0
  %v964 = vadd.f32 %v66, %v963
  %965 = vmatmul.bf16.gmra.mxu0 %v880
  %v966 = vpop.f32.mrf.mxu0
  %v967 = vadd.f32 %v66, %v966
  %v968 = vpop.f32.mrf.mxu0
  %v969 = vadd.f32 %v66, %v968
  %970 = vmatmul.bf16.gmra.mxu0 %v883
  %v971 = vpop.f32.mrf.mxu0
  %v972 = vadd.f32 %v66, %v971
  %v973 = vpop.f32.mrf.mxu0
  %v974 = vadd.f32 %v66, %v973
  %975 = vmatmul.bf16.gmra.mxu0 %v886
  %v976 = vpop.f32.mrf.mxu0
  %v977 = vadd.f32 %v66, %v976
  %v978 = vpop.f32.mrf.mxu0
  %v979 = vadd.f32 %v66, %v978
  %980 = vmatmul.bf16.gmra.mxu0 %v889
  %v981 = vpop.f32.mrf.mxu0
  %v982 = vadd.f32 %v66, %v981
  %v983 = vpop.f32.mrf.mxu0
  %v984 = vadd.f32 %v66, %v983
  %985 = vmatmul.bf16.gmra.mxu0 %v892
  %v986 = vpop.f32.mrf.mxu0
  %v987 = vadd.f32 %v66, %v986
  %v988 = vpop.f32.mrf.mxu0
  %v989 = vadd.f32 %v66, %v988
  %990 = vmatmul.bf16.gmra.mxu0 %v895
  %v991 = vpop.f32.mrf.mxu0
  %v992 = vadd.f32 %v66, %v991
  %v993 = vpop.f32.mrf.mxu0
  %v994 = vadd.f32 %v66, %v993
  %995 = vdwg.mxu0
  %v996 = vmax.f32 %v907, 0.0
  %v997 = vmax.f32 %v909, 0.0
  %v998 = vmax.f32 %v912, 0.0
  %v999 = vmax.f32 %v914, 0.0
  %v1000 = vmax.f32 %v917, 0.0
  %v1001 = vmax.f32 %v919, 0.0
  %v1002 = vmax.f32 %v922, 0.0
  %v1003 = vmax.f32 %v924, 0.0
  %v1004 = vmax.f32 %v927, 0.0
  %v1005 = vmax.f32 %v929, 0.0
  %v1006 = vmax.f32 %v932, 0.0
  %v1007 = vmax.f32 %v934, 0.0
  %v1008 = vmax.f32 %v937, 0.0
  %v1009 = vmax.f32 %v939, 0.0
  %v1010 = vmax.f32 %v942, 0.0
  %v1011 = vmax.f32 %v944, 0.0
  %v1012 = vmax.f32 %v947, 0.0
  %v1013 = vmax.f32 %v949, 0.0
  %v1014 = vmax.f32 %v952, 0.0
  %v1015 = vmax.f32 %v954, 0.0
  %v1016 = vmax.f32 %v957, 0.0
  %v1017 = vmax.f32 %v959, 0.0
  %v1018 = vmax.f32 %v962, 0.0
  %v1019 = vmax.f32 %v964, 0.0
  %v1020 = vmax.f32 %v967, 0.0
  %v1021 = vmax.f32 %v969, 0.0
  %v1022 = vmax.f32 %v972, 0.0
  %v1023 = vmax.f32 %v974, 0.0
  %v1024 = vmax.f32 %v977, 0.0
  %v1025 = vmax.f32 %v979, 0.0
  %v1026 = vmax.f32 %v982, 0.0
  %v1027 = vmax.f32 %v984, 0.0
  %v1028 = vmax.f32 %v987, 0.0
  %v1029 = vmax.f32 %v989, 0.0
  %v1030 = vmax.f32 %v992, 0.0
  %v1031 = vmax.f32 %v994, 0.0
  %v1032 = vld [vmem:[%s3] sm:$0xf]
  %v1033 = vld [vmem:[%s3 + $0x4] sm:$0xf]
  %v1034 = vld [vmem:[%s3 + $0x8] sm:$0xf]
  %v1035 = vld [vmem:[%s3 + $0xc] sm:$0xf]
  %v1036 = vld [vmem:[%s3 + $0x10] sm:$0xf]
  %v1037 = vld [vmem:[%s3 + $0x14] sm:$0xf]
  %v1038 = vld [vmem:[%s3 + $0x18] sm:$0xf]
  %v1039 = vld [vmem:[%s3 + $0x1c] sm:$0xf]
  %v1040 = vld [vmem:[%s3 + $0x20] sm:$0xf]
  %v1041 = vld [vmem:[%s3 + $0x24] sm:$0xf]
  %v1042 = vld [vmem:[%s3 + $0x28] sm:$0xf]
  %v1043 = vld [vmem:[%s3 + $0x2c] sm:$0xf]
  %v1044 = vld [vmem:[%s3 + $0x30] sm:$0xf]
  %v1045 = vld [vmem:[%s3 + $0x34] sm:$0xf]
  %v1046 = vld [vmem:[%s3 + $0x38] sm:$0xf]
  %v1047 = vld [vmem:[%s3 + $0x3c] sm:$0xf]
  %v1048 = vld [vmem:[%s3 + $0x40] sm:$0xf]
  %v1049 = vld [vmem:[%s3 + $0x44] sm:$0xf]
  %v1050 = vld [vmem:[%s3 + $0x48] sm:$0xf]
  %v1051 = vld [vmem:[%s3 + $0x4c] sm:$0xf]
  %v1052 = vld [vmem:[%s3 + $0x50] sm:$0xf]
  %v1053 = vld [vmem:[%s3 + $0x54] sm:$0xf]
  %v1054 = vld [vmem:[%s3 + $0x58] sm:$0xf]
  %v1055 = vld [vmem:[%s3 + $0x5c] sm:$0xf]
  %v1056 = vld [vmem:[%s3 + $0x60] sm:$0xf]
  %v1057 = vld [vmem:[%s3 + $0x64] sm:$0xf]
  %v1058 = vld [vmem:[%s3 + $0x68] sm:$0xf]
  %v1059 = vld [vmem:[%s3 + $0x6c] sm:$0xf]
  %v1060 = vld [vmem:[%s3 + $0x70] sm:$0xf]
  %v1061 = vld [vmem:[%s3 + $0x74] sm:$0xf]
  %v1062 = vld [vmem:[%s3 + $0x78] sm:$0xf]
  %v1063 = vld [vmem:[%s3 + $0x7c] sm:$0xf]
  %v1064 = vld [vmem:[%s3 + $0x80] sm:$0xf]
  %v1065 = vld [vmem:[%s3 + $0x84] sm:$0xf]
  %v1066 = vld [vmem:[%s3 + $0x88] sm:$0xf]
  %v1067 = vld [vmem:[%s3 + $0x8c] sm:$0xf]
  %v1104 = vunpack.c.l.b16 %v1032
  %v1105 = vunpack.c.l.b16 %v1033
  %v1106 = vunpack.c.l.b16 %v1034
  %v1107 = vunpack.c.l.b16 %v1035
  %v1108 = vunpack.c.l.b16 %v1036
  %v1109 = vunpack.c.l.b16 %v1037
  %v1110 = vunpack.c.l.b16 %v1038
  %v1111 = vunpack.c.l.b16 %v1039
  %v1112 = vunpack.c.l.b16 %v1040
  %v1113 = vunpack.c.l.b16 %v1041
  %v1114 = vunpack.c.l.b16 %v1042
  %v1115 = vunpack.c.l.b16 %v1043
  %v1116 = vunpack.c.l.b16 %v1044
  %v1117 = vunpack.c.l.b16 %v1045
  %v1118 = vunpack.c.l.b16 %v1046
  %v1119 = vunpack.c.l.b16 %v1047
  %v1120 = vunpack.c.l.b16 %v1048
  %v1121 = vunpack.c.l.b16 %v1049
  %v1122 = vunpack.c.l.b16 %v1050
  %v1123 = vunpack.c.l.b16 %v1051
  %v1124 = vunpack.c.l.b16 %v1052
  %v1125 = vunpack.c.l.b16 %v1053
  %v1126 = vunpack.c.l.b16 %v1054
  %v1127 = vunpack.c.l.b16 %v1055
  %v1128 = vunpack.c.l.b16 %v1056
  %v1129 = vunpack.c.l.b16 %v1057
  %v1130 = vunpack.c.l.b16 %v1058
  %v1131 = vunpack.c.l.b16 %v1059
  %v1132 = vunpack.c.l.b16 %v1060
  %v1133 = vunpack.c.l.b16 %v1061
  %v1134 = vunpack.c.l.b16 %v1062
  %v1135 = vunpack.c.l.b16 %v1063
  %v1136 = vunpack.c.l.b16 %v1064
  %v1137 = vunpack.c.l.b16 %v1065
  %v1138 = vunpack.c.l.b16 %v1066
  %v1139 = vunpack.c.l.b16 %v1067
  %v1140 = vpack.c.b16 %v1105, %v1104
  %v1141 = vpack.c.b16 %v1107, %v1106
  %v1142 = vpack.c.b16 %v1109, %v1108
  %v1143 = vpack.c.b16 %v1111, %v1110
  %v1144 = vpack.c.b16 %v1113, %v1112
  %v1145 = vpack.c.b16 %v1115, %v1114
  %v1146 = vpack.c.b16 %v1117, %v1116
  %v1147 = vpack.c.b16 %v1119, %v1118
  %v1148 = vpack.c.b16 %v1121, %v1120
  %v1149 = vpack.c.b16 %v1123, %v1122
  %v1150 = vpack.c.b16 %v1125, %v1124
  %v1151 = vpack.c.b16 %v1127, %v1126
  %v1152 = vpack.c.b16 %v1129, %v1128
  %v1153 = vpack.c.b16 %v1131, %v1130
  %v1154 = vpack.c.b16 %v1133, %v1132
  %v1155 = vpack.c.b16 %v1135, %v1134
  %v1156 = vpack.c.b16 %v1137, %v1136
  %v1157 = vpack.c.b16 %v1139, %v1138
  %v1159 = vsel %vm169, %v1140, 0
  %v1162 = vsel %vm169, %v1141, 0
  %v1165 = vsel %vm169, %v1142, 0
  %v1168 = vsel %vm169, %v1143, 0
  %v1171 = vsel %vm169, %v1144, 0
  %v1174 = vsel %vm169, %v1145, 0
  %v1177 = vsel %vm169, %v1146, 0
  %v1180 = vsel %vm169, %v1147, 0
  %v1183 = vsel %vm169, %v1148, 0
  %v1186 = vsel %vm169, %v1149, 0
  %v1189 = vsel %vm169, %v1150, 0
  %v1192 = vsel %vm169, %v1151, 0
  %v1195 = vsel %vm169, %v1152, 0
  %v1198 = vsel %vm169, %v1153, 0
  %v1201 = vsel %vm169, %v1154, 0
  %v1204 = vsel %vm169, %v1155, 0
  %v1207 = vsel %vm169, %v1156, 0
  %v1210 = vsel %vm169, %v1157, 0
  %1212 = vmatpush.bf16.msra.mxu0 0
  %1213 = vmatpush.bf16.msra.mxu0 0
  %1214 = vmatpush.bf16.msra.mxu0 0
  %1215 = vmatpush.bf16.msra.mxu0 0
  %1216 = vmatpush.bf16.msra.mxu0 0
  %1217 = vmatpush.bf16.msra.mxu0 0
  %1218 = vmatpush.bf16.msra.mxu0 %v229
  %1219 = vmatpush.bf16.msra.mxu0 %v166
  %1220 = vmatmul.bf16.gmra.mxu0 %v1159
  %v1221 = vpop.f32.mrf.mxu0
  %v1222 = vadd.f32 %v66, %v1221
  %v1223 = vpop.f32.mrf.mxu0
  %v1224 = vadd.f32 %v66, %v1223
  %1225 = vmatmul.bf16.gmra.mxu0 %v1162
  %v1226 = vpop.f32.mrf.mxu0
  %v1227 = vadd.f32 %v66, %v1226
  %v1228 = vpop.f32.mrf.mxu0
  %v1229 = vadd.f32 %v66, %v1228
  %1230 = vmatmul.bf16.gmra.mxu0 %v1165
  %v1231 = vpop.f32.mrf.mxu0
  %v1232 = vadd.f32 %v66, %v1231
  %v1233 = vpop.f32.mrf.mxu0
  %v1234 = vadd.f32 %v66, %v1233
  %1235 = vmatmul.bf16.gmra.mxu0 %v1168
  %v1236 = vpop.f32.mrf.mxu0
  %v1237 = vadd.f32 %v66, %v1236
  %v1238 = vpop.f32.mrf.mxu0
  %v1239 = vadd.f32 %v66, %v1238
  %1240 = vmatmul.bf16.gmra.mxu0 %v1171
  %v1241 = vpop.f32.mrf.mxu0
  %v1242 = vadd.f32 %v66, %v1241
  %v1243 = vpop.f32.mrf.mxu0
  %v1244 = vadd.f32 %v66, %v1243
  %1245 = vmatmul.bf16.gmra.mxu0 %v1174
  %v1246 = vpop.f32.mrf.mxu0
  %v1247 = vadd.f32 %v66, %v1246
  %v1248 = vpop.f32.mrf.mxu0
  %v1249 = vadd.f32 %v66, %v1248
  %1250 = vmatmul.bf16.gmra.mxu0 %v1177
  %v1251 = vpop.f32.mrf.mxu0
  %v1252 = vadd.f32 %v66, %v1251
  %v1253 = vpop.f32.mrf.mxu0
  %v1254 = vadd.f32 %v66, %v1253
  %1255 = vmatmul.bf16.gmra.mxu0 %v1180
  %v1256 = vpop.f32.mrf.mxu0
  %v1257 = vadd.f32 %v66, %v1256
  %v1258 = vpop.f32.mrf.mxu0
  %v1259 = vadd.f32 %v66, %v1258
  %1260 = vmatmul.bf16.gmra.mxu0 %v1183
  %v1261 = vpop.f32.mrf.mxu0
  %v1262 = vadd.f32 %v66, %v1261
  %v1263 = vpop.f32.mrf.mxu0
  %v1264 = vadd.f32 %v66, %v1263
  %1265 = vmatmul.bf16.gmra.mxu0 %v1186
  %v1266 = vpop.f32.mrf.mxu0
  %v1267 = vadd.f32 %v66, %v1266
  %v1268 = vpop.f32.mrf.mxu0
  %v1269 = vadd.f32 %v66, %v1268
  %1270 = vmatmul.bf16.gmra.mxu0 %v1189
  %v1271 = vpop.f32.mrf.mxu0
  %v1272 = vadd.f32 %v66, %v1271
  %v1273 = vpop.f32.mrf.mxu0
  %v1274 = vadd.f32 %v66, %v1273
  %1275 = vmatmul.bf16.gmra.mxu0 %v1192
  %v1276 = vpop.f32.mrf.mxu0
  %v1277 = vadd.f32 %v66, %v1276
  %v1278 = vpop.f32.mrf.mxu0
  %v1279 = vadd.f32 %v66, %v1278
  %1280 = vmatmul.bf16.gmra.mxu0 %v1195
  %v1281 = vpop.f32.mrf.mxu0
  %v1282 = vadd.f32 %v66, %v1281
  %v1283 = vpop.f32.mrf.mxu0
  %v1284 = vadd.f32 %v66, %v1283
  %1285 = vmatmul.bf16.gmra.mxu0 %v1198
  %v1286 = vpop.f32.mrf.mxu0
  %v1287 = vadd.f32 %v66, %v1286
  %v1288 = vpop.f32.mrf.mxu0
  %v1289 = vadd.f32 %v66, %v1288
  %1290 = vmatmul.bf16.gmra.mxu0 %v1201
  %v1291 = vpop.f32.mrf.mxu0
  %v1292 = vadd.f32 %v66, %v1291
  %v1293 = vpop.f32.mrf.mxu0
  %v1294 = vadd.f32 %v66, %v1293
  %1295 = vmatmul.bf16.gmra.mxu0 %v1204
  %v1296 = vpop.f32.mrf.mxu0
  %v1297 = vadd.f32 %v66, %v1296
  %v1298 = vpop.f32.mrf.mxu0
  %v1299 = vadd.f32 %v66, %v1298
  %1300 = vmatmul.bf16.gmra.mxu0 %v1207
  %v1301 = vpop.f32.mrf.mxu0
  %v1302 = vadd.f32 %v66, %v1301
  %v1303 = vpop.f32.mrf.mxu0
  %v1304 = vadd.f32 %v66, %v1303
  %1305 = vmatmul.bf16.gmra.mxu0 %v1210
  %v1306 = vpop.f32.mrf.mxu0
  %v1307 = vadd.f32 %v66, %v1306
  %v1308 = vpop.f32.mrf.mxu0
  %v1309 = vadd.f32 %v66, %v1308
  %1310 = vdwg.mxu0
  %v1311 = vmax.f32 %v1222, 0.0
  %v1312 = vmax.f32 %v1224, 0.0
  %v1313 = vmax.f32 %v1227, 0.0
  %v1314 = vmax.f32 %v1229, 0.0
  %v1315 = vmax.f32 %v1232, 0.0
  %v1316 = vmax.f32 %v1234, 0.0
  %v1317 = vmax.f32 %v1237, 0.0
  %v1318 = vmax.f32 %v1239, 0.0
  %v1319 = vmax.f32 %v1242, 0.0
  %v1320 = vmax.f32 %v1244, 0.0
  %v1321 = vmax.f32 %v1247, 0.0
  %v1322 = vmax.f32 %v1249, 0.0
  %v1323 = vmax.f32 %v1252, 0.0
  %v1324 = vmax.f32 %v1254, 0.0
  %v1325 = vmax.f32 %v1257, 0.0
  %v1326 = vmax.f32 %v1259, 0.0
  %v1327 = vmax.f32 %v1262, 0.0
  %v1328 = vmax.f32 %v1264, 0.0
  %v1329 = vmax.f32 %v1267, 0.0
  %v1330 = vmax.f32 %v1269, 0.0
  %v1331 = vmax.f32 %v1272, 0.0
  %v1332 = vmax.f32 %v1274, 0.0
  %v1333 = vmax.f32 %v1277, 0.0
  %v1334 = vmax.f32 %v1279, 0.0
  %v1335 = vmax.f32 %v1282, 0.0
  %v1336 = vmax.f32 %v1284, 0.0
  %v1337 = vmax.f32 %v1287, 0.0
  %v1338 = vmax.f32 %v1289, 0.0
  %v1339 = vmax.f32 %v1292, 0.0
  %v1340 = vmax.f32 %v1294, 0.0
  %v1341 = vmax.f32 %v1297, 0.0
  %v1342 = vmax.f32 %v1299, 0.0
  %v1343 = vmax.f32 %v1302, 0.0
  %v1344 = vmax.f32 %v1304, 0.0
  %v1345 = vmax.f32 %v1307, 0.0
  %v1346 = vmax.f32 %v1309, 0.0
  %v1347 = vmax.f32 %v996, %v1311
  %v1348 = vmax.f32 %v997, %v1312
  %v1349 = vmax.f32 %v998, %v1313
  %v1350 = vmax.f32 %v999, %v1314
  %v1351 = vmax.f32 %v1000, %v1315
  %v1352 = vmax.f32 %v1001, %v1316
  %v1353 = vmax.f32 %v1002, %v1317
  %v1354 = vmax.f32 %v1003, %v1318
  %v1355 = vmax.f32 %v1004, %v1319
  %v1356 = vmax.f32 %v1005, %v1320
  %v1357 = vmax.f32 %v1006, %v1321
  %v1358 = vmax.f32 %v1007, %v1322
  %v1359 = vmax.f32 %v1008, %v1323
  %v1360 = vmax.f32 %v1009, %v1324
  %v1361 = vmax.f32 %v1010, %v1325
  %v1362 = vmax.f32 %v1011, %v1326
  %v1363 = vmax.f32 %v1012, %v1327
  %v1364 = vmax.f32 %v1013, %v1328
  %v1365 = vmax.f32 %v1014, %v1329
  %v1366 = vmax.f32 %v1015, %v1330
  %v1367 = vmax.f32 %v1016, %v1331
  %v1368 = vmax.f32 %v1017, %v1332
  %v1369 = vmax.f32 %v1018, %v1333
  %v1370 = vmax.f32 %v1019, %v1334
  %v1371 = vmax.f32 %v1020, %v1335
  %v1372 = vmax.f32 %v1021, %v1336
  %v1373 = vmax.f32 %v1022, %v1337
  %v1374 = vmax.f32 %v1023, %v1338
  %v1375 = vmax.f32 %v1024, %v1339
  %v1376 = vmax.f32 %v1025, %v1340
  %v1377 = vmax.f32 %v1026, %v1341
  %v1378 = vmax.f32 %v1027, %v1342
  %v1379 = vmax.f32 %v1028, %v1343
  %v1380 = vmax.f32 %v1029, %v1344
  %v1381 = vmax.f32 %v1030, %v1345
  %v1382 = vmax.f32 %v1031, %v1346
  %v1383 = vmax.f32 %v681, %v1347
  %v1384 = vmax.f32 %v682, %v1348
  %v1385 = vmax.f32 %v683, %v1349
  %v1386 = vmax.f32 %v684, %v1350
  %v1387 = vmax.f32 %v685, %v1351
  %v1388 = vmax.f32 %v686, %v1352
  %v1389 = vmax.f32 %v687, %v1353
  %v1390 = vmax.f32 %v688, %v1354
  %v1391 = vmax.f32 %v689, %v1355
  %v1392 = vmax.f32 %v690, %v1356
  %v1393 = vmax.f32 %v691, %v1357
  %v1394 = vmax.f32 %v692, %v1358
  %v1395 = vmax.f32 %v693, %v1359
  %v1396 = vmax.f32 %v694, %v1360
  %v1397 = vmax.f32 %v695, %v1361
  %v1398 = vmax.f32 %v696, %v1362
  %v1399 = vmax.f32 %v697, %v1363
  %v1400 = vmax.f32 %v698, %v1364
  %v1401 = vmax.f32 %v699, %v1365
  %v1402 = vmax.f32 %v700, %v1366
  %v1403 = vmax.f32 %v701, %v1367
  %v1404 = vmax.f32 %v702, %v1368
  %v1405 = vmax.f32 %v703, %v1369
  %v1406 = vmax.f32 %v704, %v1370
  %v1407 = vmax.f32 %v705, %v1371
  %v1408 = vmax.f32 %v706, %v1372
  %v1409 = vmax.f32 %v707, %v1373
  %v1410 = vmax.f32 %v708, %v1374
  %v1411 = vmax.f32 %v709, %v1375
  %v1412 = vmax.f32 %v710, %v1376
  %v1413 = vmax.f32 %v711, %v1377
  %v1414 = vmax.f32 %v712, %v1378
  %v1415 = vmax.f32 %v713, %v1379
  %v1416 = vmax.f32 %v714, %v1380
  %v1417 = vmax.f32 %v715, %v1381
  %v1418 = vmax.f32 %v716, %v1382
  %1419 = vst [vmem:[%s6] sm:$0xff] %v1383
  %1420 = vst [vmem:[%s6 + $0x8] sm:$0xff] %v1384
  %1421 = vst [vmem:[%s6 + $0x10] sm:$0xff] %v1385
  %1422 = vst [vmem:[%s6 + $0x18] sm:$0xff] %v1386
  %1423 = vst [vmem:[%s6 + $0x20] sm:$0xff] %v1387
  %1424 = vst [vmem:[%s6 + $0x28] sm:$0xff] %v1388
  %1425 = vst [vmem:[%s6 + $0x30] sm:$0xff] %v1389
  %1426 = vst [vmem:[%s6 + $0x38] sm:$0xff] %v1390
  %1427 = vst [vmem:[%s6 + $0x40] sm:$0xff] %v1391
  %1428 = vst [vmem:[%s6 + $0x48] sm:$0xff] %v1392
  %1429 = vst [vmem:[%s6 + $0x50] sm:$0xff] %v1393
  %1430 = vst [vmem:[%s6 + $0x58] sm:$0xff] %v1394
  %1431 = vst [vmem:[%s6 + $0x60] sm:$0xff] %v1395
  %1432 = vst [vmem:[%s6 + $0x68] sm:$0xff] %v1396
  %1433 = vst [vmem:[%s6 + $0x70] sm:$0xff] %v1397
  %1434 = vst [vmem:[%s6 + $0x78] sm:$0xff] %v1398
  %1435 = vst [vmem:[%s6 + $0x80] sm:$0xff] %v1399
  %1436 = vst [vmem:[%s6 + $0x88] sm:$0xff] %v1400
  %1437 = vst [vmem:[%s6 + $0x90] sm:$0xff] %v1401
  %1438 = vst [vmem:[%s6 + $0x98] sm:$0xff] %v1402
  %1439 = vst [vmem:[%s6 + $0xa0] sm:$0xff] %v1403
  %1440 = vst [vmem:[%s6 + $0xa8] sm:$0xff] %v1404
  %1441 = vst [vmem:[%s6 + $0xb0] sm:$0xff] %v1405
  %1442 = vst [vmem:[%s6 + $0xb8] sm:$0xff] %v1406
  %1443 = vst [vmem:[%s6 + $0xc0] sm:$0xff] %v1407
  %1444 = vst [vmem:[%s6 + $0xc8] sm:$0xff] %v1408
  %1445 = vst [vmem:[%s6 + $0xd0] sm:$0xff] %v1409
  %1446 = vst [vmem:[%s6 + $0xd8] sm:$0xff] %v1410
  %1447 = vst [vmem:[%s6 + $0xe0] sm:$0xff] %v1411
  %1448 = vst [vmem:[%s6 + $0xe8] sm:$0xff] %v1412
  %1449 = vst [vmem:[%s6 + $0xf0] sm:$0xff] %v1413
  %1450 = vst [vmem:[%s6 + $0xf8] sm:$0xff] %v1414
  %1451 = vst [vmem:[%s6 + $0x100] sm:$0xff] %v1415
  %1452 = vst [vmem:[%s6 + $0x108] sm:$0xff] %v1416
  %1453 = vst [vmem:[%s6 + $0x110] sm:$0xff] %v1417
  %1454 = vst [vmem:[%s6 + $0x118] sm:$0xff] %v1418
  // Predicated region
  $region26: #{conv2d_mnist_forward.3} parent=0 // pred_check
    _
  $region27: #{conv2d_mnist_forward.3} parent=0 // pred_check_branch
    %1456 = sbr.rel (0) target = $region29
  $region28: #{conv2d_mnist_forward.3} parent=0 // pred_region
    _
  $region29: #{conv2d_mnist_forward.3} parent=0 // pred_fallthru
    _
  // Predicated region
  $region30: #{conv2d_mnist_forward.3} parent=0 // pred_check
    _
  $region31: #{conv2d_mnist_forward.3} parent=0 // pred_check_branch
    %1458 = sbr.rel (0) target = $region33
  $region32: #{conv2d_mnist_forward.3} parent=0 // pred_region
    _
  $region33: #{conv2d_mnist_forward.3} parent=0 // pred_fallthru
    _

// kernel: conv2d_mnist_forward.4
$region0: #{conv2d_mnist_forward.4}
  #allocation0 [shape = 'u32[]', space=smem, size = 0x4, offset = 0x4, fixed_abs, tag = 'smem constant byte address 0x4 - core index']
  #allocation1 [shape = 'u32[72,128]{1,0:T(1,128)}', space=vmem, size = 0x9000, scoped, tag = 'internal scratch']
  %s0 = inlined_call_operand.vmem [shape: bf16[208,90], index: 0, kind: input, shape index: {}]
  %s1 = inlined_call_operand.vmem [shape: bf16[90,128], index: 1, kind: input, shape index: {}]
  %s2 = inlined_call_operand.vmem [shape: f32[1,128], index: 2, kind: input, shape index: {}]
  %s3 = inlined_call_operand.vmem [shape: f32[208,128], index: 3, kind: output, shape index: {}]
  %s4 = sld [smem:[#allocation0]]
  $region22: #{conv2d_mnist_forward.4} parent=0
    _
  %s6 = ssub.s32 1, %s4
  %s7 = scalar_select 0, %s6, %s4
  // Predicated region
  $region2: #{conv2d_mnist_forward.4} parent=0 // pred_check
    _
  $region3: #{conv2d_mnist_forward.4} parent=0 // pred_check_branch
    %9 = sbr.rel (0) target = $region5
  $region4: #{conv2d_mnist_forward.4} parent=0 // pred_region
    _
  $region5: #{conv2d_mnist_forward.4} parent=0 // pred_fallthru
    _
  // Predicated region
  $region6: #{conv2d_mnist_forward.4} parent=0 // pred_check
    _
  $region7: #{conv2d_mnist_forward.4} parent=0 // pred_check_branch
    %11 = sbr.rel (0) target = $region9
  $region8: #{conv2d_mnist_forward.4} parent=0 // pred_region
    _
  $region9: #{conv2d_mnist_forward.4} parent=0 // pred_fallthru
    _
  // Predicated region
  $region10: #{conv2d_mnist_forward.4} parent=0 // pred_check
    _
  $region11: #{conv2d_mnist_forward.4} parent=0 // pred_check_branch
    %13 = sbr.rel (0) target = $region13
  $region12: #{conv2d_mnist_forward.4} parent=0 // pred_region
    _
  $region13: #{conv2d_mnist_forward.4} parent=0 // pred_fallthru
    _
  %v15 = vld [vmem:[%s0] sm:$0xf]
  %v16 = vld [vmem:[%s0 + $0x4] sm:$0xf]
  %v17 = vld [vmem:[%s0 + $0x8] sm:$0xf]
  %v18 = vld [vmem:[%s0 + $0xc] sm:$0xf]
  %v19 = vld [vmem:[%s0 + $0x10] sm:$0xf]
  %v20 = vld [vmem:[%s0 + $0x14] sm:$0xf]
  %v21 = vld [vmem:[%s0 + $0x18] sm:$0xf]
  %v22 = vld [vmem:[%s0 + $0x1c] sm:$0xf]
  %v23 = vld [vmem:[%s0 + $0x20] sm:$0xf]
  %v24 = vld [vmem:[%s0 + $0x24] sm:$0xf]
  %v25 = vld [vmem:[%s0 + $0x28] sm:$0xf]
  %v26 = vld [vmem:[%s0 + $0x2c] sm:$0xf]
  %v27 = vld [vmem:[%s0 + $0x30] sm:$0xf]
  %v28 = vld [vmem:[%s0 + $0x34] sm:$0xf]
  %v29 = vld [vmem:[%s0 + $0x38] sm:$0xf]
  %v30 = vld [vmem:[%s0 + $0x3c] sm:$0xf]
  %v31 = vld [vmem:[%s0 + $0x40] sm:$0xf]
  %v32 = vld [vmem:[%s0 + $0x44] sm:$0xf]
  %v33 = vld [vmem:[%s0 + $0x48] sm:$0xf]
  %v34 = vld [vmem:[%s0 + $0x4c] sm:$0xf]
  %v35 = vld [vmem:[%s0 + $0x50] sm:$0xf]
  %v36 = vld [vmem:[%s0 + $0x54] sm:$0xf]
  %v37 = vld [vmem:[%s0 + $0x58] sm:$0xf]
  %v38 = vld [vmem:[%s0 + $0x5c] sm:$0xf]
  %v39 = vld [vmem:[%s0 + $0x60] sm:$0xf]
  %v40 = vld [vmem:[%s0 + $0x64] sm:$0xf]
  %v41 = vld [vmem:[%s1] sm:$0xf]
  %v42 = vld [vmem:[%s1 + $0x4] sm:$0xf]
  %v43 = vld [vmem:[%s1 + $0x8] sm:$0xf]
  %v44 = vld [vmem:[%s1 + $0xc] sm:$0xf]
  %v45 = vld [vmem:[%s1 + $0x10] sm:$0xf]
  %v46 = vld [vmem:[%s1 + $0x14] sm:$0xf]
  %v47 = vld [vmem:[%s1 + $0x18] sm:$0xf]
  %v48 = vld [vmem:[%s1 + $0x1c] sm:$0xf]
  %v49 = vld [vmem:[%s1 + $0x20] sm:$0xf]
  %v50 = vld [vmem:[%s1 + $0x24] sm:$0xf]
  %v51 = vld [vmem:[%s1 + $0x28] sm:$0xf]
  %v52 = vld [vmem:[%s1 + $0x2c] sm:$0x1]
  %v53 = vld [vmem:[%s2] sm:$0x1]
  %v55 = vperm.slane %v53, 0
  %v83 = vunpack.c.l.b16 %v15
  %v84 = vunpack.c.l.b16 %v16
  %v85 = vunpack.c.l.b16 %v17
  %v86 = vunpack.c.l.b16 %v18
  %v87 = vunpack.c.l.b16 %v19
  %v88 = vunpack.c.l.b16 %v20
  %v89 = vunpack.c.l.b16 %v21
  %v90 = vunpack.c.l.b16 %v22
  %v91 = vunpack.c.l.b16 %v23
  %v92 = vunpack.c.l.b16 %v24
  %v93 = vunpack.c.l.b16 %v25
  %v94 = vunpack.c.l.b16 %v26
  %v95 = vunpack.c.l.b16 %v27
  %v96 = vunpack.c.l.b16 %v28
  %v97 = vunpack.c.l.b16 %v29
  %v98 = vunpack.c.l.b16 %v30
  %v99 = vunpack.c.l.b16 %v31
  %v100 = vunpack.c.l.b16 %v32
  %v101 = vunpack.c.l.b16 %v33
  %v102 = vunpack.c.l.b16 %v34
  %v103 = vunpack.c.l.b16 %v35
  %v104 = vunpack.c.l.b16 %v36
  %v105 = vunpack.c.l.b16 %v37
  %v106 = vunpack.c.l.b16 %v38
  %v107 = vunpack.c.l.b16 %v39
  %v108 = vunpack.c.l.b16 %v40
  %v109 = vpack.c.b16 %v84, %v83
  %v110 = vpack.c.b16 %v86, %v85
  %v111 = vpack.c.b16 %v88, %v87
  %v112 = vpack.c.b16 %v90, %v89
  %v113 = vpack.c.b16 %v92, %v91
  %v114 = vpack.c.b16 %v94, %v93
  %v115 = vpack.c.b16 %v96, %v95
  %v116 = vpack.c.b16 %v98, %v97
  %v117 = vpack.c.b16 %v100, %v99
  %v118 = vpack.c.b16 %v102, %v101
  %v119 = vpack.c.b16 %v104, %v103
  %v120 = vpack.c.b16 %v106, %v105
  %v121 = vpack.c.b16 %v108, %v107
  %v134 = vunpack.c.l.b16 %v41
  %v135 = vunpack.c.l.b16 %v42
  %v136 = vunpack.c.l.b16 %v43
  %v137 = vunpack.c.l.b16 %v44
  %v138 = vunpack.c.l.b16 %v45
  %v139 = vunpack.c.l.b16 %v46
  %v140 = vunpack.c.l.b16 %v47
  %v141 = vunpack.c.l.b16 %v48
  %v142 = vunpack.c.l.b16 %v49
  %v143 = vunpack.c.l.b16 %v50
  %v144 = vunpack.c.l.b16 %v51
  %v145 = vunpack.c.l.b16 %v52
  %v146 = vpack.c.b16 %v135, %v134
  %v147 = vpack.c.b16 %v137, %v136
  %v148 = vpack.c.b16 %v139, %v138
  %v149 = vpack.c.b16 %v141, %v140
  %v150 = vpack.c.b16 %v143, %v142
  %v151 = vpack.c.b16 %v145, %v144
  %vm157 = vcmask 736256
  %v159 = vsel %vm157, %v109, 0
  %v162 = vsel %vm157, %v110, 0
  %v165 = vsel %vm157, %v111, 0
  %v168 = vsel %vm157, %v112, 0
  %v171 = vsel %vm157, %v113, 0
  %v174 = vsel %vm157, %v114, 0
  %v177 = vsel %vm157, %v115, 0
  %v180 = vsel %vm157, %v116, 0
  %v183 = vsel %vm157, %v117, 0
  %v186 = vsel %vm157, %v118, 0
  %v189 = vsel %vm157, %v119, 0
  %v192 = vsel %vm157, %v120, 0
  %v195 = vsel %vm157, %v121, 0
  %vm197 = vcmask 1044480
  %v199 = vsel %vm197, %v151, 0
  %201 = vmatpush.bf16.msra.mxu0 0
  %202 = vmatpush.bf16.msra.mxu0 0
  %203 = vmatpush.bf16.msra.mxu0 %v199
  %204 = vmatpush.bf16.msra.mxu0 %v150
  %205 = vmatpush.bf16.msra.mxu0 %v149
  %206 = vmatpush.bf16.msra.mxu0 %v148
  %207 = vmatpush.bf16.msra.mxu0 %v147
  %208 = vmatpush.bf16.msra.mxu0 %v146
  %209 = vmatmul.bf16.gmra.mxu0 %v159
  %v210 = vpop.f32.mrf.mxu0
  %v211 = vadd.f32 %v55, %v210
  %v212 = vpop.f32.mrf.mxu0
  %v213 = vadd.f32 %v55, %v212
  %214 = vmatmul.bf16.gmra.mxu0 %v162
  %v215 = vpop.f32.mrf.mxu0
  %v216 = vadd.f32 %v55, %v215
  %v217 = vpop.f32.mrf.mxu0
  %v218 = vadd.f32 %v55, %v217
  %219 = vmatmul.bf16.gmra.mxu0 %v165
  %v220 = vpop.f32.mrf.mxu0
  %v221 = vadd.f32 %v55, %v220
  %v222 = vpop.f32.mrf.mxu0
  %v223 = vadd.f32 %v55, %v222
  %224 = vmatmul.bf16.gmra.mxu0 %v168
  %v225 = vpop.f32.mrf.mxu0
  %v226 = vadd.f32 %v55, %v225
  %v227 = vpop.f32.mrf.mxu0
  %v228 = vadd.f32 %v55, %v227
  %229 = vmatmul.bf16.gmra.mxu0 %v171
  %v230 = vpop.f32.mrf.mxu0
  %v231 = vadd.f32 %v55, %v230
  %v232 = vpop.f32.mrf.mxu0
  %v233 = vadd.f32 %v55, %v232
  %234 = vmatmul.bf16.gmra.mxu0 %v174
  %v235 = vpop.f32.mrf.mxu0
  %v236 = vadd.f32 %v55, %v235
  %v237 = vpop.f32.mrf.mxu0
  %v238 = vadd.f32 %v55, %v237
  %239 = vmatmul.bf16.gmra.mxu0 %v177
  %v240 = vpop.f32.mrf.mxu0
  %v241 = vadd.f32 %v55, %v240
  %v242 = vpop.f32.mrf.mxu0
  %v243 = vadd.f32 %v55, %v242
  %244 = vmatmul.bf16.gmra.mxu0 %v180
  %v245 = vpop.f32.mrf.mxu0
  %v246 = vadd.f32 %v55, %v245
  %v247 = vpop.f32.mrf.mxu0
  %v248 = vadd.f32 %v55, %v247
  %249 = vmatmul.bf16.gmra.mxu0 %v183
  %v250 = vpop.f32.mrf.mxu0
  %v251 = vadd.f32 %v55, %v250
  %v252 = vpop.f32.mrf.mxu0
  %v253 = vadd.f32 %v55, %v252
  %254 = vmatmul.bf16.gmra.mxu0 %v186
  %v255 = vpop.f32.mrf.mxu0
  %v256 = vadd.f32 %v55, %v255
  %v257 = vpop.f32.mrf.mxu0
  %v258 = vadd.f32 %v55, %v257
  %259 = vmatmul.bf16.gmra.mxu0 %v189
  %v260 = vpop.f32.mrf.mxu0
  %v261 = vadd.f32 %v55, %v260
  %v262 = vpop.f32.mrf.mxu0
  %v263 = vadd.f32 %v55, %v262
  %264 = vmatmul.bf16.gmra.mxu0 %v192
  %v265 = vpop.f32.mrf.mxu0
  %v266 = vadd.f32 %v55, %v265
  %v267 = vpop.f32.mrf.mxu0
  %v268 = vadd.f32 %v55, %v267
  %269 = vmatmul.bf16.gmra.mxu0 %v195
  %v270 = vpop.f32.mrf.mxu0
  %v271 = vadd.f32 %v55, %v270
  %v272 = vpop.f32.mrf.mxu0
  %v273 = vadd.f32 %v55, %v272
  %274 = vdwg.mxu0
  %v275 = vmax.f32 %v211, 0.0
  %v276 = vmax.f32 %v213, 0.0
  %v277 = vmax.f32 %v216, 0.0
  %v278 = vmax.f32 %v218, 0.0
  %v279 = vmax.f32 %v221, 0.0
  %v280 = vmax.f32 %v223, 0.0
  %v281 = vmax.f32 %v226, 0.0
  %v282 = vmax.f32 %v228, 0.0
  %v283 = vmax.f32 %v231, 0.0
  %v284 = vmax.f32 %v233, 0.0
  %v285 = vmax.f32 %v236, 0.0
  %v286 = vmax.f32 %v238, 0.0
  %v287 = vmax.f32 %v241, 0.0
  %v288 = vmax.f32 %v243, 0.0
  %v289 = vmax.f32 %v246, 0.0
  %v290 = vmax.f32 %v248, 0.0
  %v291 = vmax.f32 %v251, 0.0
  %v292 = vmax.f32 %v253, 0.0
  %v293 = vmax.f32 %v256, 0.0
  %v294 = vmax.f32 %v258, 0.0
  %v295 = vmax.f32 %v261, 0.0
  %v296 = vmax.f32 %v263, 0.0
  %v297 = vmax.f32 %v266, 0.0
  %v298 = vmax.f32 %v268, 0.0
  %v299 = vmax.f32 %v271, 0.0
  %v300 = vmax.f32 %v273, 0.0
  %301 = vst [vmem:[%s3] sm:$0xff] %v275
  %302 = vst [vmem:[%s3 + $0x8] sm:$0xff] %v276
  %303 = vst [vmem:[%s3 + $0x10] sm:$0xff] %v277
  %304 = vst [vmem:[%s3 + $0x18] sm:$0xff] %v278
  %305 = vst [vmem:[%s3 + $0x20] sm:$0xff] %v279
  %306 = vst [vmem:[%s3 + $0x28] sm:$0xff] %v280
  %307 = vst [vmem:[%s3 + $0x30] sm:$0xff] %v281
  %308 = vst [vmem:[%s3 + $0x38] sm:$0xff] %v282
  %309 = vst [vmem:[%s3 + $0x40] sm:$0xff] %v283
  %310 = vst [vmem:[%s3 + $0x48] sm:$0xff] %v284
  %311 = vst [vmem:[%s3 + $0x50] sm:$0xff] %v285
  %312 = vst [vmem:[%s3 + $0x58] sm:$0xff] %v286
  %313 = vst [vmem:[%s3 + $0x60] sm:$0xff] %v287
  %314 = vst [vmem:[%s3 + $0x68] sm:$0xff] %v288
  %315 = vst [vmem:[%s3 + $0x70] sm:$0xff] %v289
  %316 = vst [vmem:[%s3 + $0x78] sm:$0xff] %v290
  %317 = vst [vmem:[%s3 + $0x80] sm:$0xff] %v291
  %318 = vst [vmem:[%s3 + $0x88] sm:$0xff] %v292
  %319 = vst [vmem:[%s3 + $0x90] sm:$0xff] %v293
  %320 = vst [vmem:[%s3 + $0x98] sm:$0xff] %v294
  %321 = vst [vmem:[%s3 + $0xa0] sm:$0xff] %v295
  %322 = vst [vmem:[%s3 + $0xa8] sm:$0xff] %v296
  %323 = vst [vmem:[%s3 + $0xb0] sm:$0xff] %v297
  %324 = vst [vmem:[%s3 + $0xb8] sm:$0xff] %v298
  %325 = vst [vmem:[%s3 + $0xc0] sm:$0xff] %v299
  %326 = vst [vmem:[%s3 + $0xc8] sm:$0xff] %v300
  // Predicated region
  $region14: #{conv2d_mnist_forward.4} parent=0 // pred_check
    _
  $region15: #{conv2d_mnist_forward.4} parent=0 // pred_check_branch
    %328 = sbr.rel (0) target = $region17
  $region16: #{conv2d_mnist_forward.4} parent=0 // pred_region
    _
  $region17: #{conv2d_mnist_forward.4} parent=0 // pred_fallthru
    _
  // Predicated region
  $region18: #{conv2d_mnist_forward.4} parent=0 // pred_check
    _
  $region19: #{conv2d_mnist_forward.4} parent=0 // pred_check_branch
    %330 = sbr.rel (0) target = $region21
  $region20: #{conv2d_mnist_forward.4} parent=0 // pred_region
    _
  $region21: #{conv2d_mnist_forward.4} parent=0 // pred_fallthru
    _

// kernel: conv2d_mnist_forward.5
$region0: #{conv2d_mnist_forward.5}
  #allocation0 [shape = 'u32[]', space=smem, size = 0x4, offset = 0x4, fixed_abs, tag = 'smem constant byte address 0x4 - core index']
  #allocation1 [shape = 'u32[72,128]{1,0:T(1,128)}', space=vmem, size = 0x9000, scoped, tag = 'internal scratch']
  %s0 = inlined_call_operand.vmem [shape: bf16[16,2000], index: 0, kind: input, shape index: {}]
  %s1 = inlined_call_operand.vmem [shape: bf16[2000,512], index: 1, kind: input, shape index: {}]
  %s2 = inlined_call_operand.vmem [shape: f32[1,512], index: 2, kind: input, shape index: {}]
  %s3 = inlined_call_operand.vmem [shape: f32[512,128], index: 3, kind: input, shape index: {}]
  %s4 = inlined_call_operand.vmem [shape: f32[1,128], index: 4, kind: input, shape index: {}]
  %s5 = inlined_call_operand.vmem [shape: f32[16,128], index: 5, kind: output, shape index: {}]
  %s6 = sld [smem:[#allocation0]]
  $region30: #{conv2d_mnist_forward.5} parent=0
    _
  %s8 = ssub.s32 1, %s6
  %s9 = scalar_select 0, %s8, %s6
  // Predicated region
  $region2: #{conv2d_mnist_forward.5} parent=0 // pred_check
    _
  $region3: #{conv2d_mnist_forward.5} parent=0 // pred_check_branch
    %11 = sbr.rel (0) target = $region5
  $region4: #{conv2d_mnist_forward.5} parent=0 // pred_region
    _
  $region5: #{conv2d_mnist_forward.5} parent=0 // pred_fallthru
    _
  // Predicated region
  $region6: #{conv2d_mnist_forward.5} parent=0 // pred_check
    _
  $region7: #{conv2d_mnist_forward.5} parent=0 // pred_check_branch
    %13 = sbr.rel (0) target = $region9
  $region8: #{conv2d_mnist_forward.5} parent=0 // pred_region
    _
  $region9: #{conv2d_mnist_forward.5} parent=0 // pred_fallthru
    _
  // Predicated region
  $region10: #{conv2d_mnist_forward.5} parent=0 // pred_check
    _
  $region11: #{conv2d_mnist_forward.5} parent=0 // pred_check_branch
    %15 = sbr.rel (0) target = $region13
  $region12: #{conv2d_mnist_forward.5} parent=0 // pred_region
    _
  $region13: #{conv2d_mnist_forward.5} parent=0 // pred_fallthru
    _
  // Predicated region
  $region14: #{conv2d_mnist_forward.5} parent=0 // pred_check
    _
  $region15: #{conv2d_mnist_forward.5} parent=0 // pred_check_branch
    %17 = sbr.rel (0) target = $region17
  $region16: #{conv2d_mnist_forward.5} parent=0 // pred_region
    _
  $region17: #{conv2d_mnist_forward.5} parent=0 // pred_fallthru
    _
  // Predicated region
  $region18: #{conv2d_mnist_forward.5} parent=0 // pred_check
    _
  $region19: #{conv2d_mnist_forward.5} parent=0 // pred_check_branch
    %19 = sbr.rel (0) target = $region21
  $region20: #{conv2d_mnist_forward.5} parent=0 // pred_region
    _
  $region21: #{conv2d_mnist_forward.5} parent=0 // pred_fallthru
    _
  %v21 = vld [vmem:[%s0] sm:$0xff]
  %v22 = vld [vmem:[%s0 + $0x8] sm:$0xff]
  %v23 = vld [vmem:[%s0 + $0x10] sm:$0xff]
  %v24 = vld [vmem:[%s0 + $0x18] sm:$0xff]
  %v25 = vld [vmem:[%s0 + $0x20] sm:$0xff]
  %v26 = vld [vmem:[%s0 + $0x28] sm:$0xff]
  %v27 = vld [vmem:[%s0 + $0x30] sm:$0xff]
  %v28 = vld [vmem:[%s0 + $0x38] sm:$0xff]
  %v29 = vld [vmem:[%s0 + $0x40] sm:$0xff]
  %v30 = vld [vmem:[%s0 + $0x48] sm:$0xff]
  %v31 = vld [vmem:[%s0 + $0x50] sm:$0xff]
  %v32 = vld [vmem:[%s0 + $0x58] sm:$0xff]
  %v33 = vld [vmem:[%s0 + $0x60] sm:$0xff]
  %v34 = vld [vmem:[%s0 + $0x68] sm:$0xff]
  %v35 = vld [vmem:[%s0 + $0x70] sm:$0xff]
  %v36 = vld [vmem:[%s0 + $0x78] sm:$0xff]
  %v37 = vld [vmem:[%s1] sm:$0xff]
  %v38 = vld [vmem:[%s1 + $0x8] sm:$0xff]
  %v39 = vld [vmem:[%s1 + $0x10] sm:$0xff]
  %v40 = vld [vmem:[%s1 + $0x18] sm:$0xff]
  %v41 = vld [vmem:[%s1 + $0x20] sm:$0xff]
  %v42 = vld [vmem:[%s1 + $0x28] sm:$0xff]
  %v43 = vld [vmem:[%s1 + $0x30] sm:$0xff]
  %v44 = vld [vmem:[%s1 + $0x38] sm:$0xff]
  %v45 = vld [vmem:[%s1 + $0x40] sm:$0xff]
  %v46 = vld [vmem:[%s1 + $0x48] sm:$0xff]
  %v47 = vld [vmem:[%s1 + $0x50] sm:$0xff]
  %v48 = vld [vmem:[%s1 + $0x58] sm:$0xff]
  %v49 = vld [vmem:[%s1 + $0x60] sm:$0xff]
  %v50 = vld [vmem:[%s1 + $0x68] sm:$0xff]
  %v51 = vld [vmem:[%s1 + $0x70] sm:$0xff]
  %v52 = vld [vmem:[%s1 + $0x78] sm:$0xff]
  %v53 = vld [vmem:[%s1 + $0x80] sm:$0xff]
  %v54 = vld [vmem:[%s1 + $0x88] sm:$0xff]
  %v55 = vld [vmem:[%s1 + $0x90] sm:$0xff]
  %v56 = vld [vmem:[%s1 + $0x98] sm:$0xff]
  %v57 = vld [vmem:[%s1 + $0xa0] sm:$0xff]
  %v58 = vld [vmem:[%s1 + $0xa8] sm:$0xff]
  %v59 = vld [vmem:[%s1 + $0xb0] sm:$0xff]
  %v60 = vld [vmem:[%s1 + $0xb8] sm:$0xff]
  %v61 = vld [vmem:[%s1 + $0xc0] sm:$0xff]
  %v62 = vld [vmem:[%s1 + $0xc8] sm:$0xff]
  %v63 = vld [vmem:[%s1 + $0xd0] sm:$0xff]
  %v64 = vld [vmem:[%s1 + $0xd8] sm:$0xff]
  %v65 = vld [vmem:[%s1 + $0xe0] sm:$0xff]
  %v66 = vld [vmem:[%s1 + $0xe8] sm:$0xff]
  %v67 = vld [vmem:[%s1 + $0xf0] sm:$0xff]
  %v68 = vld [vmem:[%s1 + $0xf8] sm:$0xff]
  %v69 = vld [vmem:[%s1 + $0x100] sm:$0xff]
  %v70 = vld [vmem:[%s1 + $0x108] sm:$0xff]
  %v71 = vld [vmem:[%s1 + $0x110] sm:$0xff]
  %v72 = vld [vmem:[%s1 + $0x118] sm:$0xff]
  %v73 = vld [vmem:[%s1 + $0x120] sm:$0xff]
  %v74 = vld [vmem:[%s1 + $0x128] sm:$0xff]
  %v75 = vld [vmem:[%s1 + $0x130] sm:$0xff]
  %v76 = vld [vmem:[%s1 + $0x138] sm:$0xff]
  %v77 = vld [vmem:[%s1 + $0x140] sm:$0xff]
  %v78 = vld [vmem:[%s1 + $0x148] sm:$0xff]
  %v79 = vld [vmem:[%s1 + $0x150] sm:$0xff]
  %v80 = vld [vmem:[%s1 + $0x158] sm:$0xff]
  %v81 = vld [vmem:[%s1 + $0x160] sm:$0xff]
  %v82 = vld [vmem:[%s1 + $0x168] sm:$0xff]
  %v83 = vld [vmem:[%s1 + $0x170] sm:$0xff]
  %v84 = vld [vmem:[%s1 + $0x178] sm:$0xff]
  %v85 = vld [vmem:[%s1 + $0x180] sm:$0xff]
  %v86 = vld [vmem:[%s1 + $0x188] sm:$0xff]
  %v87 = vld [vmem:[%s1 + $0x190] sm:$0xff]
  %v88 = vld [vmem:[%s1 + $0x198] sm:$0xff]
  %v89 = vld [vmem:[%s1 + $0x1a0] sm:$0xff]
  %v90 = vld [vmem:[%s1 + $0x1a8] sm:$0xff]
  %v91 = vld [vmem:[%s1 + $0x1b0] sm:$0xff]
  %v92 = vld [vmem:[%s1 + $0x1b8] sm:$0xff]
  %v93 = vld [vmem:[%s1 + $0x1c0] sm:$0xff]
  %v94 = vld [vmem:[%s1 + $0x1c8] sm:$0xff]
  %v95 = vld [vmem:[%s1 + $0x1d0] sm:$0xff]
  %v96 = vld [vmem:[%s1 + $0x1d8] sm:$0xff]
  %v97 = vld [vmem:[%s1 + $0x1e0] sm:$0xff]
  %v98 = vld [vmem:[%s1 + $0x1e8] sm:$0xff]
  %v99 = vld [vmem:[%s1 + $0x1f0] sm:$0xff]
  %v100 = vld [vmem:[%s1 + $0x1f8] sm:$0xff]
  %v101 = vld [vmem:[%s1 + $0x200] sm:$0xff]
  %v102 = vld [vmem:[%s1 + $0x208] sm:$0xff]
  %v103 = vld [vmem:[%s1 + $0x210] sm:$0xff]
  %v104 = vld [vmem:[%s1 + $0x218] sm:$0xff]
  %v105 = vld [vmem:[%s1 + $0x220] sm:$0xff]
  %v106 = vld [vmem:[%s1 + $0x228] sm:$0xff]
  %v107 = vld [vmem:[%s1 + $0x230] sm:$0xff]
  %v108 = vld [vmem:[%s1 + $0x238] sm:$0xff]
  %v109 = vld [vmem:[%s1 + $0x240] sm:$0xff]
  %v110 = vld [vmem:[%s1 + $0x248] sm:$0xff]
  %v111 = vld [vmem:[%s1 + $0x250] sm:$0xff]
  %v112 = vld [vmem:[%s1 + $0x258] sm:$0xff]
  %v113 = vld [vmem:[%s1 + $0x260] sm:$0xff]
  %v114 = vld [vmem:[%s1 + $0x268] sm:$0xff]
  %v115 = vld [vmem:[%s1 + $0x270] sm:$0xff]
  %v116 = vld [vmem:[%s1 + $0x278] sm:$0xff]
  %v117 = vld [vmem:[%s1 + $0x280] sm:$0xff]
  %v118 = vld [vmem:[%s1 + $0x288] sm:$0xff]
  %v119 = vld [vmem:[%s1 + $0x290] sm:$0xff]
  %v120 = vld [vmem:[%s1 + $0x298] sm:$0xff]
  %v121 = vld [vmem:[%s1 + $0x2a0] sm:$0xff]
  %v122 = vld [vmem:[%s1 + $0x2a8] sm:$0xff]
  %v123 = vld [vmem:[%s1 + $0x2b0] sm:$0xff]
  %v124 = vld [vmem:[%s1 + $0x2b8] sm:$0xff]
  %v125 = vld [vmem:[%s1 + $0x2c0] sm:$0xff]
  %v126 = vld [vmem:[%s1 + $0x2c8] sm:$0xff]
  %v127 = vld [vmem:[%s1 + $0x2d0] sm:$0xff]
  %v128 = vld [vmem:[%s1 + $0x2d8] sm:$0xff]
  %v129 = vld [vmem:[%s1 + $0x2e0] sm:$0xff]
  %v130 = vld [vmem:[%s1 + $0x2e8] sm:$0xff]
  %v131 = vld [vmem:[%s1 + $0x2f0] sm:$0xff]
  %v132 = vld [vmem:[%s1 + $0x2f8] sm:$0xff]
  %v133 = vld [vmem:[%s1 + $0x300] sm:$0xff]
  %v134 = vld [vmem:[%s1 + $0x308] sm:$0xff]
  %v135 = vld [vmem:[%s1 + $0x310] sm:$0xff]
  %v136 = vld [vmem:[%s1 + $0x318] sm:$0xff]
  %v137 = vld [vmem:[%s1 + $0x320] sm:$0xff]
  %v138 = vld [vmem:[%s1 + $0x328] sm:$0xff]
  %v139 = vld [vmem:[%s1 + $0x330] sm:$0xff]
  %v140 = vld [vmem:[%s1 + $0x338] sm:$0xff]
  %v141 = vld [vmem:[%s1 + $0x340] sm:$0xff]
  %v142 = vld [vmem:[%s1 + $0x348] sm:$0xff]
  %v143 = vld [vmem:[%s1 + $0x350] sm:$0xff]
  %v144 = vld [vmem:[%s1 + $0x358] sm:$0xff]
  %v145 = vld [vmem:[%s1 + $0x360] sm:$0xff]
  %v146 = vld [vmem:[%s1 + $0x368] sm:$0xff]
  %v147 = vld [vmem:[%s1 + $0x370] sm:$0xff]
  %v148 = vld [vmem:[%s1 + $0x378] sm:$0xff]
  %v149 = vld [vmem:[%s1 + $0x380] sm:$0xff]
  %v150 = vld [vmem:[%s1 + $0x388] sm:$0xff]
  %v151 = vld [vmem:[%s1 + $0x390] sm:$0xff]
  %v152 = vld [vmem:[%s1 + $0x398] sm:$0xff]
  %v153 = vld [vmem:[%s1 + $0x3a0] sm:$0xff]
  %v154 = vld [vmem:[%s1 + $0x3a8] sm:$0xff]
  %v155 = vld [vmem:[%s1 + $0x3b0] sm:$0xff]
  %v156 = vld [vmem:[%s1 + $0x3b8] sm:$0xff]
  %v157 = vld [vmem:[%s1 + $0x3c0] sm:$0xff]
  %v158 = vld [vmem:[%s1 + $0x3c8] sm:$0xff]
  %v159 = vld [vmem:[%s1 + $0x3d0] sm:$0xff]
  %v160 = vld [vmem:[%s1 + $0x3d8] sm:$0xff]
  %v161 = vld [vmem:[%s1 + $0x3e0] sm:$0xff]
  %v162 = vld [vmem:[%s1 + $0x3e8] sm:$0xff]
  %v163 = vld [vmem:[%s1 + $0x3f0] sm:$0xff]
  %v164 = vld [vmem:[%s1 + $0x3f8] sm:$0xff]
  %v165 = vld [vmem:[%s1 + $0x400] sm:$0xff]
  %v166 = vld [vmem:[%s1 + $0x408] sm:$0xff]
  %v167 = vld [vmem:[%s1 + $0x410] sm:$0xff]
  %v168 = vld [vmem:[%s1 + $0x418] sm:$0xff]
  %v169 = vld [vmem:[%s1 + $0x420] sm:$0xff]
  %v170 = vld [vmem:[%s1 + $0x428] sm:$0xff]
  %v171 = vld [vmem:[%s1 + $0x430] sm:$0xff]
  %v172 = vld [vmem:[%s1 + $0x438] sm:$0xff]
  %v173 = vld [vmem:[%s1 + $0x440] sm:$0xff]
  %v174 = vld [vmem:[%s1 + $0x448] sm:$0xff]
  %v175 = vld [vmem:[%s1 + $0x450] sm:$0xff]
  %v176 = vld [vmem:[%s1 + $0x458] sm:$0xff]
  %v177 = vld [vmem:[%s1 + $0x460] sm:$0xff]
  %v178 = vld [vmem:[%s1 + $0x468] sm:$0xff]
  %v179 = vld [vmem:[%s1 + $0x470] sm:$0xff]
  %v180 = vld [vmem:[%s1 + $0x478] sm:$0xff]
  %v181 = vld [vmem:[%s1 + $0x480] sm:$0xff]
  %v182 = vld [vmem:[%s1 + $0x488] sm:$0xff]
  %v183 = vld [vmem:[%s1 + $0x490] sm:$0xff]
  %v184 = vld [vmem:[%s1 + $0x498] sm:$0xff]
  %v185 = vld [vmem:[%s1 + $0x4a0] sm:$0xff]
  %v186 = vld [vmem:[%s1 + $0x4a8] sm:$0xff]
  %v187 = vld [vmem:[%s1 + $0x4b0] sm:$0xff]
  %v188 = vld [vmem:[%s1 + $0x4b8] sm:$0xff]
  %v189 = vld [vmem:[%s1 + $0x4c0] sm:$0xff]
  %v190 = vld [vmem:[%s1 + $0x4c8] sm:$0xff]
  %v191 = vld [vmem:[%s1 + $0x4d0] sm:$0xff]
  %v192 = vld [vmem:[%s1 + $0x4d8] sm:$0xff]
  %v193 = vld [vmem:[%s1 + $0x4e0] sm:$0xff]
  %v194 = vld [vmem:[%s1 + $0x4e8] sm:$0xff]
  %v195 = vld [vmem:[%s1 + $0x4f0] sm:$0xff]
  %v196 = vld [vmem:[%s1 + $0x4f8] sm:$0xff]
  %v197 = vld [vmem:[%s1 + $0x500] sm:$0xff]
  %v198 = vld [vmem:[%s1 + $0x508] sm:$0xff]
  %v199 = vld [vmem:[%s1 + $0x510] sm:$0xff]
  %v200 = vld [vmem:[%s1 + $0x518] sm:$0xff]
  %v201 = vld [vmem:[%s1 + $0x520] sm:$0xff]
  %v202 = vld [vmem:[%s1 + $0x528] sm:$0xff]
  %v203 = vld [vmem:[%s1 + $0x530] sm:$0xff]
  %v204 = vld [vmem:[%s1 + $0x538] sm:$0xff]
  %v205 = vld [vmem:[%s1 + $0x540] sm:$0xff]
  %v206 = vld [vmem:[%s1 + $0x548] sm:$0xff]
  %v207 = vld [vmem:[%s1 + $0x550] sm:$0xff]
  %v208 = vld [vmem:[%s1 + $0x558] sm:$0xff]
  %v209 = vld [vmem:[%s1 + $0x560] sm:$0xff]
  %v210 = vld [vmem:[%s1 + $0x568] sm:$0xff]
  %v211 = vld [vmem:[%s1 + $0x570] sm:$0xff]
  %v212 = vld [vmem:[%s1 + $0x578] sm:$0xff]
  %v213 = vld [vmem:[%s1 + $0x580] sm:$0xff]
  %v214 = vld [vmem:[%s1 + $0x588] sm:$0xff]
  %v215 = vld [vmem:[%s1 + $0x590] sm:$0xff]
  %v216 = vld [vmem:[%s1 + $0x598] sm:$0xff]
  %v217 = vld [vmem:[%s1 + $0x5a0] sm:$0xff]
  %v218 = vld [vmem:[%s1 + $0x5a8] sm:$0xff]
  %v219 = vld [vmem:[%s1 + $0x5b0] sm:$0xff]
  %v220 = vld [vmem:[%s1 + $0x5b8] sm:$0xff]
  %v221 = vld [vmem:[%s1 + $0x5c0] sm:$0xff]
  %v222 = vld [vmem:[%s1 + $0x5c8] sm:$0xff]
  %v223 = vld [vmem:[%s1 + $0x5d0] sm:$0xff]
  %v224 = vld [vmem:[%s1 + $0x5d8] sm:$0xff]
  %v225 = vld [vmem:[%s1 + $0x5e0] sm:$0xff]
  %v226 = vld [vmem:[%s1 + $0x5e8] sm:$0xff]
  %v227 = vld [vmem:[%s1 + $0x5f0] sm:$0xff]
  %v228 = vld [vmem:[%s1 + $0x5f8] sm:$0xff]
  %v229 = vld [vmem:[%s1 + $0x600] sm:$0xff]
  %v230 = vld [vmem:[%s1 + $0x608] sm:$0xff]
  %v231 = vld [vmem:[%s1 + $0x610] sm:$0xff]
  %v232 = vld [vmem:[%s1 + $0x618] sm:$0xff]
  %v233 = vld [vmem:[%s1 + $0x620] sm:$0xff]
  %v234 = vld [vmem:[%s1 + $0x628] sm:$0xff]
  %v235 = vld [vmem:[%s1 + $0x630] sm:$0xff]
  %v236 = vld [vmem:[%s1 + $0x638] sm:$0xff]
  %v237 = vld [vmem:[%s1 + $0x640] sm:$0xff]
  %v238 = vld [vmem:[%s1 + $0x648] sm:$0xff]
  %v239 = vld [vmem:[%s1 + $0x650] sm:$0xff]
  %v240 = vld [vmem:[%s1 + $0x658] sm:$0xff]
  %v241 = vld [vmem:[%s1 + $0x660] sm:$0xff]
  %v242 = vld [vmem:[%s1 + $0x668] sm:$0xff]
  %v243 = vld [vmem:[%s1 + $0x670] sm:$0xff]
  %v244 = vld [vmem:[%s1 + $0x678] sm:$0xff]
  %v245 = vld [vmem:[%s1 + $0x680] sm:$0xff]
  %v246 = vld [vmem:[%s1 + $0x688] sm:$0xff]
  %v247 = vld [vmem:[%s1 + $0x690] sm:$0xff]
  %v248 = vld [vmem:[%s1 + $0x698] sm:$0xff]
  %v249 = vld [vmem:[%s1 + $0x6a0] sm:$0xff]
  %v250 = vld [vmem:[%s1 + $0x6a8] sm:$0xff]
  %v251 = vld [vmem:[%s1 + $0x6b0] sm:$0xff]
  %v252 = vld [vmem:[%s1 + $0x6b8] sm:$0xff]
  %v253 = vld [vmem:[%s1 + $0x6c0] sm:$0xff]
  %v254 = vld [vmem:[%s1 + $0x6c8] sm:$0xff]
  %v255 = vld [vmem:[%s1 + $0x6d0] sm:$0xff]
  %v256 = vld [vmem:[%s1 + $0x6d8] sm:$0xff]
  %v257 = vld [vmem:[%s1 + $0x6e0] sm:$0xff]
  %v258 = vld [vmem:[%s1 + $0x6e8] sm:$0xff]
  %v259 = vld [vmem:[%s1 + $0x6f0] sm:$0xff]
  %v260 = vld [vmem:[%s1 + $0x6f8] sm:$0xff]
  %v261 = vld [vmem:[%s1 + $0x700] sm:$0xff]
  %v262 = vld [vmem:[%s1 + $0x708] sm:$0xff]
  %v263 = vld [vmem:[%s1 + $0x710] sm:$0xff]
  %v264 = vld [vmem:[%s1 + $0x718] sm:$0xff]
  %v265 = vld [vmem:[%s1 + $0x720] sm:$0xff]
  %v266 = vld [vmem:[%s1 + $0x728] sm:$0xff]
  %v267 = vld [vmem:[%s1 + $0x730] sm:$0xff]
  %v268 = vld [vmem:[%s1 + $0x738] sm:$0xff]
  %v269 = vld [vmem:[%s1 + $0x740] sm:$0xff]
  %v270 = vld [vmem:[%s1 + $0x748] sm:$0xff]
  %v271 = vld [vmem:[%s1 + $0x750] sm:$0xff]
  %v272 = vld [vmem:[%s1 + $0x758] sm:$0xff]
  %v273 = vld [vmem:[%s1 + $0x760] sm:$0xff]
  %v274 = vld [vmem:[%s1 + $0x768] sm:$0xff]
  %v275 = vld [vmem:[%s1 + $0x770] sm:$0xff]
  %v276 = vld [vmem:[%s1 + $0x778] sm:$0xff]
  %v277 = vld [vmem:[%s1 + $0x780] sm:$0xff]
  %v278 = vld [vmem:[%s1 + $0x788] sm:$0xff]
  %v279 = vld [vmem:[%s1 + $0x790] sm:$0xff]
  %v280 = vld [vmem:[%s1 + $0x798] sm:$0xff]
  %v281 = vld [vmem:[%s1 + $0x7a0] sm:$0xff]
  %v282 = vld [vmem:[%s1 + $0x7a8] sm:$0xff]
  %v283 = vld [vmem:[%s1 + $0x7b0] sm:$0xff]
  %v284 = vld [vmem:[%s1 + $0x7b8] sm:$0xff]
  %v285 = vld [vmem:[%s1 + $0x7c0] sm:$0xff]
  %v286 = vld [vmem:[%s1 + $0x7c8] sm:$0xff]
  %v287 = vld [vmem:[%s1 + $0x7d0] sm:$0xff]
  %v288 = vld [vmem:[%s1 + $0x7d8] sm:$0xff]
  %v289 = vld [vmem:[%s1 + $0x7e0] sm:$0xff]
  %v290 = vld [vmem:[%s1 + $0x7e8] sm:$0xff]
  %v291 = vld [vmem:[%s1 + $0x7f0] sm:$0xff]
  %v292 = vld [vmem:[%s1 + $0x7f8] sm:$0xff]
  %v293 = vld [vmem:[%s1 + $0x800] sm:$0xff]
  %v294 = vld [vmem:[%s1 + $0x808] sm:$0xff]
  %v295 = vld [vmem:[%s1 + $0x810] sm:$0xff]
  %v296 = vld [vmem:[%s1 + $0x818] sm:$0xff]
  %v297 = vld [vmem:[%s1 + $0x820] sm:$0xff]
  %v298 = vld [vmem:[%s1 + $0x828] sm:$0xff]
  %v299 = vld [vmem:[%s1 + $0x830] sm:$0xff]
  %v300 = vld [vmem:[%s1 + $0x838] sm:$0xff]
  %v301 = vld [vmem:[%s1 + $0x840] sm:$0xff]
  %v302 = vld [vmem:[%s1 + $0x848] sm:$0xff]
  %v303 = vld [vmem:[%s1 + $0x850] sm:$0xff]
  %v304 = vld [vmem:[%s1 + $0x858] sm:$0xff]
  %v305 = vld [vmem:[%s1 + $0x860] sm:$0xff]
  %v306 = vld [vmem:[%s1 + $0x868] sm:$0xff]
  %v307 = vld [vmem:[%s1 + $0x870] sm:$0xff]
  %v308 = vld [vmem:[%s1 + $0x878] sm:$0xff]
  %v309 = vld [vmem:[%s1 + $0x880] sm:$0xff]
  %v310 = vld [vmem:[%s1 + $0x888] sm:$0xff]
  %v311 = vld [vmem:[%s1 + $0x890] sm:$0xff]
  %v312 = vld [vmem:[%s1 + $0x898] sm:$0xff]
  %v313 = vld [vmem:[%s1 + $0x8a0] sm:$0xff]
  %v314 = vld [vmem:[%s1 + $0x8a8] sm:$0xff]
  %v315 = vld [vmem:[%s1 + $0x8b0] sm:$0xff]
  %v316 = vld [vmem:[%s1 + $0x8b8] sm:$0xff]
  %v317 = vld [vmem:[%s1 + $0x8c0] sm:$0xff]
  %v318 = vld [vmem:[%s1 + $0x8c8] sm:$0xff]
  %v319 = vld [vmem:[%s1 + $0x8d0] sm:$0xff]
  %v320 = vld [vmem:[%s1 + $0x8d8] sm:$0xff]
  %v321 = vld [vmem:[%s1 + $0x8e0] sm:$0xff]
  %v322 = vld [vmem:[%s1 + $0x8e8] sm:$0xff]
  %v323 = vld [vmem:[%s1 + $0x8f0] sm:$0xff]
  %v324 = vld [vmem:[%s1 + $0x8f8] sm:$0xff]
  %v325 = vld [vmem:[%s1 + $0x900] sm:$0xff]
  %v326 = vld [vmem:[%s1 + $0x908] sm:$0xff]
  %v327 = vld [vmem:[%s1 + $0x910] sm:$0xff]
  %v328 = vld [vmem:[%s1 + $0x918] sm:$0xff]
  %v329 = vld [vmem:[%s1 + $0x920] sm:$0xff]
  %v330 = vld [vmem:[%s1 + $0x928] sm:$0xff]
  %v331 = vld [vmem:[%s1 + $0x930] sm:$0xff]
  %v332 = vld [vmem:[%s1 + $0x938] sm:$0xff]
  %v333 = vld [vmem:[%s1 + $0x940] sm:$0xff]
  %v334 = vld [vmem:[%s1 + $0x948] sm:$0xff]
  %v335 = vld [vmem:[%s1 + $0x950] sm:$0xff]
  %v336 = vld [vmem:[%s1 + $0x958] sm:$0xff]
  %v337 = vld [vmem:[%s1 + $0x960] sm:$0xff]
  %v338 = vld [vmem:[%s1 + $0x968] sm:$0xff]
  %v339 = vld [vmem:[%s1 + $0x970] sm:$0xff]
  %v340 = vld [vmem:[%s1 + $0x978] sm:$0xff]
  %v341 = vld [vmem:[%s1 + $0x980] sm:$0xff]
  %v342 = vld [vmem:[%s1 + $0x988] sm:$0xff]
  %v343 = vld [vmem:[%s1 + $0x990] sm:$0xff]
  %v344 = vld [vmem:[%s1 + $0x998] sm:$0xff]
  %v345 = vld [vmem:[%s1 + $0x9a0] sm:$0xff]
  %v346 = vld [vmem:[%s1 + $0x9a8] sm:$0xff]
  %v347 = vld [vmem:[%s1 + $0x9b0] sm:$0xff]
  %v348 = vld [vmem:[%s1 + $0x9b8] sm:$0xff]
  %v349 = vld [vmem:[%s1 + $0x9c0] sm:$0xff]
  %v350 = vld [vmem:[%s1 + $0x9c8] sm:$0xff]
  %v351 = vld [vmem:[%s1 + $0x9d0] sm:$0xff]
  %v352 = vld [vmem:[%s1 + $0x9d8] sm:$0xff]
  %v353 = vld [vmem:[%s1 + $0x9e0] sm:$0xff]
  %v354 = vld [vmem:[%s1 + $0x9e8] sm:$0xff]
  %v355 = vld [vmem:[%s1 + $0x9f0] sm:$0xff]
  %v356 = vld [vmem:[%s1 + $0x9f8] sm:$0xff]
  %v357 = vld [vmem:[%s1 + $0xa00] sm:$0xff]
  %v358 = vld [vmem:[%s1 + $0xa08] sm:$0xff]
  %v359 = vld [vmem:[%s1 + $0xa10] sm:$0xff]
  %v360 = vld [vmem:[%s1 + $0xa18] sm:$0xff]
  %v361 = vld [vmem:[%s1 + $0xa20] sm:$0xff]
  %v362 = vld [vmem:[%s1 + $0xa28] sm:$0xff]
  %v363 = vld [vmem:[%s1 + $0xa30] sm:$0xff]
  %v364 = vld [vmem:[%s1 + $0xa38] sm:$0xff]
  %v365 = vld [vmem:[%s1 + $0xa40] sm:$0xff]
  %v366 = vld [vmem:[%s1 + $0xa48] sm:$0xff]
  %v367 = vld [vmem:[%s1 + $0xa50] sm:$0xff]
  %v368 = vld [vmem:[%s1 + $0xa58] sm:$0xff]
  %v369 = vld [vmem:[%s1 + $0xa60] sm:$0xff]
  %v370 = vld [vmem:[%s1 + $0xa68] sm:$0xff]
  %v371 = vld [vmem:[%s1 + $0xa70] sm:$0xff]
  %v372 = vld [vmem:[%s1 + $0xa78] sm:$0xff]
  %v373 = vld [vmem:[%s1 + $0xa80] sm:$0xff]
  %v374 = vld [vmem:[%s1 + $0xa88] sm:$0xff]
  %v375 = vld [vmem:[%s1 + $0xa90] sm:$0xff]
  %v376 = vld [vmem:[%s1 + $0xa98] sm:$0xff]
  %v377 = vld [vmem:[%s1 + $0xaa0] sm:$0xff]
  %v378 = vld [vmem:[%s1 + $0xaa8] sm:$0xff]
  %v379 = vld [vmem:[%s1 + $0xab0] sm:$0xff]
  %v380 = vld [vmem:[%s1 + $0xab8] sm:$0xff]
  %v381 = vld [vmem:[%s1 + $0xac0] sm:$0xff]
  %v382 = vld [vmem:[%s1 + $0xac8] sm:$0xff]
  %v383 = vld [vmem:[%s1 + $0xad0] sm:$0xff]
  %v384 = vld [vmem:[%s1 + $0xad8] sm:$0xff]
  %v385 = vld [vmem:[%s1 + $0xae0] sm:$0xff]
  %v386 = vld [vmem:[%s1 + $0xae8] sm:$0xff]
  %v387 = vld [vmem:[%s1 + $0xaf0] sm:$0xff]
  %v388 = vld [vmem:[%s1 + $0xaf8] sm:$0xff]
  %v389 = vld [vmem:[%s1 + $0xb00] sm:$0xff]
  %v390 = vld [vmem:[%s1 + $0xb08] sm:$0xff]
  %v391 = vld [vmem:[%s1 + $0xb10] sm:$0xff]
  %v392 = vld [vmem:[%s1 + $0xb18] sm:$0xff]
  %v393 = vld [vmem:[%s1 + $0xb20] sm:$0xff]
  %v394 = vld [vmem:[%s1 + $0xb28] sm:$0xff]
  %v395 = vld [vmem:[%s1 + $0xb30] sm:$0xff]
  %v396 = vld [vmem:[%s1 + $0xb38] sm:$0xff]
  %v397 = vld [vmem:[%s1 + $0xb40] sm:$0xff]
  %v398 = vld [vmem:[%s1 + $0xb48] sm:$0xff]
  %v399 = vld [vmem:[%s1 + $0xb50] sm:$0xff]
  %v400 = vld [vmem:[%s1 + $0xb58] sm:$0xff]
  %v401 = vld [vmem:[%s1 + $0xb60] sm:$0xff]
  %v402 = vld [vmem:[%s1 + $0xb68] sm:$0xff]
  %v403 = vld [vmem:[%s1 + $0xb70] sm:$0xff]
  %v404 = vld [vmem:[%s1 + $0xb78] sm:$0xff]
  %v405 = vld [vmem:[%s1 + $0xb80] sm:$0xff]
  %v406 = vld [vmem:[%s1 + $0xb88] sm:$0xff]
  %v407 = vld [vmem:[%s1 + $0xb90] sm:$0xff]
  %v408 = vld [vmem:[%s1 + $0xb98] sm:$0xff]
  %v409 = vld [vmem:[%s1 + $0xba0] sm:$0xff]
  %v410 = vld [vmem:[%s1 + $0xba8] sm:$0xff]
  %v411 = vld [vmem:[%s1 + $0xbb0] sm:$0xff]
  %v412 = vld [vmem:[%s1 + $0xbb8] sm:$0xff]
  %v413 = vld [vmem:[%s1 + $0xbc0] sm:$0xff]
  %v414 = vld [vmem:[%s1 + $0xbc8] sm:$0xff]
  %v415 = vld [vmem:[%s1 + $0xbd0] sm:$0xff]
  %v416 = vld [vmem:[%s1 + $0xbd8] sm:$0xff]
  %v417 = vld [vmem:[%s1 + $0xbe0] sm:$0xff]
  %v418 = vld [vmem:[%s1 + $0xbe8] sm:$0xff]
  %v419 = vld [vmem:[%s1 + $0xbf0] sm:$0xff]
  %v420 = vld [vmem:[%s1 + $0xbf8] sm:$0xff]
  %v421 = vld [vmem:[%s1 + $0xc00] sm:$0xff]
  %v422 = vld [vmem:[%s1 + $0xc08] sm:$0xff]
  %v423 = vld [vmem:[%s1 + $0xc10] sm:$0xff]
  %v424 = vld [vmem:[%s1 + $0xc18] sm:$0xff]
  %v425 = vld [vmem:[%s1 + $0xc20] sm:$0xff]
  %v426 = vld [vmem:[%s1 + $0xc28] sm:$0xff]
  %v427 = vld [vmem:[%s1 + $0xc30] sm:$0xff]
  %v428 = vld [vmem:[%s1 + $0xc38] sm:$0xff]
  %v429 = vld [vmem:[%s1 + $0xc40] sm:$0xff]
  %v430 = vld [vmem:[%s1 + $0xc48] sm:$0xff]
  %v431 = vld [vmem:[%s1 + $0xc50] sm:$0xff]
  %v432 = vld [vmem:[%s1 + $0xc58] sm:$0xff]
  %v433 = vld [vmem:[%s1 + $0xc60] sm:$0xff]
  %v434 = vld [vmem:[%s1 + $0xc68] sm:$0xff]
  %v435 = vld [vmem:[%s1 + $0xc70] sm:$0xff]
  %v436 = vld [vmem:[%s1 + $0xc78] sm:$0xff]
  %v437 = vld [vmem:[%s1 + $0xc80] sm:$0xff]
  %v438 = vld [vmem:[%s1 + $0xc88] sm:$0xff]
  %v439 = vld [vmem:[%s1 + $0xc90] sm:$0xff]
  %v440 = vld [vmem:[%s1 + $0xc98] sm:$0xff]
  %v441 = vld [vmem:[%s1 + $0xca0] sm:$0xff]
  %v442 = vld [vmem:[%s1 + $0xca8] sm:$0xff]
  %v443 = vld [vmem:[%s1 + $0xcb0] sm:$0xff]
  %v444 = vld [vmem:[%s1 + $0xcb8] sm:$0xff]
  %v445 = vld [vmem:[%s1 + $0xcc0] sm:$0xff]
  %v446 = vld [vmem:[%s1 + $0xcc8] sm:$0xff]
  %v447 = vld [vmem:[%s1 + $0xcd0] sm:$0xff]
  %v448 = vld [vmem:[%s1 + $0xcd8] sm:$0xff]
  %v449 = vld [vmem:[%s1 + $0xce0] sm:$0xff]
  %v450 = vld [vmem:[%s1 + $0xce8] sm:$0xff]
  %v451 = vld [vmem:[%s1 + $0xcf0] sm:$0xff]
  %v452 = vld [vmem:[%s1 + $0xcf8] sm:$0xff]
  %v453 = vld [vmem:[%s1 + $0xd00] sm:$0xff]
  %v454 = vld [vmem:[%s1 + $0xd08] sm:$0xff]
  %v455 = vld [vmem:[%s1 + $0xd10] sm:$0xff]
  %v456 = vld [vmem:[%s1 + $0xd18] sm:$0xff]
  %v457 = vld [vmem:[%s1 + $0xd20] sm:$0xff]
  %v458 = vld [vmem:[%s1 + $0xd28] sm:$0xff]
  %v459 = vld [vmem:[%s1 + $0xd30] sm:$0xff]
  %v460 = vld [vmem:[%s1 + $0xd38] sm:$0xff]
  %v461 = vld [vmem:[%s1 + $0xd40] sm:$0xff]
  %v462 = vld [vmem:[%s1 + $0xd48] sm:$0xff]
  %v463 = vld [vmem:[%s1 + $0xd50] sm:$0xff]
  %v464 = vld [vmem:[%s1 + $0xd58] sm:$0xff]
  %v465 = vld [vmem:[%s1 + $0xd60] sm:$0xff]
  %v466 = vld [vmem:[%s1 + $0xd68] sm:$0xff]
  %v467 = vld [vmem:[%s1 + $0xd70] sm:$0xff]
  %v468 = vld [vmem:[%s1 + $0xd78] sm:$0xff]
  %v469 = vld [vmem:[%s1 + $0xd80] sm:$0xff]
  %v470 = vld [vmem:[%s1 + $0xd88] sm:$0xff]
  %v471 = vld [vmem:[%s1 + $0xd90] sm:$0xff]
  %v472 = vld [vmem:[%s1 + $0xd98] sm:$0xff]
  %v473 = vld [vmem:[%s1 + $0xda0] sm:$0xff]
  %v474 = vld [vmem:[%s1 + $0xda8] sm:$0xff]
  %v475 = vld [vmem:[%s1 + $0xdb0] sm:$0xff]
  %v476 = vld [vmem:[%s1 + $0xdb8] sm:$0xff]
  %v477 = vld [vmem:[%s1 + $0xdc0] sm:$0xff]
  %v478 = vld [vmem:[%s1 + $0xdc8] sm:$0xff]
  %v479 = vld [vmem:[%s1 + $0xdd0] sm:$0xff]
  %v480 = vld [vmem:[%s1 + $0xdd8] sm:$0xff]
  %v481 = vld [vmem:[%s1 + $0xde0] sm:$0xff]
  %v482 = vld [vmem:[%s1 + $0xde8] sm:$0xff]
  %v483 = vld [vmem:[%s1 + $0xdf0] sm:$0xff]
  %v484 = vld [vmem:[%s1 + $0xdf8] sm:$0xff]
  %v485 = vld [vmem:[%s1 + $0xe00] sm:$0xff]
  %v486 = vld [vmem:[%s1 + $0xe08] sm:$0xff]
  %v487 = vld [vmem:[%s1 + $0xe10] sm:$0xff]
  %v488 = vld [vmem:[%s1 + $0xe18] sm:$0xff]
  %v489 = vld [vmem:[%s1 + $0xe20] sm:$0xff]
  %v490 = vld [vmem:[%s1 + $0xe28] sm:$0xff]
  %v491 = vld [vmem:[%s1 + $0xe30] sm:$0xff]
  %v492 = vld [vmem:[%s1 + $0xe38] sm:$0xff]
  %v493 = vld [vmem:[%s1 + $0xe40] sm:$0xff]
  %v494 = vld [vmem:[%s1 + $0xe48] sm:$0xff]
  %v495 = vld [vmem:[%s1 + $0xe50] sm:$0xff]
  %v496 = vld [vmem:[%s1 + $0xe58] sm:$0xff]
  %v497 = vld [vmem:[%s1 + $0xe60] sm:$0xff]
  %v498 = vld [vmem:[%s1 + $0xe68] sm:$0xff]
  %v499 = vld [vmem:[%s1 + $0xe70] sm:$0xff]
  %v500 = vld [vmem:[%s1 + $0xe78] sm:$0xff]
  %v501 = vld [vmem:[%s1 + $0xe80] sm:$0xff]
  %v502 = vld [vmem:[%s1 + $0xe88] sm:$0xff]
  %v503 = vld [vmem:[%s1 + $0xe90] sm:$0xff]
  %v504 = vld [vmem:[%s1 + $0xe98] sm:$0xff]
  %v505 = vld [vmem:[%s1 + $0xea0] sm:$0xff]
  %v506 = vld [vmem:[%s1 + $0xea8] sm:$0xff]
  %v507 = vld [vmem:[%s1 + $0xeb0] sm:$0xff]
  %v508 = vld [vmem:[%s1 + $0xeb8] sm:$0xff]
  %v509 = vld [vmem:[%s1 + $0xec0] sm:$0xff]
  %v510 = vld [vmem:[%s1 + $0xec8] sm:$0xff]
  %v511 = vld [vmem:[%s1 + $0xed0] sm:$0xff]
  %v512 = vld [vmem:[%s1 + $0xed8] sm:$0xff]
  %v513 = vld [vmem:[%s1 + $0xee0] sm:$0xff]
  %v514 = vld [vmem:[%s1 + $0xee8] sm:$0xff]
  %v515 = vld [vmem:[%s1 + $0xef0] sm:$0xff]
  %v516 = vld [vmem:[%s1 + $0xef8] sm:$0xff]
  %v517 = vld [vmem:[%s1 + $0xf00] sm:$0xff]
  %v518 = vld [vmem:[%s1 + $0xf08] sm:$0xff]
  %v519 = vld [vmem:[%s1 + $0xf10] sm:$0xff]
  %v520 = vld [vmem:[%s1 + $0xf18] sm:$0xff]
  %v521 = vld [vmem:[%s1 + $0xf20] sm:$0xff]
  %v522 = vld [vmem:[%s1 + $0xf28] sm:$0xff]
  %v523 = vld [vmem:[%s1 + $0xf30] sm:$0xff]
  %v524 = vld [vmem:[%s1 + $0xf38] sm:$0xff]
  %v525 = vld [vmem:[%s1 + $0xf40] sm:$0xff]
  %v526 = vld [vmem:[%s1 + $0xf48] sm:$0xff]
  %v527 = vld [vmem:[%s1 + $0xf50] sm:$0xff]
  %v528 = vld [vmem:[%s1 + $0xf58] sm:$0xff]
  %v529 = vld [vmem:[%s1 + $0xf60] sm:$0xff]
  %v530 = vld [vmem:[%s1 + $0xf68] sm:$0xff]
  %v531 = vld [vmem:[%s1 + $0xf70] sm:$0xff]
  %v532 = vld [vmem:[%s1 + $0xf78] sm:$0xff]
  %v533 = vld [vmem:[%s1 + $0xf80] sm:$0xff]
  %v534 = vld [vmem:[%s1 + $0xf88] sm:$0xff]
  %v535 = vld [vmem:[%s1 + $0xf90] sm:$0xff]
  %v536 = vld [vmem:[%s1 + $0xf98] sm:$0xff]
  %v537 = vld [vmem:[%s2] sm:$0xf]
  %v539 = vperm.slane %v537, 0
  %v540 = vperm.slane %v537, 1
  %v541 = vperm.slane %v537, 2
  %v542 = vperm.slane %v537, 3
  %v563 = vunpack.c.l.b16 %v21
  %v564 = vunpack.c.h.b16 %v21
  %v565 = vunpack.c.l.b16 %v22
  %v566 = vunpack.c.h.b16 %v22
  %v567 = vunpack.c.l.b16 %v23
  %v568 = vunpack.c.h.b16 %v23
  %v569 = vunpack.c.l.b16 %v24
  %v570 = vunpack.c.h.b16 %v24
  %v571 = vunpack.c.l.b16 %v25
  %v572 = vunpack.c.h.b16 %v25
  %v573 = vunpack.c.l.b16 %v26
  %v574 = vunpack.c.h.b16 %v26
  %v575 = vunpack.c.l.b16 %v27
  %v576 = vunpack.c.h.b16 %v27
  %v577 = vunpack.c.l.b16 %v28
  %v578 = vunpack.c.h.b16 %v28
  %v579 = vunpack.c.l.b16 %v29
  %v580 = vunpack.c.h.b16 %v29
  %v581 = vunpack.c.l.b16 %v30
  %v582 = vunpack.c.h.b16 %v30
  %v583 = vunpack.c.l.b16 %v31
  %v584 = vunpack.c.h.b16 %v31
  %v585 = vunpack.c.l.b16 %v32
  %v586 = vunpack.c.h.b16 %v32
  %v587 = vunpack.c.l.b16 %v33
  %v588 = vunpack.c.h.b16 %v33
  %v589 = vunpack.c.l.b16 %v34
  %v590 = vunpack.c.h.b16 %v34
  %v591 = vunpack.c.l.b16 %v35
  %v592 = vunpack.c.h.b16 %v35
  %v593 = vunpack.c.l.b16 %v36
  %v594 = vunpack.c.h.b16 %v36
  %v595 = vpack.c.b16 %v579, %v563
  %v596 = vpack.c.b16 %v580, %v564
  %v597 = vpack.c.b16 %v581, %v565
  %v598 = vpack.c.b16 %v582, %v566
  %v599 = vpack.c.b16 %v583, %v567
  %v600 = vpack.c.b16 %v584, %v568
  %v601 = vpack.c.b16 %v585, %v569
  %v602 = vpack.c.b16 %v586, %v570
  %v603 = vpack.c.b16 %v587, %v571
  %v604 = vpack.c.b16 %v588, %v572
  %v605 = vpack.c.b16 %v589, %v573
  %v606 = vpack.c.b16 %v590, %v574
  %v607 = vpack.c.b16 %v591, %v575
  %v608 = vpack.c.b16 %v592, %v576
  %v609 = vpack.c.b16 %v593, %v577
  %v610 = vpack.c.b16 %v594, %v578
  %v1126 = vunpack.c.l.b16 %v37
  %v1127 = vunpack.c.h.b16 %v37
  %v1128 = vunpack.c.l.b16 %v38
  %v1129 = vunpack.c.h.b16 %v38
  %v1130 = vunpack.c.l.b16 %v39
  %v1131 = vunpack.c.h.b16 %v39
  %v1132 = vunpack.c.l.b16 %v40
  %v1133 = vunpack.c.h.b16 %v40
  %v1134 = vunpack.c.l.b16 %v41
  %v1135 = vunpack.c.h.b16 %v41
  %v1136 = vunpack.c.l.b16 %v42
  %v1137 = vunpack.c.h.b16 %v42
  %v1138 = vunpack.c.l.b16 %v43
  %v1139 = vunpack.c.h.b16 %v43
  %v1140 = vunpack.c.l.b16 %v44
  %v1141 = vunpack.c.h.b16 %v44
  %v1142 = vunpack.c.l.b16 %v45
  %v1143 = vunpack.c.h.b16 %v45
  %v1144 = vunpack.c.l.b16 %v46
  %v1145 = vunpack.c.h.b16 %v46
  %v1146 = vunpack.c.l.b16 %v47
  %v1147 = vunpack.c.h.b16 %v47
  %v1148 = vunpack.c.l.b16 %v48
  %v1149 = vunpack.c.h.b16 %v48
  %v1150 = vunpack.c.l.b16 %v49
  %v1151 = vunpack.c.h.b16 %v49
  %v1152 = vunpack.c.l.b16 %v50
  %v1153 = vunpack.c.h.b16 %v50
  %v1154 = vunpack.c.l.b16 %v51
  %v1155 = vunpack.c.h.b16 %v51
  %v1156 = vunpack.c.l.b16 %v52
  %v1157 = vunpack.c.h.b16 %v52
  %v1158 = vunpack.c.l.b16 %v53
  %v1159 = vunpack.c.h.b16 %v53
  %v1160 = vunpack.c.l.b16 %v54
  %v1161 = vunpack.c.h.b16 %v54
  %v1162 = vunpack.c.l.b16 %v55
  %v1163 = vunpack.c.h.b16 %v55
  %v1164 = vunpack.c.l.b16 %v56
  %v1165 = vunpack.c.h.b16 %v56
  %v1166 = vunpack.c.l.b16 %v57
  %v1167 = vunpack.c.h.b16 %v57
  %v1168 = vunpack.c.l.b16 %v58
  %v1169 = vunpack.c.h.b16 %v58
  %v1170 = vunpack.c.l.b16 %v59
  %v1171 = vunpack.c.h.b16 %v59
  %v1172 = vunpack.c.l.b16 %v60
  %v1173 = vunpack.c.h.b16 %v60
  %v1174 = vunpack.c.l.b16 %v61
  %v1175 = vunpack.c.h.b16 %v61
  %v1176 = vunpack.c.l.b16 %v62
  %v1177 = vunpack.c.h.b16 %v62
  %v1178 = vunpack.c.l.b16 %v63
  %v1179 = vunpack.c.h.b16 %v63
  %v1180 = vunpack.c.l.b16 %v64
  %v1181 = vunpack.c.h.b16 %v64
  %v1182 = vunpack.c.l.b16 %v65
  %v1183 = vunpack.c.h.b16 %v65
  %v1184 = vunpack.c.l.b16 %v66
  %v1185 = vunpack.c.h.b16 %v66
  %v1186 = vunpack.c.l.b16 %v67
  %v1187 = vunpack.c.h.b16 %v67
  %v1188 = vunpack.c.l.b16 %v68
  %v1189 = vunpack.c.h.b16 %v68
  %v1190 = vunpack.c.l.b16 %v69
  %v1191 = vunpack.c.h.b16 %v69
  %v1192 = vunpack.c.l.b16 %v70
  %v1193 = vunpack.c.h.b16 %v70
  %v1194 = vunpack.c.l.b16 %v71
  %v1195 = vunpack.c.h.b16 %v71
  %v1196 = vunpack.c.l.b16 %v72
  %v1197 = vunpack.c.h.b16 %v72
  %v1198 = vunpack.c.l.b16 %v73
  %v1199 = vunpack.c.h.b16 %v73
  %v1200 = vunpack.c.l.b16 %v74
  %v1201 = vunpack.c.h.b16 %v74
  %v1202 = vunpack.c.l.b16 %v75
  %v1203 = vunpack.c.h.b16 %v75
  %v1204 = vunpack.c.l.b16 %v76
  %v1205 = vunpack.c.h.b16 %v76
  %v1206 = vunpack.c.l.b16 %v77
  %v1207 = vunpack.c.h.b16 %v77
  %v1208 = vunpack.c.l.b16 %v78
  %v1209 = vunpack.c.h.b16 %v78
  %v1210 = vunpack.c.l.b16 %v79
  %v1211 = vunpack.c.h.b16 %v79
  %v1212 = vunpack.c.l.b16 %v80
  %v1213 = vunpack.c.h.b16 %v80
  %v1214 = vunpack.c.l.b16 %v81
  %v1215 = vunpack.c.h.b16 %v81
  %v1216 = vunpack.c.l.b16 %v82
  %v1217 = vunpack.c.h.b16 %v82
  %v1218 = vunpack.c.l.b16 %v83
  %v1219 = vunpack.c.h.b16 %v83
  %v1220 = vunpack.c.l.b16 %v84
  %v1221 = vunpack.c.h.b16 %v84
  %v1222 = vunpack.c.l.b16 %v85
  %v1223 = vunpack.c.h.b16 %v85
  %v1224 = vunpack.c.l.b16 %v86
  %v1225 = vunpack.c.h.b16 %v86
  %v1226 = vunpack.c.l.b16 %v87
  %v1227 = vunpack.c.h.b16 %v87
  %v1228 = vunpack.c.l.b16 %v88
  %v1229 = vunpack.c.h.b16 %v88
  %v1230 = vunpack.c.l.b16 %v89
  %v1231 = vunpack.c.h.b16 %v89
  %v1232 = vunpack.c.l.b16 %v90
  %v1233 = vunpack.c.h.b16 %v90
  %v1234 = vunpack.c.l.b16 %v91
  %v1235 = vunpack.c.h.b16 %v91
  %v1236 = vunpack.c.l.b16 %v92
  %v1237 = vunpack.c.h.b16 %v92
  %v1238 = vunpack.c.l.b16 %v93
  %v1239 = vunpack.c.h.b16 %v93
  %v1240 = vunpack.c.l.b16 %v94
  %v1241 = vunpack.c.h.b16 %v94
  %v1242 = vunpack.c.l.b16 %v95
  %v1243 = vunpack.c.h.b16 %v95
  %v1244 = vunpack.c.l.b16 %v96
  %v1245 = vunpack.c.h.b16 %v96
  %v1246 = vunpack.c.l.b16 %v97
  %v1247 = vunpack.c.h.b16 %v97
  %v1248 = vunpack.c.l.b16 %v98
  %v1249 = vunpack.c.h.b16 %v98
  %v1250 = vunpack.c.l.b16 %v99
  %v1251 = vunpack.c.h.b16 %v99
  %v1252 = vunpack.c.l.b16 %v100
  %v1253 = vunpack.c.h.b16 %v100
  %v1254 = vunpack.c.l.b16 %v101
  %v1255 = vunpack.c.h.b16 %v101
  %v1256 = vunpack.c.l.b16 %v102
  %v1257 = vunpack.c.h.b16 %v102
  %v1258 = vunpack.c.l.b16 %v103
  %v1259 = vunpack.c.h.b16 %v103
  %v1260 = vunpack.c.l.b16 %v104
  %v1261 = vunpack.c.h.b16 %v104
  %v1262 = vunpack.c.l.b16 %v105
  %v1263 = vunpack.c.h.b16 %v105
  %v1264 = vunpack.c.l.b16 %v106
  %v1265 = vunpack.c.h.b16 %v106
  %v1266 = vunpack.c.l.b16 %v107
  %v1267 = vunpack.c.h.b16 %v107
  %v1268 = vunpack.c.l.b16 %v108
  %v1269 = vunpack.c.h.b16 %v108
  %v1270 = vunpack.c.l.b16 %v109
  %v1271 = vunpack.c.h.b16 %v109
  %v1272 = vunpack.c.l.b16 %v110
  %v1273 = vunpack.c.h.b16 %v110
  %v1274 = vunpack.c.l.b16 %v111
  %v1275 = vunpack.c.h.b16 %v111
  %v1276 = vunpack.c.l.b16 %v112
  %v1277 = vunpack.c.h.b16 %v112
  %v1278 = vunpack.c.l.b16 %v113
  %v1279 = vunpack.c.h.b16 %v113
  %v1280 = vunpack.c.l.b16 %v114
  %v1281 = vunpack.c.h.b16 %v114
  %v1282 = vunpack.c.l.b16 %v115
  %v1283 = vunpack.c.h.b16 %v115
  %v1284 = vunpack.c.l.b16 %v116
  %v1285 = vunpack.c.h.b16 %v116
  %v1286 = vunpack.c.l.b16 %v117
  %v1287 = vunpack.c.h.b16 %v117
  %v1288 = vunpack.c.l.b16 %v118
  %v1289 = vunpack.c.h.b16 %v118
  %v1290 = vunpack.c.l.b16 %v119
  %v1291 = vunpack.c.h.b16 %v119
  %v1292 = vunpack.c.l.b16 %v120
  %v1293 = vunpack.c.h.b16 %v120
  %v1294 = vunpack.c.l.b16 %v121
  %v1295 = vunpack.c.h.b16 %v121
  %v1296 = vunpack.c.l.b16 %v122
  %v1297 = vunpack.c.h.b16 %v122
  %v1298 = vunpack.c.l.b16 %v123
  %v1299 = vunpack.c.h.b16 %v123
  %v1300 = vunpack.c.l.b16 %v124
  %v1301 = vunpack.c.h.b16 %v124
  %v1302 = vunpack.c.l.b16 %v125
  %v1303 = vunpack.c.h.b16 %v125
  %v1304 = vunpack.c.l.b16 %v126
  %v1305 = vunpack.c.h.b16 %v126
  %v1306 = vunpack.c.l.b16 %v127
  %v1307 = vunpack.c.h.b16 %v127
  %v1308 = vunpack.c.l.b16 %v128
  %v1309 = vunpack.c.h.b16 %v128
  %v1310 = vunpack.c.l.b16 %v129
  %v1311 = vunpack.c.h.b16 %v129
  %v1312 = vunpack.c.l.b16 %v130
  %v1313 = vunpack.c.h.b16 %v130
  %v1314 = vunpack.c.l.b16 %v131
  %v1315 = vunpack.c.h.b16 %v131
  %v1316 = vunpack.c.l.b16 %v132
  %v1317 = vunpack.c.h.b16 %v132
  %v1318 = vunpack.c.l.b16 %v133
  %v1319 = vunpack.c.h.b16 %v133
  %v1320 = vunpack.c.l.b16 %v134
  %v1321 = vunpack.c.h.b16 %v134
  %v1322 = vunpack.c.l.b16 %v135
  %v1323 = vunpack.c.h.b16 %v135
  %v1324 = vunpack.c.l.b16 %v136
  %v1325 = vunpack.c.h.b16 %v136
  %v1326 = vunpack.c.l.b16 %v137
  %v1327 = vunpack.c.h.b16 %v137
  %v1328 = vunpack.c.l.b16 %v138
  %v1329 = vunpack.c.h.b16 %v138
  %v1330 = vunpack.c.l.b16 %v139
  %v1331 = vunpack.c.h.b16 %v139
  %v1332 = vunpack.c.l.b16 %v140
  %v1333 = vunpack.c.h.b16 %v140
  %v1334 = vunpack.c.l.b16 %v141
  %v1335 = vunpack.c.h.b16 %v141
  %v1336 = vunpack.c.l.b16 %v142
  %v1337 = vunpack.c.h.b16 %v142
  %v1338 = vunpack.c.l.b16 %v143
  %v1339 = vunpack.c.h.b16 %v143
  %v1340 = vunpack.c.l.b16 %v144
  %v1341 = vunpack.c.h.b16 %v144
  %v1342 = vunpack.c.l.b16 %v145
  %v1343 = vunpack.c.h.b16 %v145
  %v1344 = vunpack.c.l.b16 %v146
  %v1345 = vunpack.c.h.b16 %v146
  %v1346 = vunpack.c.l.b16 %v147
  %v1347 = vunpack.c.h.b16 %v147
  %v1348 = vunpack.c.l.b16 %v148
  %v1349 = vunpack.c.h.b16 %v148
  %v1350 = vunpack.c.l.b16 %v149
  %v1351 = vunpack.c.h.b16 %v149
  %v1352 = vunpack.c.l.b16 %v150
  %v1353 = vunpack.c.h.b16 %v150
  %v1354 = vunpack.c.l.b16 %v151
  %v1355 = vunpack.c.h.b16 %v151
  %v1356 = vunpack.c.l.b16 %v152
  %v1357 = vunpack.c.h.b16 %v152
  %v1358 = vunpack.c.l.b16 %v153
  %v1359 = vunpack.c.h.b16 %v153
  %v1360 = vunpack.c.l.b16 %v154
  %v1361 = vunpack.c.h.b16 %v154
  %v1362 = vunpack.c.l.b16 %v155
  %v1363 = vunpack.c.h.b16 %v155
  %v1364 = vunpack.c.l.b16 %v156
  %v1365 = vunpack.c.h.b16 %v156
  %v1366 = vunpack.c.l.b16 %v157
  %v1367 = vunpack.c.h.b16 %v157
  %v1368 = vunpack.c.l.b16 %v158
  %v1369 = vunpack.c.h.b16 %v158
  %v1370 = vunpack.c.l.b16 %v159
  %v1371 = vunpack.c.h.b16 %v159
  %v1372 = vunpack.c.l.b16 %v160
  %v1373 = vunpack.c.h.b16 %v160
  %v1374 = vunpack.c.l.b16 %v161
  %v1375 = vunpack.c.h.b16 %v161
  %v1376 = vunpack.c.l.b16 %v162
  %v1377 = vunpack.c.h.b16 %v162
  %v1378 = vunpack.c.l.b16 %v163
  %v1379 = vunpack.c.h.b16 %v163
  %v1380 = vunpack.c.l.b16 %v164
  %v1381 = vunpack.c.h.b16 %v164
  %v1382 = vunpack.c.l.b16 %v165
  %v1383 = vunpack.c.h.b16 %v165
  %v1384 = vunpack.c.l.b16 %v166
  %v1385 = vunpack.c.h.b16 %v166
  %v1386 = vunpack.c.l.b16 %v167
  %v1387 = vunpack.c.h.b16 %v167
  %v1388 = vunpack.c.l.b16 %v168
  %v1389 = vunpack.c.h.b16 %v168
  %v1390 = vunpack.c.l.b16 %v169
  %v1391 = vunpack.c.h.b16 %v169
  %v1392 = vunpack.c.l.b16 %v170
  %v1393 = vunpack.c.h.b16 %v170
  %v1394 = vunpack.c.l.b16 %v171
  %v1395 = vunpack.c.h.b16 %v171
  %v1396 = vunpack.c.l.b16 %v172
  %v1397 = vunpack.c.h.b16 %v172
  %v1398 = vunpack.c.l.b16 %v173
  %v1399 = vunpack.c.h.b16 %v173
  %v1400 = vunpack.c.l.b16 %v174
  %v1401 = vunpack.c.h.b16 %v174
  %v1402 = vunpack.c.l.b16 %v175
  %v1403 = vunpack.c.h.b16 %v175
  %v1404 = vunpack.c.l.b16 %v176
  %v1405 = vunpack.c.h.b16 %v176
  %v1406 = vunpack.c.l.b16 %v177
  %v1407 = vunpack.c.h.b16 %v177
  %v1408 = vunpack.c.l.b16 %v178
  %v1409 = vunpack.c.h.b16 %v178
  %v1410 = vunpack.c.l.b16 %v179
  %v1411 = vunpack.c.h.b16 %v179
  %v1412 = vunpack.c.l.b16 %v180
  %v1413 = vunpack.c.h.b16 %v180
  %v1414 = vunpack.c.l.b16 %v181
  %v1415 = vunpack.c.h.b16 %v181
  %v1416 = vunpack.c.l.b16 %v182
  %v1417 = vunpack.c.h.b16 %v182
  %v1418 = vunpack.c.l.b16 %v183
  %v1419 = vunpack.c.h.b16 %v183
  %v1420 = vunpack.c.l.b16 %v184
  %v1421 = vunpack.c.h.b16 %v184
  %v1422 = vunpack.c.l.b16 %v185
  %v1423 = vunpack.c.h.b16 %v185
  %v1424 = vunpack.c.l.b16 %v186
  %v1425 = vunpack.c.h.b16 %v186
  %v1426 = vunpack.c.l.b16 %v187
  %v1427 = vunpack.c.h.b16 %v187
  %v1428 = vunpack.c.l.b16 %v188
  %v1429 = vunpack.c.h.b16 %v188
  %v1430 = vunpack.c.l.b16 %v189
  %v1431 = vunpack.c.h.b16 %v189
  %v1432 = vunpack.c.l.b16 %v190
  %v1433 = vunpack.c.h.b16 %v190
  %v1434 = vunpack.c.l.b16 %v191
  %v1435 = vunpack.c.h.b16 %v191
  %v1436 = vunpack.c.l.b16 %v192
  %v1437 = vunpack.c.h.b16 %v192
  %v1438 = vunpack.c.l.b16 %v193
  %v1439 = vunpack.c.h.b16 %v193
  %v1440 = vunpack.c.l.b16 %v194
  %v1441 = vunpack.c.h.b16 %v194
  %v1442 = vunpack.c.l.b16 %v195
  %v1443 = vunpack.c.h.b16 %v195
  %v1444 = vunpack.c.l.b16 %v196
  %v1445 = vunpack.c.h.b16 %v196
  %v1446 = vunpack.c.l.b16 %v197
  %v1447 = vunpack.c.h.b16 %v197
  %v1448 = vunpack.c.l.b16 %v198
  %v1449 = vunpack.c.h.b16 %v198
  %v1450 = vunpack.c.l.b16 %v199
  %v1451 = vunpack.c.h.b16 %v199
  %v1452 = vunpack.c.l.b16 %v200
  %v1453 = vunpack.c.h.b16 %v200
  %v1454 = vunpack.c.l.b16 %v201
  %v1455 = vunpack.c.h.b16 %v201
  %v1456 = vunpack.c.l.b16 %v202
  %v1457 = vunpack.c.h.b16 %v202
  %v1458 = vunpack.c.l.b16 %v203
  %v1459 = vunpack.c.h.b16 %v203
  %v1460 = vunpack.c.l.b16 %v204
  %v1461 = vunpack.c.h.b16 %v204
  %v1462 = vunpack.c.l.b16 %v205
  %v1463 = vunpack.c.h.b16 %v205
  %v1464 = vunpack.c.l.b16 %v206
  %v1465 = vunpack.c.h.b16 %v206
  %v1466 = vunpack.c.l.b16 %v207
  %v1467 = vunpack.c.h.b16 %v207
  %v1468 = vunpack.c.l.b16 %v208
  %v1469 = vunpack.c.h.b16 %v208
  %v1470 = vunpack.c.l.b16 %v209
  %v1471 = vunpack.c.h.b16 %v209
  %v1472 = vunpack.c.l.b16 %v210
  %v1473 = vunpack.c.h.b16 %v210
  %v1474 = vunpack.c.l.b16 %v211
  %v1475 = vunpack.c.h.b16 %v211
  %v1476 = vunpack.c.l.b16 %v212
  %v1477 = vunpack.c.h.b16 %v212
  %v1478 = vunpack.c.l.b16 %v213
  %v1479 = vunpack.c.h.b16 %v213
  %v1480 = vunpack.c.l.b16 %v214
  %v1481 = vunpack.c.h.b16 %v214
  %v1482 = vunpack.c.l.b16 %v215
  %v1483 = vunpack.c.h.b16 %v215
  %v1484 = vunpack.c.l.b16 %v216
  %v1485 = vunpack.c.h.b16 %v216
  %v1486 = vunpack.c.l.b16 %v217
  %v1487 = vunpack.c.h.b16 %v217
  %v1488 = vunpack.c.l.b16 %v218
  %v1489 = vunpack.c.h.b16 %v218
  %v1490 = vunpack.c.l.b16 %v219
  %v1491 = vunpack.c.h.b16 %v219
  %v1492 = vunpack.c.l.b16 %v220
  %v1493 = vunpack.c.h.b16 %v220
  %v1494 = vunpack.c.l.b16 %v221
  %v1495 = vunpack.c.h.b16 %v221
  %v1496 = vunpack.c.l.b16 %v222
  %v1497 = vunpack.c.h.b16 %v222
  %v1498 = vunpack.c.l.b16 %v223
  %v1499 = vunpack.c.h.b16 %v223
  %v1500 = vunpack.c.l.b16 %v224
  %v1501 = vunpack.c.h.b16 %v224
  %v1502 = vunpack.c.l.b16 %v225
  %v1503 = vunpack.c.h.b16 %v225
  %v1504 = vunpack.c.l.b16 %v226
  %v1505 = vunpack.c.h.b16 %v226
  %v1506 = vunpack.c.l.b16 %v227
  %v1507 = vunpack.c.h.b16 %v227
  %v1508 = vunpack.c.l.b16 %v228
  %v1509 = vunpack.c.h.b16 %v228
  %v1510 = vunpack.c.l.b16 %v229
  %v1511 = vunpack.c.h.b16 %v229
  %v1512 = vunpack.c.l.b16 %v230
  %v1513 = vunpack.c.h.b16 %v230
  %v1514 = vunpack.c.l.b16 %v231
  %v1515 = vunpack.c.h.b16 %v231
  %v1516 = vunpack.c.l.b16 %v232
  %v1517 = vunpack.c.h.b16 %v232
  %v1518 = vunpack.c.l.b16 %v233
  %v1519 = vunpack.c.h.b16 %v233
  %v1520 = vunpack.c.l.b16 %v234
  %v1521 = vunpack.c.h.b16 %v234
  %v1522 = vunpack.c.l.b16 %v235
  %v1523 = vunpack.c.h.b16 %v235
  %v1524 = vunpack.c.l.b16 %v236
  %v1525 = vunpack.c.h.b16 %v236
  %v1526 = vunpack.c.l.b16 %v237
  %v1527 = vunpack.c.h.b16 %v237
  %v1528 = vunpack.c.l.b16 %v238
  %v1529 = vunpack.c.h.b16 %v238
  %v1530 = vunpack.c.l.b16 %v239
  %v1531 = vunpack.c.h.b16 %v239
  %v1532 = vunpack.c.l.b16 %v240
  %v1533 = vunpack.c.h.b16 %v240
  %v1534 = vunpack.c.l.b16 %v241
  %v1535 = vunpack.c.h.b16 %v241
  %v1536 = vunpack.c.l.b16 %v242
  %v1537 = vunpack.c.h.b16 %v242
  %v1538 = vunpack.c.l.b16 %v243
  %v1539 = vunpack.c.h.b16 %v243
  %v1540 = vunpack.c.l.b16 %v244
  %v1541 = vunpack.c.h.b16 %v244
  %v1542 = vunpack.c.l.b16 %v245
  %v1543 = vunpack.c.h.b16 %v245
  %v1544 = vunpack.c.l.b16 %v246
  %v1545 = vunpack.c.h.b16 %v246
  %v1546 = vunpack.c.l.b16 %v247
  %v1547 = vunpack.c.h.b16 %v247
  %v1548 = vunpack.c.l.b16 %v248
  %v1549 = vunpack.c.h.b16 %v248
  %v1550 = vunpack.c.l.b16 %v249
  %v1551 = vunpack.c.h.b16 %v249
  %v1552 = vunpack.c.l.b16 %v250
  %v1553 = vunpack.c.h.b16 %v250
  %v1554 = vunpack.c.l.b16 %v251
  %v1555 = vunpack.c.h.b16 %v251
  %v1556 = vunpack.c.l.b16 %v252
  %v1557 = vunpack.c.h.b16 %v252
  %v1558 = vunpack.c.l.b16 %v253
  %v1559 = vunpack.c.h.b16 %v253
  %v1560 = vunpack.c.l.b16 %v254
  %v1561 = vunpack.c.h.b16 %v254
  %v1562 = vunpack.c.l.b16 %v255
  %v1563 = vunpack.c.h.b16 %v255
  %v1564 = vunpack.c.l.b16 %v256
  %v1565 = vunpack.c.h.b16 %v256
  %v1566 = vunpack.c.l.b16 %v257
  %v1567 = vunpack.c.h.b16 %v257
  %v1568 = vunpack.c.l.b16 %v258
  %v1569 = vunpack.c.h.b16 %v258
  %v1570 = vunpack.c.l.b16 %v259
  %v1571 = vunpack.c.h.b16 %v259
  %v1572 = vunpack.c.l.b16 %v260
  %v1573 = vunpack.c.h.b16 %v260
  %v1574 = vunpack.c.l.b16 %v261
  %v1575 = vunpack.c.h.b16 %v261
  %v1576 = vunpack.c.l.b16 %v262
  %v1577 = vunpack.c.h.b16 %v262
  %v1578 = vunpack.c.l.b16 %v263
  %v1579 = vunpack.c.h.b16 %v263
  %v1580 = vunpack.c.l.b16 %v264
  %v1581 = vunpack.c.h.b16 %v264
  %v1582 = vunpack.c.l.b16 %v265
  %v1583 = vunpack.c.h.b16 %v265
  %v1584 = vunpack.c.l.b16 %v266
  %v1585 = vunpack.c.h.b16 %v266
  %v1586 = vunpack.c.l.b16 %v267
  %v1587 = vunpack.c.h.b16 %v267
  %v1588 = vunpack.c.l.b16 %v268
  %v1589 = vunpack.c.h.b16 %v268
  %v1590 = vunpack.c.l.b16 %v269
  %v1591 = vunpack.c.h.b16 %v269
  %v1592 = vunpack.c.l.b16 %v270
  %v1593 = vunpack.c.h.b16 %v270
  %v1594 = vunpack.c.l.b16 %v271
  %v1595 = vunpack.c.h.b16 %v271
  %v1596 = vunpack.c.l.b16 %v272
  %v1597 = vunpack.c.h.b16 %v272
  %v1598 = vunpack.c.l.b16 %v273
  %v1599 = vunpack.c.h.b16 %v273
  %v1600 = vunpack.c.l.b16 %v274
  %v1601 = vunpack.c.h.b16 %v274
  %v1602 = vunpack.c.l.b16 %v275
  %v1603 = vunpack.c.h.b16 %v275
  %v1604 = vunpack.c.l.b16 %v276
  %v1605 = vunpack.c.h.b16 %v276
  %v1606 = vunpack.c.l.b16 %v277
  %v1607 = vunpack.c.h.b16 %v277
  %v1608 = vunpack.c.l.b16 %v278
  %v1609 = vunpack.c.h.b16 %v278
  %v1610 = vunpack.c.l.b16 %v279
  %v1611 = vunpack.c.h.b16 %v279
  %v1612 = vunpack.c.l.b16 %v280
  %v1613 = vunpack.c.h.b16 %v280
  %v1614 = vunpack.c.l.b16 %v281
  %v1615 = vunpack.c.h.b16 %v281
  %v1616 = vunpack.c.l.b16 %v282
  %v1617 = vunpack.c.h.b16 %v282
  %v1618 = vunpack.c.l.b16 %v283
  %v1619 = vunpack.c.h.b16 %v283
  %v1620 = vunpack.c.l.b16 %v284
  %v1621 = vunpack.c.h.b16 %v284
  %v1622 = vunpack.c.l.b16 %v285
  %v1623 = vunpack.c.h.b16 %v285
  %v1624 = vunpack.c.l.b16 %v286
  %v1625 = vunpack.c.h.b16 %v286
  %v1626 = vunpack.c.l.b16 %v287
  %v1627 = vunpack.c.h.b16 %v287
  %v1628 = vunpack.c.l.b16 %v288
  %v1629 = vunpack.c.h.b16 %v288
  %v1630 = vunpack.c.l.b16 %v289
  %v1631 = vunpack.c.h.b16 %v289
  %v1632 = vunpack.c.l.b16 %v290
  %v1633 = vunpack.c.h.b16 %v290
  %v1634 = vunpack.c.l.b16 %v291
  %v1635 = vunpack.c.h.b16 %v291
  %v1636 = vunpack.c.l.b16 %v292
  %v1637 = vunpack.c.h.b16 %v292
  %v1638 = vunpack.c.l.b16 %v293
  %v1639 = vunpack.c.h.b16 %v293
  %v1640 = vunpack.c.l.b16 %v294
  %v1641 = vunpack.c.h.b16 %v294
  %v1642 = vunpack.c.l.b16 %v295
  %v1643 = vunpack.c.h.b16 %v295
  %v1644 = vunpack.c.l.b16 %v296
  %v1645 = vunpack.c.h.b16 %v296
  %v1646 = vunpack.c.l.b16 %v297
  %v1647 = vunpack.c.h.b16 %v297
  %v1648 = vunpack.c.l.b16 %v298
  %v1649 = vunpack.c.h.b16 %v298
  %v1650 = vunpack.c.l.b16 %v299
  %v1651 = vunpack.c.h.b16 %v299
  %v1652 = vunpack.c.l.b16 %v300
  %v1653 = vunpack.c.h.b16 %v300
  %v1654 = vunpack.c.l.b16 %v301
  %v1655 = vunpack.c.h.b16 %v301
  %v1656 = vunpack.c.l.b16 %v302
  %v1657 = vunpack.c.h.b16 %v302
  %v1658 = vunpack.c.l.b16 %v303
  %v1659 = vunpack.c.h.b16 %v303
  %v1660 = vunpack.c.l.b16 %v304
  %v1661 = vunpack.c.h.b16 %v304
  %v1662 = vunpack.c.l.b16 %v305
  %v1663 = vunpack.c.h.b16 %v305
  %v1664 = vunpack.c.l.b16 %v306
  %v1665 = vunpack.c.h.b16 %v306
  %v1666 = vunpack.c.l.b16 %v307
  %v1667 = vunpack.c.h.b16 %v307
  %v1668 = vunpack.c.l.b16 %v308
  %v1669 = vunpack.c.h.b16 %v308
  %v1670 = vunpack.c.l.b16 %v309
  %v1671 = vunpack.c.h.b16 %v309
  %v1672 = vunpack.c.l.b16 %v310
  %v1673 = vunpack.c.h.b16 %v310
  %v1674 = vunpack.c.l.b16 %v311
  %v1675 = vunpack.c.h.b16 %v311
  %v1676 = vunpack.c.l.b16 %v312
  %v1677 = vunpack.c.h.b16 %v312
  %v1678 = vunpack.c.l.b16 %v313
  %v1679 = vunpack.c.h.b16 %v313
  %v1680 = vunpack.c.l.b16 %v314
  %v1681 = vunpack.c.h.b16 %v314
  %v1682 = vunpack.c.l.b16 %v315
  %v1683 = vunpack.c.h.b16 %v315
  %v1684 = vunpack.c.l.b16 %v316
  %v1685 = vunpack.c.h.b16 %v316
  %v1686 = vunpack.c.l.b16 %v317
  %v1687 = vunpack.c.h.b16 %v317
  %v1688 = vunpack.c.l.b16 %v318
  %v1689 = vunpack.c.h.b16 %v318
  %v1690 = vunpack.c.l.b16 %v319
  %v1691 = vunpack.c.h.b16 %v319
  %v1692 = vunpack.c.l.b16 %v320
  %v1693 = vunpack.c.h.b16 %v320
  %v1694 = vunpack.c.l.b16 %v321
  %v1695 = vunpack.c.h.b16 %v321
  %v1696 = vunpack.c.l.b16 %v322
  %v1697 = vunpack.c.h.b16 %v322
  %v1698 = vunpack.c.l.b16 %v323
  %v1699 = vunpack.c.h.b16 %v323
  %v1700 = vunpack.c.l.b16 %v324
  %v1701 = vunpack.c.h.b16 %v324
  %v1702 = vunpack.c.l.b16 %v325
  %v1703 = vunpack.c.h.b16 %v325
  %v1704 = vunpack.c.l.b16 %v326
  %v1705 = vunpack.c.h.b16 %v326
  %v1706 = vunpack.c.l.b16 %v327
  %v1707 = vunpack.c.h.b16 %v327
  %v1708 = vunpack.c.l.b16 %v328
  %v1709 = vunpack.c.h.b16 %v328
  %v1710 = vunpack.c.l.b16 %v329
  %v1711 = vunpack.c.h.b16 %v329
  %v1712 = vunpack.c.l.b16 %v330
  %v1713 = vunpack.c.h.b16 %v330
  %v1714 = vunpack.c.l.b16 %v331
  %v1715 = vunpack.c.h.b16 %v331
  %v1716 = vunpack.c.l.b16 %v332
  %v1717 = vunpack.c.h.b16 %v332
  %v1718 = vunpack.c.l.b16 %v333
  %v1719 = vunpack.c.h.b16 %v333
  %v1720 = vunpack.c.l.b16 %v334
  %v1721 = vunpack.c.h.b16 %v334
  %v1722 = vunpack.c.l.b16 %v335
  %v1723 = vunpack.c.h.b16 %v335
  %v1724 = vunpack.c.l.b16 %v336
  %v1725 = vunpack.c.h.b16 %v336
  %v1726 = vunpack.c.l.b16 %v337
  %v1727 = vunpack.c.h.b16 %v337
  %v1728 = vunpack.c.l.b16 %v338
  %v1729 = vunpack.c.h.b16 %v338
  %v1730 = vunpack.c.l.b16 %v339
  %v1731 = vunpack.c.h.b16 %v339
  %v1732 = vunpack.c.l.b16 %v340
  %v1733 = vunpack.c.h.b16 %v340
  %v1734 = vunpack.c.l.b16 %v341
  %v1735 = vunpack.c.h.b16 %v341
  %v1736 = vunpack.c.l.b16 %v342
  %v1737 = vunpack.c.h.b16 %v342
  %v1738 = vunpack.c.l.b16 %v343
  %v1739 = vunpack.c.h.b16 %v343
  %v1740 = vunpack.c.l.b16 %v344
  %v1741 = vunpack.c.h.b16 %v344
  %v1742 = vunpack.c.l.b16 %v345
  %v1743 = vunpack.c.h.b16 %v345
  %v1744 = vunpack.c.l.b16 %v346
  %v1745 = vunpack.c.h.b16 %v346
  %v1746 = vunpack.c.l.b16 %v347
  %v1747 = vunpack.c.h.b16 %v347
  %v1748 = vunpack.c.l.b16 %v348
  %v1749 = vunpack.c.h.b16 %v348
  %v1750 = vunpack.c.l.b16 %v349
  %v1751 = vunpack.c.h.b16 %v349
  %v1752 = vunpack.c.l.b16 %v350
  %v1753 = vunpack.c.h.b16 %v350
  %v1754 = vunpack.c.l.b16 %v351
  %v1755 = vunpack.c.h.b16 %v351
  %v1756 = vunpack.c.l.b16 %v352
  %v1757 = vunpack.c.h.b16 %v352
  %v1758 = vunpack.c.l.b16 %v353
  %v1759 = vunpack.c.h.b16 %v353
  %v1760 = vunpack.c.l.b16 %v354
  %v1761 = vunpack.c.h.b16 %v354
  %v1762 = vunpack.c.l.b16 %v355
  %v1763 = vunpack.c.h.b16 %v355
  %v1764 = vunpack.c.l.b16 %v356
  %v1765 = vunpack.c.h.b16 %v356
  %v1766 = vunpack.c.l.b16 %v357
  %v1767 = vunpack.c.h.b16 %v357
  %v1768 = vunpack.c.l.b16 %v358
  %v1769 = vunpack.c.h.b16 %v358
  %v1770 = vunpack.c.l.b16 %v359
  %v1771 = vunpack.c.h.b16 %v359
  %v1772 = vunpack.c.l.b16 %v360
  %v1773 = vunpack.c.h.b16 %v360
  %v1774 = vunpack.c.l.b16 %v361
  %v1775 = vunpack.c.h.b16 %v361
  %v1776 = vunpack.c.l.b16 %v362
  %v1777 = vunpack.c.h.b16 %v362
  %v1778 = vunpack.c.l.b16 %v363
  %v1779 = vunpack.c.h.b16 %v363
  %v1780 = vunpack.c.l.b16 %v364
  %v1781 = vunpack.c.h.b16 %v364
  %v1782 = vunpack.c.l.b16 %v365
  %v1783 = vunpack.c.h.b16 %v365
  %v1784 = vunpack.c.l.b16 %v366
  %v1785 = vunpack.c.h.b16 %v366
  %v1786 = vunpack.c.l.b16 %v367
  %v1787 = vunpack.c.h.b16 %v367
  %v1788 = vunpack.c.l.b16 %v368
  %v1789 = vunpack.c.h.b16 %v368
  %v1790 = vunpack.c.l.b16 %v369
  %v1791 = vunpack.c.h.b16 %v369
  %v1792 = vunpack.c.l.b16 %v370
  %v1793 = vunpack.c.h.b16 %v370
  %v1794 = vunpack.c.l.b16 %v371
  %v1795 = vunpack.c.h.b16 %v371
  %v1796 = vunpack.c.l.b16 %v372
  %v1797 = vunpack.c.h.b16 %v372
  %v1798 = vunpack.c.l.b16 %v373
  %v1799 = vunpack.c.h.b16 %v373
  %v1800 = vunpack.c.l.b16 %v374
  %v1801 = vunpack.c.h.b16 %v374
  %v1802 = vunpack.c.l.b16 %v375
  %v1803 = vunpack.c.h.b16 %v375
  %v1804 = vunpack.c.l.b16 %v376
  %v1805 = vunpack.c.h.b16 %v376
  %v1806 = vunpack.c.l.b16 %v377
  %v1807 = vunpack.c.h.b16 %v377
  %v1808 = vunpack.c.l.b16 %v378
  %v1809 = vunpack.c.h.b16 %v378
  %v1810 = vunpack.c.l.b16 %v379
  %v1811 = vunpack.c.h.b16 %v379
  %v1812 = vunpack.c.l.b16 %v380
  %v1813 = vunpack.c.h.b16 %v380
  %v1814 = vunpack.c.l.b16 %v381
  %v1815 = vunpack.c.h.b16 %v381
  %v1816 = vunpack.c.l.b16 %v382
  %v1817 = vunpack.c.h.b16 %v382
  %v1818 = vunpack.c.l.b16 %v383
  %v1819 = vunpack.c.h.b16 %v383
  %v1820 = vunpack.c.l.b16 %v384
  %v1821 = vunpack.c.h.b16 %v384
  %v1822 = vunpack.c.l.b16 %v385
  %v1823 = vunpack.c.h.b16 %v385
  %v1824 = vunpack.c.l.b16 %v386
  %v1825 = vunpack.c.h.b16 %v386
  %v1826 = vunpack.c.l.b16 %v387
  %v1827 = vunpack.c.h.b16 %v387
  %v1828 = vunpack.c.l.b16 %v388
  %v1829 = vunpack.c.h.b16 %v388
  %v1830 = vunpack.c.l.b16 %v389
  %v1831 = vunpack.c.h.b16 %v389
  %v1832 = vunpack.c.l.b16 %v390
  %v1833 = vunpack.c.h.b16 %v390
  %v1834 = vunpack.c.l.b16 %v391
  %v1835 = vunpack.c.h.b16 %v391
  %v1836 = vunpack.c.l.b16 %v392
  %v1837 = vunpack.c.h.b16 %v392
  %v1838 = vunpack.c.l.b16 %v393
  %v1839 = vunpack.c.h.b16 %v393
  %v1840 = vunpack.c.l.b16 %v394
  %v1841 = vunpack.c.h.b16 %v394
  %v1842 = vunpack.c.l.b16 %v395
  %v1843 = vunpack.c.h.b16 %v395
  %v1844 = vunpack.c.l.b16 %v396
  %v1845 = vunpack.c.h.b16 %v396
  %v1846 = vunpack.c.l.b16 %v397
  %v1847 = vunpack.c.h.b16 %v397
  %v1848 = vunpack.c.l.b16 %v398
  %v1849 = vunpack.c.h.b16 %v398
  %v1850 = vunpack.c.l.b16 %v399
  %v1851 = vunpack.c.h.b16 %v399
  %v1852 = vunpack.c.l.b16 %v400
  %v1853 = vunpack.c.h.b16 %v400
  %v1854 = vunpack.c.l.b16 %v401
  %v1855 = vunpack.c.h.b16 %v401
  %v1856 = vunpack.c.l.b16 %v402
  %v1857 = vunpack.c.h.b16 %v402
  %v1858 = vunpack.c.l.b16 %v403
  %v1859 = vunpack.c.h.b16 %v403
  %v1860 = vunpack.c.l.b16 %v404
  %v1861 = vunpack.c.h.b16 %v404
  %v1862 = vunpack.c.l.b16 %v405
  %v1863 = vunpack.c.h.b16 %v405
  %v1864 = vunpack.c.l.b16 %v406
  %v1865 = vunpack.c.h.b16 %v406
  %v1866 = vunpack.c.l.b16 %v407
  %v1867 = vunpack.c.h.b16 %v407
  %v1868 = vunpack.c.l.b16 %v408
  %v1869 = vunpack.c.h.b16 %v408
  %v1870 = vunpack.c.l.b16 %v409
  %v1871 = vunpack.c.h.b16 %v409
  %v1872 = vunpack.c.l.b16 %v410
  %v1873 = vunpack.c.h.b16 %v410
  %v1874 = vunpack.c.l.b16 %v411
  %v1875 = vunpack.c.h.b16 %v411
  %v1876 = vunpack.c.l.b16 %v412
  %v1877 = vunpack.c.h.b16 %v412
  %v1878 = vunpack.c.l.b16 %v413
  %v1879 = vunpack.c.h.b16 %v413
  %v1880 = vunpack.c.l.b16 %v414
  %v1881 = vunpack.c.h.b16 %v414
  %v1882 = vunpack.c.l.b16 %v415
  %v1883 = vunpack.c.h.b16 %v415
  %v1884 = vunpack.c.l.b16 %v416
  %v1885 = vunpack.c.h.b16 %v416
  %v1886 = vunpack.c.l.b16 %v417
  %v1887 = vunpack.c.h.b16 %v417
  %v1888 = vunpack.c.l.b16 %v418
  %v1889 = vunpack.c.h.b16 %v418
  %v1890 = vunpack.c.l.b16 %v419
  %v1891 = vunpack.c.h.b16 %v419
  %v1892 = vunpack.c.l.b16 %v420
  %v1893 = vunpack.c.h.b16 %v420
  %v1894 = vunpack.c.l.b16 %v421
  %v1895 = vunpack.c.h.b16 %v421
  %v1896 = vunpack.c.l.b16 %v422
  %v1897 = vunpack.c.h.b16 %v422
  %v1898 = vunpack.c.l.b16 %v423
  %v1899 = vunpack.c.h.b16 %v423
  %v1900 = vunpack.c.l.b16 %v424
  %v1901 = vunpack.c.h.b16 %v424
  %v1902 = vunpack.c.l.b16 %v425
  %v1903 = vunpack.c.h.b16 %v425
  %v1904 = vunpack.c.l.b16 %v426
  %v1905 = vunpack.c.h.b16 %v426
  %v1906 = vunpack.c.l.b16 %v427
  %v1907 = vunpack.c.h.b16 %v427
  %v1908 = vunpack.c.l.b16 %v428
  %v1909 = vunpack.c.h.b16 %v428
  %v1910 = vunpack.c.l.b16 %v429
  %v1911 = vunpack.c.h.b16 %v429
  %v1912 = vunpack.c.l.b16 %v430
  %v1913 = vunpack.c.h.b16 %v430
  %v1914 = vunpack.c.l.b16 %v431
  %v1915 = vunpack.c.h.b16 %v431
  %v1916 = vunpack.c.l.b16 %v432
  %v1917 = vunpack.c.h.b16 %v432
  %v1918 = vunpack.c.l.b16 %v433
  %v1919 = vunpack.c.h.b16 %v433
  %v1920 = vunpack.c.l.b16 %v434
  %v1921 = vunpack.c.h.b16 %v434
  %v1922 = vunpack.c.l.b16 %v435
  %v1923 = vunpack.c.h.b16 %v435
  %v1924 = vunpack.c.l.b16 %v436
  %v1925 = vunpack.c.h.b16 %v436
  %v1926 = vunpack.c.l.b16 %v437
  %v1927 = vunpack.c.h.b16 %v437
  %v1928 = vunpack.c.l.b16 %v438
  %v1929 = vunpack.c.h.b16 %v438
  %v1930 = vunpack.c.l.b16 %v439
  %v1931 = vunpack.c.h.b16 %v439
  %v1932 = vunpack.c.l.b16 %v440
  %v1933 = vunpack.c.h.b16 %v440
  %v1934 = vunpack.c.l.b16 %v441
  %v1935 = vunpack.c.h.b16 %v441
  %v1936 = vunpack.c.l.b16 %v442
  %v1937 = vunpack.c.h.b16 %v442
  %v1938 = vunpack.c.l.b16 %v443
  %v1939 = vunpack.c.h.b16 %v443
  %v1940 = vunpack.c.l.b16 %v444
  %v1941 = vunpack.c.h.b16 %v444
  %v1942 = vunpack.c.l.b16 %v445
  %v1943 = vunpack.c.h.b16 %v445
  %v1944 = vunpack.c.l.b16 %v446
  %v1945 = vunpack.c.h.b16 %v446
  %v1946 = vunpack.c.l.b16 %v447
  %v1947 = vunpack.c.h.b16 %v447
  %v1948 = vunpack.c.l.b16 %v448
  %v1949 = vunpack.c.h.b16 %v448
  %v1950 = vunpack.c.l.b16 %v449
  %v1951 = vunpack.c.h.b16 %v449
  %v1952 = vunpack.c.l.b16 %v450
  %v1953 = vunpack.c.h.b16 %v450
  %v1954 = vunpack.c.l.b16 %v451
  %v1955 = vunpack.c.h.b16 %v451
  %v1956 = vunpack.c.l.b16 %v452
  %v1957 = vunpack.c.h.b16 %v452
  %v1958 = vunpack.c.l.b16 %v453
  %v1959 = vunpack.c.h.b16 %v453
  %v1960 = vunpack.c.l.b16 %v454
  %v1961 = vunpack.c.h.b16 %v454
  %v1962 = vunpack.c.l.b16 %v455
  %v1963 = vunpack.c.h.b16 %v455
  %v1964 = vunpack.c.l.b16 %v456
  %v1965 = vunpack.c.h.b16 %v456
  %v1966 = vunpack.c.l.b16 %v457
  %v1967 = vunpack.c.h.b16 %v457
  %v1968 = vunpack.c.l.b16 %v458
  %v1969 = vunpack.c.h.b16 %v458
  %v1970 = vunpack.c.l.b16 %v459
  %v1971 = vunpack.c.h.b16 %v459
  %v1972 = vunpack.c.l.b16 %v460
  %v1973 = vunpack.c.h.b16 %v460
  %v1974 = vunpack.c.l.b16 %v461
  %v1975 = vunpack.c.h.b16 %v461
  %v1976 = vunpack.c.l.b16 %v462
  %v1977 = vunpack.c.h.b16 %v462
  %v1978 = vunpack.c.l.b16 %v463
  %v1979 = vunpack.c.h.b16 %v463
  %v1980 = vunpack.c.l.b16 %v464
  %v1981 = vunpack.c.h.b16 %v464
  %v1982 = vunpack.c.l.b16 %v465
  %v1983 = vunpack.c.h.b16 %v465
  %v1984 = vunpack.c.l.b16 %v466
  %v1985 = vunpack.c.h.b16 %v466
  %v1986 = vunpack.c.l.b16 %v467
  %v1987 = vunpack.c.h.b16 %v467
  %v1988 = vunpack.c.l.b16 %v468
  %v1989 = vunpack.c.h.b16 %v468
  %v1990 = vunpack.c.l.b16 %v469
  %v1991 = vunpack.c.h.b16 %v469
  %v1992 = vunpack.c.l.b16 %v470
  %v1993 = vunpack.c.h.b16 %v470
  %v1994 = vunpack.c.l.b16 %v471
  %v1995 = vunpack.c.h.b16 %v471
  %v1996 = vunpack.c.l.b16 %v472
  %v1997 = vunpack.c.h.b16 %v472
  %v1998 = vunpack.c.l.b16 %v473
  %v1999 = vunpack.c.h.b16 %v473
  %v2000 = vunpack.c.l.b16 %v474
  %v2001 = vunpack.c.h.b16 %v474
  %v2002 = vunpack.c.l.b16 %v475
  %v2003 = vunpack.c.h.b16 %v475
  %v2004 = vunpack.c.l.b16 %v476
  %v2005 = vunpack.c.h.b16 %v476
  %v2006 = vunpack.c.l.b16 %v477
  %v2007 = vunpack.c.h.b16 %v477
  %v2008 = vunpack.c.l.b16 %v478
  %v2009 = vunpack.c.h.b16 %v478
  %v2010 = vunpack.c.l.b16 %v479
  %v2011 = vunpack.c.h.b16 %v479
  %v2012 = vunpack.c.l.b16 %v480
  %v2013 = vunpack.c.h.b16 %v480
  %v2014 = vunpack.c.l.b16 %v481
  %v2015 = vunpack.c.h.b16 %v481
  %v2016 = vunpack.c.l.b16 %v482
  %v2017 = vunpack.c.h.b16 %v482
  %v2018 = vunpack.c.l.b16 %v483
  %v2019 = vunpack.c.h.b16 %v483
  %v2020 = vunpack.c.l.b16 %v484
  %v2021 = vunpack.c.h.b16 %v484
  %v2022 = vunpack.c.l.b16 %v485
  %v2023 = vunpack.c.h.b16 %v485
  %v2024 = vunpack.c.l.b16 %v486
  %v2025 = vunpack.c.h.b16 %v486
  %v2026 = vunpack.c.l.b16 %v487
  %v2027 = vunpack.c.h.b16 %v487
  %v2028 = vunpack.c.l.b16 %v488
  %v2029 = vunpack.c.h.b16 %v488
  %v2030 = vunpack.c.l.b16 %v489
  %v2031 = vunpack.c.h.b16 %v489
  %v2032 = vunpack.c.l.b16 %v490
  %v2033 = vunpack.c.h.b16 %v490
  %v2034 = vunpack.c.l.b16 %v491
  %v2035 = vunpack.c.h.b16 %v491
  %v2036 = vunpack.c.l.b16 %v492
  %v2037 = vunpack.c.h.b16 %v492
  %v2038 = vunpack.c.l.b16 %v493
  %v2039 = vunpack.c.h.b16 %v493
  %v2040 = vunpack.c.l.b16 %v494
  %v2041 = vunpack.c.h.b16 %v494
  %v2042 = vunpack.c.l.b16 %v495
  %v2043 = vunpack.c.h.b16 %v495
  %v2044 = vunpack.c.l.b16 %v496
  %v2045 = vunpack.c.h.b16 %v496
  %v2046 = vunpack.c.l.b16 %v497
  %v2047 = vunpack.c.h.b16 %v497
  %v2048 = vunpack.c.l.b16 %v498
  %v2049 = vunpack.c.h.b16 %v498
  %v2050 = vunpack.c.l.b16 %v499
  %v2051 = vunpack.c.h.b16 %v499
  %v2052 = vunpack.c.l.b16 %v500
  %v2053 = vunpack.c.h.b16 %v500
  %v2054 = vunpack.c.l.b16 %v501
  %v2055 = vunpack.c.h.b16 %v501
  %v2056 = vunpack.c.l.b16 %v502
  %v2057 = vunpack.c.h.b16 %v502
  %v2058 = vunpack.c.l.b16 %v503
  %v2059 = vunpack.c.h.b16 %v503
  %v2060 = vunpack.c.l.b16 %v504
  %v2061 = vunpack.c.h.b16 %v504
  %v2062 = vunpack.c.l.b16 %v505
  %v2063 = vunpack.c.h.b16 %v505
  %v2064 = vunpack.c.l.b16 %v506
  %v2065 = vunpack.c.h.b16 %v506
  %v2066 = vunpack.c.l.b16 %v507
  %v2067 = vunpack.c.h.b16 %v507
  %v2068 = vunpack.c.l.b16 %v508
  %v2069 = vunpack.c.h.b16 %v508
  %v2070 = vunpack.c.l.b16 %v509
  %v2071 = vunpack.c.h.b16 %v509
  %v2072 = vunpack.c.l.b16 %v510
  %v2073 = vunpack.c.h.b16 %v510
  %v2074 = vunpack.c.l.b16 %v511
  %v2075 = vunpack.c.h.b16 %v511
  %v2076 = vunpack.c.l.b16 %v512
  %v2077 = vunpack.c.h.b16 %v512
  %v2078 = vunpack.c.l.b16 %v513
  %v2079 = vunpack.c.h.b16 %v513
  %v2080 = vunpack.c.l.b16 %v514
  %v2081 = vunpack.c.h.b16 %v514
  %v2082 = vunpack.c.l.b16 %v515
  %v2083 = vunpack.c.h.b16 %v515
  %v2084 = vunpack.c.l.b16 %v516
  %v2085 = vunpack.c.h.b16 %v516
  %v2086 = vunpack.c.l.b16 %v517
  %v2087 = vunpack.c.h.b16 %v517
  %v2088 = vunpack.c.l.b16 %v518
  %v2089 = vunpack.c.h.b16 %v518
  %v2090 = vunpack.c.l.b16 %v519
  %v2091 = vunpack.c.h.b16 %v519
  %v2092 = vunpack.c.l.b16 %v520
  %v2093 = vunpack.c.h.b16 %v520
  %v2094 = vunpack.c.l.b16 %v521
  %v2095 = vunpack.c.h.b16 %v521
  %v2096 = vunpack.c.l.b16 %v522
  %v2097 = vunpack.c.h.b16 %v522
  %v2098 = vunpack.c.l.b16 %v523
  %v2099 = vunpack.c.h.b16 %v523
  %v2100 = vunpack.c.l.b16 %v524
  %v2101 = vunpack.c.h.b16 %v524
  %v2102 = vunpack.c.l.b16 %v525
  %v2103 = vunpack.c.h.b16 %v525
  %v2104 = vunpack.c.l.b16 %v526
  %v2105 = vunpack.c.h.b16 %v526
  %v2106 = vunpack.c.l.b16 %v527
  %v2107 = vunpack.c.h.b16 %v527
  %v2108 = vunpack.c.l.b16 %v528
  %v2109 = vunpack.c.h.b16 %v528
  %v2110 = vunpack.c.l.b16 %v529
  %v2111 = vunpack.c.h.b16 %v529
  %v2112 = vunpack.c.l.b16 %v530
  %v2113 = vunpack.c.h.b16 %v530
  %v2114 = vunpack.c.l.b16 %v531
  %v2115 = vunpack.c.h.b16 %v531
  %v2116 = vunpack.c.l.b16 %v532
  %v2117 = vunpack.c.h.b16 %v532
  %v2118 = vunpack.c.l.b16 %v533
  %v2119 = vunpack.c.h.b16 %v533
  %v2120 = vunpack.c.l.b16 %v534
  %v2121 = vunpack.c.h.b16 %v534
  %v2122 = vunpack.c.l.b16 %v535
  %v2123 = vunpack.c.h.b16 %v535
  %v2124 = vunpack.c.l.b16 %v536
  %v2125 = vunpack.c.h.b16 %v536
  %v2126 = vpack.c.b16 %v1130, %v1126
  %v2127 = vpack.c.b16 %v1131, %v1127
  %v2128 = vpack.c.b16 %v1132, %v1128
  %v2129 = vpack.c.b16 %v1133, %v1129
  %v2130 = vpack.c.b16 %v1138, %v1134
  %v2131 = vpack.c.b16 %v1139, %v1135
  %v2132 = vpack.c.b16 %v1140, %v1136
  %v2133 = vpack.c.b16 %v1141, %v1137
  %v2134 = vpack.c.b16 %v1146, %v1142
  %v2135 = vpack.c.b16 %v1147, %v1143
  %v2136 = vpack.c.b16 %v1148, %v1144
  %v2137 = vpack.c.b16 %v1149, %v1145
  %v2138 = vpack.c.b16 %v1154, %v1150
  %v2139 = vpack.c.b16 %v1155, %v1151
  %v2140 = vpack.c.b16 %v1156, %v1152
  %v2141 = vpack.c.b16 %v1157, %v1153
  %v2142 = vpack.c.b16 %v1162, %v1158
  %v2143 = vpack.c.b16 %v1163, %v1159
  %v2144 = vpack.c.b16 %v1164, %v1160
  %v2145 = vpack.c.b16 %v1165, %v1161
  %v2146 = vpack.c.b16 %v1170, %v1166
  %v2147 = vpack.c.b16 %v1171, %v1167
  %v2148 = vpack.c.b16 %v1172, %v1168
  %v2149 = vpack.c.b16 %v1173, %v1169
  %v2150 = vpack.c.b16 %v1178, %v1174
  %v2151 = vpack.c.b16 %v1179, %v1175
  %v2152 = vpack.c.b16 %v1180, %v1176
  %v2153 = vpack.c.b16 %v1181, %v1177
  %v2154 = vpack.c.b16 %v1186, %v1182
  %v2155 = vpack.c.b16 %v1187, %v1183
  %v2156 = vpack.c.b16 %v1188, %v1184
  %v2157 = vpack.c.b16 %v1189, %v1185
  %v2158 = vpack.c.b16 %v1194, %v1190
  %v2159 = vpack.c.b16 %v1195, %v1191
  %v2160 = vpack.c.b16 %v1196, %v1192
  %v2161 = vpack.c.b16 %v1197, %v1193
  %v2162 = vpack.c.b16 %v1202, %v1198
  %v2163 = vpack.c.b16 %v1203, %v1199
  %v2164 = vpack.c.b16 %v1204, %v1200
  %v2165 = vpack.c.b16 %v1205, %v1201
  %v2166 = vpack.c.b16 %v1210, %v1206
  %v2167 = vpack.c.b16 %v1211, %v1207
  %v2168 = vpack.c.b16 %v1212, %v1208
  %v2169 = vpack.c.b16 %v1213, %v1209
  %v2170 = vpack.c.b16 %v1218, %v1214
  %v2171 = vpack.c.b16 %v1219, %v1215
  %v2172 = vpack.c.b16 %v1220, %v1216
  %v2173 = vpack.c.b16 %v1221, %v1217
  %v2174 = vpack.c.b16 %v1226, %v1222
  %v2175 = vpack.c.b16 %v1227, %v1223
  %v2176 = vpack.c.b16 %v1228, %v1224
  %v2177 = vpack.c.b16 %v1229, %v1225
  %v2178 = vpack.c.b16 %v1234, %v1230
  %v2179 = vpack.c.b16 %v1235, %v1231
  %v2180 = vpack.c.b16 %v1236, %v1232
  %v2181 = vpack.c.b16 %v1237, %v1233
  %v2182 = vpack.c.b16 %v1242, %v1238
  %v2183 = vpack.c.b16 %v1243, %v1239
  %v2184 = vpack.c.b16 %v1244, %v1240
  %v2185 = vpack.c.b16 %v1245, %v1241
  %v2186 = vpack.c.b16 %v1250, %v1246
  %v2187 = vpack.c.b16 %v1251, %v1247
  %v2188 = vpack.c.b16 %v1252, %v1248
  %v2189 = vpack.c.b16 %v1253, %v1249
  %v2190 = vpack.c.b16 %v1258, %v1254
  %v2191 = vpack.c.b16 %v1259, %v1255
  %v2192 = vpack.c.b16 %v1260, %v1256
  %v2193 = vpack.c.b16 %v1261, %v1257
  %v2194 = vpack.c.b16 %v1266, %v1262
  %v2195 = vpack.c.b16 %v1267, %v1263
  %v2196 = vpack.c.b16 %v1268, %v1264
  %v2197 = vpack.c.b16 %v1269, %v1265
  %v2198 = vpack.c.b16 %v1274, %v1270
  %v2199 = vpack.c.b16 %v1275, %v1271
  %v2200 = vpack.c.b16 %v1276, %v1272
  %v2201 = vpack.c.b16 %v1277, %v1273
  %v2202 = vpack.c.b16 %v1282, %v1278
  %v2203 = vpack.c.b16 %v1283, %v1279
  %v2204 = vpack.c.b16 %v1284, %v1280
  %v2205 = vpack.c.b16 %v1285, %v1281
  %v2206 = vpack.c.b16 %v1290, %v1286
  %v2207 = vpack.c.b16 %v1291, %v1287
  %v2208 = vpack.c.b16 %v1292, %v1288
  %v2209 = vpack.c.b16 %v1293, %v1289
  %v2210 = vpack.c.b16 %v1298, %v1294
  %v2211 = vpack.c.b16 %v1299, %v1295
  %v2212 = vpack.c.b16 %v1300, %v1296
  %v2213 = vpack.c.b16 %v1301, %v1297
  %v2214 = vpack.c.b16 %v1306, %v1302
  %v2215 = vpack.c.b16 %v1307, %v1303
  %v2216 = vpack.c.b16 %v1308, %v1304
  %v2217 = vpack.c.b16 %v1309, %v1305
  %v2218 = vpack.c.b16 %v1314, %v1310
  %v2219 = vpack.c.b16 %v1315, %v1311
  %v2220 = vpack.c.b16 %v1316, %v1312
  %v2221 = vpack.c.b16 %v1317, %v1313
  %v2222 = vpack.c.b16 %v1322, %v1318
  %v2223 = vpack.c.b16 %v1323, %v1319
  %v2224 = vpack.c.b16 %v1324, %v1320
  %v2225 = vpack.c.b16 %v1325, %v1321
  %v2226 = vpack.c.b16 %v1330, %v1326
  %v2227 = vpack.c.b16 %v1331, %v1327
  %v2228 = vpack.c.b16 %v1332, %v1328
  %v2229 = vpack.c.b16 %v1333, %v1329
  %v2230 = vpack.c.b16 %v1338, %v1334
  %v2231 = vpack.c.b16 %v1339, %v1335
  %v2232 = vpack.c.b16 %v1340, %v1336
  %v2233 = vpack.c.b16 %v1341, %v1337
  %v2234 = vpack.c.b16 %v1346, %v1342
  %v2235 = vpack.c.b16 %v1347, %v1343
  %v2236 = vpack.c.b16 %v1348, %v1344
  %v2237 = vpack.c.b16 %v1349, %v1345
  %v2238 = vpack.c.b16 %v1354, %v1350
  %v2239 = vpack.c.b16 %v1355, %v1351
  %v2240 = vpack.c.b16 %v1356, %v1352
  %v2241 = vpack.c.b16 %v1357, %v1353
  %v2242 = vpack.c.b16 %v1362, %v1358
  %v2243 = vpack.c.b16 %v1363, %v1359
  %v2244 = vpack.c.b16 %v1364, %v1360
  %v2245 = vpack.c.b16 %v1365, %v1361
  %v2246 = vpack.c.b16 %v1370, %v1366
  %v2247 = vpack.c.b16 %v1371, %v1367
  %v2248 = vpack.c.b16 %v1372, %v1368
  %v2249 = vpack.c.b16 %v1373, %v1369
  %v2250 = vpack.c.b16 %v1378, %v1374
  %v2251 = vpack.c.b16 %v1379, %v1375
  %v2252 = vpack.c.b16 %v1380, %v1376
  %v2253 = vpack.c.b16 %v1381, %v1377
  %v2254 = vpack.c.b16 %v1386, %v1382
  %v2255 = vpack.c.b16 %v1387, %v1383
  %v2256 = vpack.c.b16 %v1388, %v1384
  %v2257 = vpack.c.b16 %v1389, %v1385
  %v2258 = vpack.c.b16 %v1394, %v1390
  %v2259 = vpack.c.b16 %v1395, %v1391
  %v2260 = vpack.c.b16 %v1396, %v1392
  %v2261 = vpack.c.b16 %v1397, %v1393
  %v2262 = vpack.c.b16 %v1402, %v1398
  %v2263 = vpack.c.b16 %v1403, %v1399
  %v2264 = vpack.c.b16 %v1404, %v1400
  %v2265 = vpack.c.b16 %v1405, %v1401
  %v2266 = vpack.c.b16 %v1410, %v1406
  %v2267 = vpack.c.b16 %v1411, %v1407
  %v2268 = vpack.c.b16 %v1412, %v1408
  %v2269 = vpack.c.b16 %v1413, %v1409
  %v2270 = vpack.c.b16 %v1418, %v1414
  %v2271 = vpack.c.b16 %v1419, %v1415
  %v2272 = vpack.c.b16 %v1420, %v1416
  %v2273 = vpack.c.b16 %v1421, %v1417
  %v2274 = vpack.c.b16 %v1426, %v1422
  %v2275 = vpack.c.b16 %v1427, %v1423
  %v2276 = vpack.c.b16 %v1428, %v1424
  %v2277 = vpack.c.b16 %v1429, %v1425
  %v2278 = vpack.c.b16 %v1434, %v1430
  %v2279 = vpack.c.b16 %v1435, %v1431
  %v2280 = vpack.c.b16 %v1436, %v1432
  %v2281 = vpack.c.b16 %v1437, %v1433
  %v2282 = vpack.c.b16 %v1442, %v1438
  %v2283 = vpack.c.b16 %v1443, %v1439
  %v2284 = vpack.c.b16 %v1444, %v1440
  %v2285 = vpack.c.b16 %v1445, %v1441
  %v2286 = vpack.c.b16 %v1450, %v1446
  %v2287 = vpack.c.b16 %v1451, %v1447
  %v2288 = vpack.c.b16 %v1452, %v1448
  %v2289 = vpack.c.b16 %v1453, %v1449
  %v2290 = vpack.c.b16 %v1458, %v1454
  %v2291 = vpack.c.b16 %v1459, %v1455
  %v2292 = vpack.c.b16 %v1460, %v1456
  %v2293 = vpack.c.b16 %v1461, %v1457
  %v2294 = vpack.c.b16 %v1466, %v1462
  %v2295 = vpack.c.b16 %v1467, %v1463
  %v2296 = vpack.c.b16 %v1468, %v1464
  %v2297 = vpack.c.b16 %v1469, %v1465
  %v2298 = vpack.c.b16 %v1474, %v1470
  %v2299 = vpack.c.b16 %v1475, %v1471
  %v2300 = vpack.c.b16 %v1476, %v1472
  %v2301 = vpack.c.b16 %v1477, %v1473
  %v2302 = vpack.c.b16 %v1482, %v1478
  %v2303 = vpack.c.b16 %v1483, %v1479
  %v2304 = vpack.c.b16 %v1484, %v1480
  %v2305 = vpack.c.b16 %v1485, %v1481
  %v2306 = vpack.c.b16 %v1490, %v1486
  %v2307 = vpack.c.b16 %v1491, %v1487
  %v2308 = vpack.c.b16 %v1492, %v1488
  %v2309 = vpack.c.b16 %v1493, %v1489
  %v2310 = vpack.c.b16 %v1498, %v1494
  %v2311 = vpack.c.b16 %v1499, %v1495
  %v2312 = vpack.c.b16 %v1500, %v1496
  %v2313 = vpack.c.b16 %v1501, %v1497
  %v2314 = vpack.c.b16 %v1506, %v1502
  %v2315 = vpack.c.b16 %v1507, %v1503
  %v2316 = vpack.c.b16 %v1508, %v1504
  %v2317 = vpack.c.b16 %v1509, %v1505
  %v2318 = vpack.c.b16 %v1514, %v1510
  %v2319 = vpack.c.b16 %v1515, %v1511
  %v2320 = vpack.c.b16 %v1516, %v1512
  %v2321 = vpack.c.b16 %v1517, %v1513
  %v2322 = vpack.c.b16 %v1522, %v1518
  %v2323 = vpack.c.b16 %v1523, %v1519
  %v2324 = vpack.c.b16 %v1524, %v1520
  %v2325 = vpack.c.b16 %v1525, %v1521
  %v2326 = vpack.c.b16 %v1530, %v1526
  %v2327 = vpack.c.b16 %v1531, %v1527
  %v2328 = vpack.c.b16 %v1532, %v1528
  %v2329 = vpack.c.b16 %v1533, %v1529
  %v2330 = vpack.c.b16 %v1538, %v1534
  %v2331 = vpack.c.b16 %v1539, %v1535
  %v2332 = vpack.c.b16 %v1540, %v1536
  %v2333 = vpack.c.b16 %v1541, %v1537
  %v2334 = vpack.c.b16 %v1546, %v1542
  %v2335 = vpack.c.b16 %v1547, %v1543
  %v2336 = vpack.c.b16 %v1548, %v1544
  %v2337 = vpack.c.b16 %v1549, %v1545
  %v2338 = vpack.c.b16 %v1554, %v1550
  %v2339 = vpack.c.b16 %v1555, %v1551
  %v2340 = vpack.c.b16 %v1556, %v1552
  %v2341 = vpack.c.b16 %v1557, %v1553
  %v2342 = vpack.c.b16 %v1562, %v1558
  %v2343 = vpack.c.b16 %v1563, %v1559
  %v2344 = vpack.c.b16 %v1564, %v1560
  %v2345 = vpack.c.b16 %v1565, %v1561
  %v2346 = vpack.c.b16 %v1570, %v1566
  %v2347 = vpack.c.b16 %v1571, %v1567
  %v2348 = vpack.c.b16 %v1572, %v1568
  %v2349 = vpack.c.b16 %v1573, %v1569
  %v2350 = vpack.c.b16 %v1578, %v1574
  %v2351 = vpack.c.b16 %v1579, %v1575
  %v2352 = vpack.c.b16 %v1580, %v1576
  %v2353 = vpack.c.b16 %v1581, %v1577
  %v2354 = vpack.c.b16 %v1586, %v1582
  %v2355 = vpack.c.b16 %v1587, %v1583
  %v2356 = vpack.c.b16 %v1588, %v1584
  %v2357 = vpack.c.b16 %v1589, %v1585
  %v2358 = vpack.c.b16 %v1594, %v1590
  %v2359 = vpack.c.b16 %v1595, %v1591
  %v2360 = vpack.c.b16 %v1596, %v1592
  %v2361 = vpack.c.b16 %v1597, %v1593
  %v2362 = vpack.c.b16 %v1602, %v1598
  %v2363 = vpack.c.b16 %v1603, %v1599
  %v2364 = vpack.c.b16 %v1604, %v1600
  %v2365 = vpack.c.b16 %v1605, %v1601
  %v2366 = vpack.c.b16 %v1610, %v1606
  %v2367 = vpack.c.b16 %v1611, %v1607
  %v2368 = vpack.c.b16 %v1612, %v1608
  %v2369 = vpack.c.b16 %v1613, %v1609
  %v2370 = vpack.c.b16 %v1618, %v1614
  %v2371 = vpack.c.b16 %v1619, %v1615
  %v2372 = vpack.c.b16 %v1620, %v1616
  %v2373 = vpack.c.b16 %v1621, %v1617
  %v2374 = vpack.c.b16 %v1626, %v1622
  %v2375 = vpack.c.b16 %v1627, %v1623
  %v2376 = vpack.c.b16 %v1628, %v1624
  %v2377 = vpack.c.b16 %v1629, %v1625
  %v2378 = vpack.c.b16 %v1634, %v1630
  %v2379 = vpack.c.b16 %v1635, %v1631
  %v2380 = vpack.c.b16 %v1636, %v1632
  %v2381 = vpack.c.b16 %v1637, %v1633
  %v2382 = vpack.c.b16 %v1642, %v1638
  %v2383 = vpack.c.b16 %v1643, %v1639
  %v2384 = vpack.c.b16 %v1644, %v1640
  %v2385 = vpack.c.b16 %v1645, %v1641
  %v2386 = vpack.c.b16 %v1650, %v1646
  %v2387 = vpack.c.b16 %v1651, %v1647
  %v2388 = vpack.c.b16 %v1652, %v1648
  %v2389 = vpack.c.b16 %v1653, %v1649
  %v2390 = vpack.c.b16 %v1658, %v1654
  %v2391 = vpack.c.b16 %v1659, %v1655
  %v2392 = vpack.c.b16 %v1660, %v1656
  %v2393 = vpack.c.b16 %v1661, %v1657
  %v2394 = vpack.c.b16 %v1666, %v1662
  %v2395 = vpack.c.b16 %v1667, %v1663
  %v2396 = vpack.c.b16 %v1668, %v1664
  %v2397 = vpack.c.b16 %v1669, %v1665
  %v2398 = vpack.c.b16 %v1674, %v1670
  %v2399 = vpack.c.b16 %v1675, %v1671
  %v2400 = vpack.c.b16 %v1676, %v1672
  %v2401 = vpack.c.b16 %v1677, %v1673
  %v2402 = vpack.c.b16 %v1682, %v1678
  %v2403 = vpack.c.b16 %v1683, %v1679
  %v2404 = vpack.c.b16 %v1684, %v1680
  %v2405 = vpack.c.b16 %v1685, %v1681
  %v2406 = vpack.c.b16 %v1690, %v1686
  %v2407 = vpack.c.b16 %v1691, %v1687
  %v2408 = vpack.c.b16 %v1692, %v1688
  %v2409 = vpack.c.b16 %v1693, %v1689
  %v2410 = vpack.c.b16 %v1698, %v1694
  %v2411 = vpack.c.b16 %v1699, %v1695
  %v2412 = vpack.c.b16 %v1700, %v1696
  %v2413 = vpack.c.b16 %v1701, %v1697
  %v2414 = vpack.c.b16 %v1706, %v1702
  %v2415 = vpack.c.b16 %v1707, %v1703
  %v2416 = vpack.c.b16 %v1708, %v1704
  %v2417 = vpack.c.b16 %v1709, %v1705
  %v2418 = vpack.c.b16 %v1714, %v1710
  %v2419 = vpack.c.b16 %v1715, %v1711
  %v2420 = vpack.c.b16 %v1716, %v1712
  %v2421 = vpack.c.b16 %v1717, %v1713
  %v2422 = vpack.c.b16 %v1722, %v1718
  %v2423 = vpack.c.b16 %v1723, %v1719
  %v2424 = vpack.c.b16 %v1724, %v1720
  %v2425 = vpack.c.b16 %v1725, %v1721
  %v2426 = vpack.c.b16 %v1730, %v1726
  %v2427 = vpack.c.b16 %v1731, %v1727
  %v2428 = vpack.c.b16 %v1732, %v1728
  %v2429 = vpack.c.b16 %v1733, %v1729
  %v2430 = vpack.c.b16 %v1738, %v1734
  %v2431 = vpack.c.b16 %v1739, %v1735
  %v2432 = vpack.c.b16 %v1740, %v1736
  %v2433 = vpack.c.b16 %v1741, %v1737
  %v2434 = vpack.c.b16 %v1746, %v1742
  %v2435 = vpack.c.b16 %v1747, %v1743
  %v2436 = vpack.c.b16 %v1748, %v1744
  %v2437 = vpack.c.b16 %v1749, %v1745
  %v2438 = vpack.c.b16 %v1754, %v1750
  %v2439 = vpack.c.b16 %v1755, %v1751
  %v2440 = vpack.c.b16 %v1756, %v1752
  %v2441 = vpack.c.b16 %v1757, %v1753
  %v2442 = vpack.c.b16 %v1762, %v1758
  %v2443 = vpack.c.b16 %v1763, %v1759
  %v2444 = vpack.c.b16 %v1764, %v1760
  %v2445 = vpack.c.b16 %v1765, %v1761
  %v2446 = vpack.c.b16 %v1770, %v1766
  %v2447 = vpack.c.b16 %v1771, %v1767
  %v2448 = vpack.c.b16 %v1772, %v1768
  %v2449 = vpack.c.b16 %v1773, %v1769
  %v2450 = vpack.c.b16 %v1778, %v1774
  %v2451 = vpack.c.b16 %v1779, %v1775
  %v2452 = vpack.c.b16 %v1780, %v1776
  %v2453 = vpack.c.b16 %v1781, %v1777
  %v2454 = vpack.c.b16 %v1786, %v1782
  %v2455 = vpack.c.b16 %v1787, %v1783
  %v2456 = vpack.c.b16 %v1788, %v1784
  %v2457 = vpack.c.b16 %v1789, %v1785
  %v2458 = vpack.c.b16 %v1794, %v1790
  %v2459 = vpack.c.b16 %v1795, %v1791
  %v2460 = vpack.c.b16 %v1796, %v1792
  %v2461 = vpack.c.b16 %v1797, %v1793
  %v2462 = vpack.c.b16 %v1802, %v1798
  %v2463 = vpack.c.b16 %v1803, %v1799
  %v2464 = vpack.c.b16 %v1804, %v1800
  %v2465 = vpack.c.b16 %v1805, %v1801
  %v2466 = vpack.c.b16 %v1810, %v1806
  %v2467 = vpack.c.b16 %v1811, %v1807
  %v2468 = vpack.c.b16 %v1812, %v1808
  %v2469 = vpack.c.b16 %v1813, %v1809
  %v2470 = vpack.c.b16 %v1818, %v1814
  %v2471 = vpack.c.b16 %v1819, %v1815
  %v2472 = vpack.c.b16 %v1820, %v1816
  %v2473 = vpack.c.b16 %v1821, %v1817
  %v2474 = vpack.c.b16 %v1826, %v1822
  %v2475 = vpack.c.b16 %v1827, %v1823
  %v2476 = vpack.c.b16 %v1828, %v1824
  %v2477 = vpack.c.b16 %v1829, %v1825
  %v2478 = vpack.c.b16 %v1834, %v1830
  %v2479 = vpack.c.b16 %v1835, %v1831
  %v2480 = vpack.c.b16 %v1836, %v1832
  %v2481 = vpack.c.b16 %v1837, %v1833
  %v2482 = vpack.c.b16 %v1842, %v1838
  %v2483 = vpack.c.b16 %v1843, %v1839
  %v2484 = vpack.c.b16 %v1844, %v1840
  %v2485 = vpack.c.b16 %v1845, %v1841
  %v2486 = vpack.c.b16 %v1850, %v1846
  %v2487 = vpack.c.b16 %v1851, %v1847
  %v2488 = vpack.c.b16 %v1852, %v1848
  %v2489 = vpack.c.b16 %v1853, %v1849
  %v2490 = vpack.c.b16 %v1858, %v1854
  %v2491 = vpack.c.b16 %v1859, %v1855
  %v2492 = vpack.c.b16 %v1860, %v1856
  %v2493 = vpack.c.b16 %v1861, %v1857
  %v2494 = vpack.c.b16 %v1866, %v1862
  %v2495 = vpack.c.b16 %v1867, %v1863
  %v2496 = vpack.c.b16 %v1868, %v1864
  %v2497 = vpack.c.b16 %v1869, %v1865
  %v2498 = vpack.c.b16 %v1874, %v1870
  %v2499 = vpack.c.b16 %v1875, %v1871
  %v2500 = vpack.c.b16 %v1876, %v1872
  %v2501 = vpack.c.b16 %v1877, %v1873
  %v2502 = vpack.c.b16 %v1882, %v1878
  %v2503 = vpack.c.b16 %v1883, %v1879
  %v2504 = vpack.c.b16 %v1884, %v1880
  %v2505 = vpack.c.b16 %v1885, %v1881
  %v2506 = vpack.c.b16 %v1890, %v1886
  %v2507 = vpack.c.b16 %v1891, %v1887
  %v2508 = vpack.c.b16 %v1892, %v1888
  %v2509 = vpack.c.b16 %v1893, %v1889
  %v2510 = vpack.c.b16 %v1898, %v1894
  %v2511 = vpack.c.b16 %v1899, %v1895
  %v2512 = vpack.c.b16 %v1900, %v1896
  %v2513 = vpack.c.b16 %v1901, %v1897
  %v2514 = vpack.c.b16 %v1906, %v1902
  %v2515 = vpack.c.b16 %v1907, %v1903
  %v2516 = vpack.c.b16 %v1908, %v1904
  %v2517 = vpack.c.b16 %v1909, %v1905
  %v2518 = vpack.c.b16 %v1914, %v1910
  %v2519 = vpack.c.b16 %v1915, %v1911
  %v2520 = vpack.c.b16 %v1916, %v1912
  %v2521 = vpack.c.b16 %v1917, %v1913
  %v2522 = vpack.c.b16 %v1922, %v1918
  %v2523 = vpack.c.b16 %v1923, %v1919
  %v2524 = vpack.c.b16 %v1924, %v1920
  %v2525 = vpack.c.b16 %v1925, %v1921
  %v2526 = vpack.c.b16 %v1930, %v1926
  %v2527 = vpack.c.b16 %v1931, %v1927
  %v2528 = vpack.c.b16 %v1932, %v1928
  %v2529 = vpack.c.b16 %v1933, %v1929
  %v2530 = vpack.c.b16 %v1938, %v1934
  %v2531 = vpack.c.b16 %v1939, %v1935
  %v2532 = vpack.c.b16 %v1940, %v1936
  %v2533 = vpack.c.b16 %v1941, %v1937
  %v2534 = vpack.c.b16 %v1946, %v1942
  %v2535 = vpack.c.b16 %v1947, %v1943
  %v2536 = vpack.c.b16 %v1948, %v1944
  %v2537 = vpack.c.b16 %v1949, %v1945
  %v2538 = vpack.c.b16 %v1954, %v1950
  %v2539 = vpack.c.b16 %v1955, %v1951
  %v2540 = vpack.c.b16 %v1956, %v1952
  %v2541 = vpack.c.b16 %v1957, %v1953
  %v2542 = vpack.c.b16 %v1962, %v1958
  %v2543 = vpack.c.b16 %v1963, %v1959
  %v2544 = vpack.c.b16 %v1964, %v1960
  %v2545 = vpack.c.b16 %v1965, %v1961
  %v2546 = vpack.c.b16 %v1970, %v1966
  %v2547 = vpack.c.b16 %v1971, %v1967
  %v2548 = vpack.c.b16 %v1972, %v1968
  %v2549 = vpack.c.b16 %v1973, %v1969
  %v2550 = vpack.c.b16 %v1978, %v1974
  %v2551 = vpack.c.b16 %v1979, %v1975
  %v2552 = vpack.c.b16 %v1980, %v1976
  %v2553 = vpack.c.b16 %v1981, %v1977
  %v2554 = vpack.c.b16 %v1986, %v1982
  %v2555 = vpack.c.b16 %v1987, %v1983
  %v2556 = vpack.c.b16 %v1988, %v1984
  %v2557 = vpack.c.b16 %v1989, %v1985
  %v2558 = vpack.c.b16 %v1994, %v1990
  %v2559 = vpack.c.b16 %v1995, %v1991
  %v2560 = vpack.c.b16 %v1996, %v1992
  %v2561 = vpack.c.b16 %v1997, %v1993
  %v2562 = vpack.c.b16 %v2002, %v1998
  %v2563 = vpack.c.b16 %v2003, %v1999
  %v2564 = vpack.c.b16 %v2004, %v2000
  %v2565 = vpack.c.b16 %v2005, %v2001
  %v2566 = vpack.c.b16 %v2010, %v2006
  %v2567 = vpack.c.b16 %v2011, %v2007
  %v2568 = vpack.c.b16 %v2012, %v2008
  %v2569 = vpack.c.b16 %v2013, %v2009
  %v2570 = vpack.c.b16 %v2018, %v2014
  %v2571 = vpack.c.b16 %v2019, %v2015
  %v2572 = vpack.c.b16 %v2020, %v2016
  %v2573 = vpack.c.b16 %v2021, %v2017
  %v2574 = vpack.c.b16 %v2026, %v2022
  %v2575 = vpack.c.b16 %v2027, %v2023
  %v2576 = vpack.c.b16 %v2028, %v2024
  %v2577 = vpack.c.b16 %v2029, %v2025
  %v2578 = vpack.c.b16 %v2034, %v2030
  %v2579 = vpack.c.b16 %v2035, %v2031
  %v2580 = vpack.c.b16 %v2036, %v2032
  %v2581 = vpack.c.b16 %v2037, %v2033
  %v2582 = vpack.c.b16 %v2042, %v2038
  %v2583 = vpack.c.b16 %v2043, %v2039
  %v2584 = vpack.c.b16 %v2044, %v2040
  %v2585 = vpack.c.b16 %v2045, %v2041
  %v2586 = vpack.c.b16 %v2050, %v2046
  %v2587 = vpack.c.b16 %v2051, %v2047
  %v2588 = vpack.c.b16 %v2052, %v2048
  %v2589 = vpack.c.b16 %v2053, %v2049
  %v2590 = vpack.c.b16 %v2058, %v2054
  %v2591 = vpack.c.b16 %v2059, %v2055
  %v2592 = vpack.c.b16 %v2060, %v2056
  %v2593 = vpack.c.b16 %v2061, %v2057
  %v2594 = vpack.c.b16 %v2066, %v2062
  %v2595 = vpack.c.b16 %v2067, %v2063
  %v2596 = vpack.c.b16 %v2068, %v2064
  %v2597 = vpack.c.b16 %v2069, %v2065
  %v2598 = vpack.c.b16 %v2074, %v2070
  %v2599 = vpack.c.b16 %v2075, %v2071
  %v2600 = vpack.c.b16 %v2076, %v2072
  %v2601 = vpack.c.b16 %v2077, %v2073
  %v2602 = vpack.c.b16 %v2082, %v2078
  %v2603 = vpack.c.b16 %v2083, %v2079
  %v2604 = vpack.c.b16 %v2084, %v2080
  %v2605 = vpack.c.b16 %v2085, %v2081
  %v2606 = vpack.c.b16 %v2090, %v2086
  %v2607 = vpack.c.b16 %v2091, %v2087
  %v2608 = vpack.c.b16 %v2092, %v2088
  %v2609 = vpack.c.b16 %v2093, %v2089
  %v2610 = vpack.c.b16 %v2098, %v2094
  %v2611 = vpack.c.b16 %v2099, %v2095
  %v2612 = vpack.c.b16 %v2100, %v2096
  %v2613 = vpack.c.b16 %v2101, %v2097
  %v2614 = vpack.c.b16 %v2106, %v2102
  %v2615 = vpack.c.b16 %v2107, %v2103
  %v2616 = vpack.c.b16 %v2108, %v2104
  %v2617 = vpack.c.b16 %v2109, %v2105
  %v2618 = vpack.c.b16 %v2114, %v2110
  %v2619 = vpack.c.b16 %v2115, %v2111
  %v2620 = vpack.c.b16 %v2116, %v2112
  %v2621 = vpack.c.b16 %v2117, %v2113
  %v2622 = vpack.c.b16 %v2122, %v2118
  %v2623 = vpack.c.b16 %v2123, %v2119
  %v2624 = vpack.c.b16 %v2124, %v2120
  %v2625 = vpack.c.b16 %v2125, %v2121
  %vm3126 = vcmask 654336
  %v3128 = vsel %vm3126, %v610, 0
  %3130 = vmatpush.bf16.msra.mxu0 %v2154
  %3131 = vmatpush.bf16.msra.mxu0 %v2150
  %3132 = vmatpush.bf16.msra.mxu0 %v2146
  %3133 = vmatpush.bf16.msra.mxu0 %v2142
  %3134 = vmatpush.bf16.msra.mxu0 %v2138
  %3135 = vmatpush.bf16.msra.mxu0 %v2134
  %3136 = vmatpush.bf16.msra.mxu0 %v2130
  %3137 = vmatpush.bf16.msra.mxu0 %v2126
  %3138 = vmatmul.bf16.gmra.mxu0 %v595
  %v3139 = vpop.f32.mrf.mxu0
  %v3140 = vadd.f32 %v539, %v3139
  %v3141 = vpop.f32.mrf.mxu0
  %v3142 = vadd.f32 %v539, %v3141
  %3143 = vdwg.mxu0
  %3144 = vmatpush.bf16.msra.mxu0 %v2186
  %3145 = vmatpush.bf16.msra.mxu0 %v2182
  %3146 = vmatpush.bf16.msra.mxu0 %v2178
  %3147 = vmatpush.bf16.msra.mxu0 %v2174
  %3148 = vmatpush.bf16.msra.mxu0 %v2170
  %3149 = vmatpush.bf16.msra.mxu0 %v2166
  %3150 = vmatpush.bf16.msra.mxu0 %v2162
  %3151 = vmatpush.bf16.msra.mxu0 %v2158
  %3152 = vmatmul.bf16.gmra.mxu0 %v596
  %v3153 = vpop.f32.mrf.mxu0
  %v3154 = vadd.f32 %v3140, %v3153
  %v3155 = vpop.f32.mrf.mxu0
  %v3156 = vadd.f32 %v3142, %v3155
  %3157 = vdwg.mxu0
  %3158 = vmatpush.bf16.msra.mxu0 %v2218
  %3159 = vmatpush.bf16.msra.mxu0 %v2214
  %3160 = vmatpush.bf16.msra.mxu0 %v2210
  %3161 = vmatpush.bf16.msra.mxu0 %v2206
  %3162 = vmatpush.bf16.msra.mxu0 %v2202
  %3163 = vmatpush.bf16.msra.mxu0 %v2198
  %3164 = vmatpush.bf16.msra.mxu0 %v2194
  %3165 = vmatpush.bf16.msra.mxu0 %v2190
  %3166 = vmatmul.bf16.gmra.mxu0 %v597
  %v3167 = vpop.f32.mrf.mxu0
  %v3168 = vadd.f32 %v3154, %v3167
  %v3169 = vpop.f32.mrf.mxu0
  %v3170 = vadd.f32 %v3156, %v3169
  %3171 = vdwg.mxu0
  %3172 = vmatpush.bf16.msra.mxu0 %v2250
  %3173 = vmatpush.bf16.msra.mxu0 %v2246
  %3174 = vmatpush.bf16.msra.mxu0 %v2242
  %3175 = vmatpush.bf16.msra.mxu0 %v2238
  %3176 = vmatpush.bf16.msra.mxu0 %v2234
  %3177 = vmatpush.bf16.msra.mxu0 %v2230
  %3178 = vmatpush.bf16.msra.mxu0 %v2226
  %3179 = vmatpush.bf16.msra.mxu0 %v2222
  %3180 = vmatmul.bf16.gmra.mxu0 %v598
  %v3181 = vpop.f32.mrf.mxu0
  %v3182 = vadd.f32 %v3168, %v3181
  %v3183 = vpop.f32.mrf.mxu0
  %v3184 = vadd.f32 %v3170, %v3183
  %3185 = vdwg.mxu0
  %3186 = vmatpush.bf16.msra.mxu0 %v2282
  %3187 = vmatpush.bf16.msra.mxu0 %v2278
  %3188 = vmatpush.bf16.msra.mxu0 %v2274
  %3189 = vmatpush.bf16.msra.mxu0 %v2270
  %3190 = vmatpush.bf16.msra.mxu0 %v2266
  %3191 = vmatpush.bf16.msra.mxu0 %v2262
  %3192 = vmatpush.bf16.msra.mxu0 %v2258
  %3193 = vmatpush.bf16.msra.mxu0 %v2254
  %3194 = vmatmul.bf16.gmra.mxu0 %v599
  %v3195 = vpop.f32.mrf.mxu0
  %v3196 = vadd.f32 %v3182, %v3195
  %v3197 = vpop.f32.mrf.mxu0
  %v3198 = vadd.f32 %v3184, %v3197
  %3199 = vdwg.mxu0
  %3200 = vmatpush.bf16.msra.mxu0 %v2314
  %3201 = vmatpush.bf16.msra.mxu0 %v2310
  %3202 = vmatpush.bf16.msra.mxu0 %v2306
  %3203 = vmatpush.bf16.msra.mxu0 %v2302
  %3204 = vmatpush.bf16.msra.mxu0 %v2298
  %3205 = vmatpush.bf16.msra.mxu0 %v2294
  %3206 = vmatpush.bf16.msra.mxu0 %v2290
  %3207 = vmatpush.bf16.msra.mxu0 %v2286
  %3208 = vmatmul.bf16.gmra.mxu0 %v600
  %v3209 = vpop.f32.mrf.mxu0
  %v3210 = vadd.f32 %v3196, %v3209
  %v3211 = vpop.f32.mrf.mxu0
  %v3212 = vadd.f32 %v3198, %v3211
  %3213 = vdwg.mxu0
  %3214 = vmatpush.bf16.msra.mxu0 %v2346
  %3215 = vmatpush.bf16.msra.mxu0 %v2342
  %3216 = vmatpush.bf16.msra.mxu0 %v2338
  %3217 = vmatpush.bf16.msra.mxu0 %v2334
  %3218 = vmatpush.bf16.msra.mxu0 %v2330
  %3219 = vmatpush.bf16.msra.mxu0 %v2326
  %3220 = vmatpush.bf16.msra.mxu0 %v2322
  %3221 = vmatpush.bf16.msra.mxu0 %v2318
  %3222 = vmatmul.bf16.gmra.mxu0 %v601
  %v3223 = vpop.f32.mrf.mxu0
  %v3224 = vadd.f32 %v3210, %v3223
  %v3225 = vpop.f32.mrf.mxu0
  %v3226 = vadd.f32 %v3212, %v3225
  %3227 = vdwg.mxu0
  %3228 = vmatpush.bf16.msra.mxu0 %v2378
  %3229 = vmatpush.bf16.msra.mxu0 %v2374
  %3230 = vmatpush.bf16.msra.mxu0 %v2370
  %3231 = vmatpush.bf16.msra.mxu0 %v2366
  %3232 = vmatpush.bf16.msra.mxu0 %v2362
  %3233 = vmatpush.bf16.msra.mxu0 %v2358
  %3234 = vmatpush.bf16.msra.mxu0 %v2354
  %3235 = vmatpush.bf16.msra.mxu0 %v2350
  %3236 = vmatmul.bf16.gmra.mxu0 %v602
  %v3237 = vpop.f32.mrf.mxu0
  %v3238 = vadd.f32 %v3224, %v3237
  %v3239 = vpop.f32.mrf.mxu0
  %v3240 = vadd.f32 %v3226, %v3239
  %3241 = vdwg.mxu0
  %3242 = vmatpush.bf16.msra.mxu0 %v2410
  %3243 = vmatpush.bf16.msra.mxu0 %v2406
  %3244 = vmatpush.bf16.msra.mxu0 %v2402
  %3245 = vmatpush.bf16.msra.mxu0 %v2398
  %3246 = vmatpush.bf16.msra.mxu0 %v2394
  %3247 = vmatpush.bf16.msra.mxu0 %v2390
  %3248 = vmatpush.bf16.msra.mxu0 %v2386
  %3249 = vmatpush.bf16.msra.mxu0 %v2382
  %3250 = vmatmul.bf16.gmra.mxu0 %v603
  %v3251 = vpop.f32.mrf.mxu0
  %v3252 = vadd.f32 %v3238, %v3251
  %v3253 = vpop.f32.mrf.mxu0
  %v3254 = vadd.f32 %v3240, %v3253
  %3255 = vdwg.mxu0
  %3256 = vmatpush.bf16.msra.mxu0 %v2442
  %3257 = vmatpush.bf16.msra.mxu0 %v2438
  %3258 = vmatpush.bf16.msra.mxu0 %v2434
  %3259 = vmatpush.bf16.msra.mxu0 %v2430
  %3260 = vmatpush.bf16.msra.mxu0 %v2426
  %3261 = vmatpush.bf16.msra.mxu0 %v2422
  %3262 = vmatpush.bf16.msra.mxu0 %v2418
  %3263 = vmatpush.bf16.msra.mxu0 %v2414
  %3264 = vmatmul.bf16.gmra.mxu0 %v604
  %v3265 = vpop.f32.mrf.mxu0
  %v3266 = vadd.f32 %v3252, %v3265
  %v3267 = vpop.f32.mrf.mxu0
  %v3268 = vadd.f32 %v3254, %v3267
  %3269 = vdwg.mxu0
  %3270 = vmatpush.bf16.msra.mxu0 %v2474
  %3271 = vmatpush.bf16.msra.mxu0 %v2470
  %3272 = vmatpush.bf16.msra.mxu0 %v2466
  %3273 = vmatpush.bf16.msra.mxu0 %v2462
  %3274 = vmatpush.bf16.msra.mxu0 %v2458
  %3275 = vmatpush.bf16.msra.mxu0 %v2454
  %3276 = vmatpush.bf16.msra.mxu0 %v2450
  %3277 = vmatpush.bf16.msra.mxu0 %v2446
  %3278 = vmatmul.bf16.gmra.mxu0 %v605
  %v3279 = vpop.f32.mrf.mxu0
  %v3280 = vadd.f32 %v3266, %v3279
  %v3281 = vpop.f32.mrf.mxu0
  %v3282 = vadd.f32 %v3268, %v3281
  %3283 = vdwg.mxu0
  %3284 = vmatpush.bf16.msra.mxu0 %v2506
  %3285 = vmatpush.bf16.msra.mxu0 %v2502
  %3286 = vmatpush.bf16.msra.mxu0 %v2498
  %3287 = vmatpush.bf16.msra.mxu0 %v2494
  %3288 = vmatpush.bf16.msra.mxu0 %v2490
  %3289 = vmatpush.bf16.msra.mxu0 %v2486
  %3290 = vmatpush.bf16.msra.mxu0 %v2482
  %3291 = vmatpush.bf16.msra.mxu0 %v2478
  %3292 = vmatmul.bf16.gmra.mxu0 %v606
  %v3293 = vpop.f32.mrf.mxu0
  %v3294 = vadd.f32 %v3280, %v3293
  %v3295 = vpop.f32.mrf.mxu0
  %v3296 = vadd.f32 %v3282, %v3295
  %3297 = vdwg.mxu0
  %3298 = vmatpush.bf16.msra.mxu0 %v2538
  %3299 = vmatpush.bf16.msra.mxu0 %v2534
  %3300 = vmatpush.bf16.msra.mxu0 %v2530
  %3301 = vmatpush.bf16.msra.mxu0 %v2526
  %3302 = vmatpush.bf16.msra.mxu0 %v2522
  %3303 = vmatpush.bf16.msra.mxu0 %v2518
  %3304 = vmatpush.bf16.msra.mxu0 %v2514
  %3305 = vmatpush.bf16.msra.mxu0 %v2510
  %3306 = vmatmul.bf16.gmra.mxu0 %v607
  %v3307 = vpop.f32.mrf.mxu0
  %v3308 = vadd.f32 %v3294, %v3307
  %v3309 = vpop.f32.mrf.mxu0
  %v3310 = vadd.f32 %v3296, %v3309
  %3311 = vdwg.mxu0
  %3312 = vmatpush.bf16.msra.mxu0 %v2570
  %3313 = vmatpush.bf16.msra.mxu0 %v2566
  %3314 = vmatpush.bf16.msra.mxu0 %v2562
  %3315 = vmatpush.bf16.msra.mxu0 %v2558
  %3316 = vmatpush.bf16.msra.mxu0 %v2554
  %3317 = vmatpush.bf16.msra.mxu0 %v2550
  %3318 = vmatpush.bf16.msra.mxu0 %v2546
  %3319 = vmatpush.bf16.msra.mxu0 %v2542
  %3320 = vmatmul.bf16.gmra.mxu0 %v608
  %v3321 = vpop.f32.mrf.mxu0
  %v3322 = vadd.f32 %v3308, %v3321
  %v3323 = vpop.f32.mrf.mxu0
  %v3324 = vadd.f32 %v3310, %v3323
  %3325 = vdwg.mxu0
  %3326 = vmatpush.bf16.msra.mxu0 %v2602
  %3327 = vmatpush.bf16.msra.mxu0 %v2598
  %3328 = vmatpush.bf16.msra.mxu0 %v2594
  %3329 = vmatpush.bf16.msra.mxu0 %v2590
  %3330 = vmatpush.bf16.msra.mxu0 %v2586
  %3331 = vmatpush.bf16.msra.mxu0 %v2582
  %3332 = vmatpush.bf16.msra.mxu0 %v2578
  %3333 = vmatpush.bf16.msra.mxu0 %v2574
  %3334 = vmatmul.bf16.gmra.mxu0 %v609
  %v3335 = vpop.f32.mrf.mxu0
  %v3336 = vadd.f32 %v3322, %v3335
  %v3337 = vpop.f32.mrf.mxu0
  %v3338 = vadd.f32 %v3324, %v3337
  %3339 = vdwg.mxu0
  %3340 = vmatpush.bf16.msra.mxu0 0
  %3341 = vmatpush.bf16.msra.mxu0 0
  %3342 = vmatpush.bf16.msra.mxu0 0
  %3343 = vmatpush.bf16.msra.mxu0 %v2622
  %3344 = vmatpush.bf16.msra.mxu0 %v2618
  %3345 = vmatpush.bf16.msra.mxu0 %v2614
  %3346 = vmatpush.bf16.msra.mxu0 %v2610
  %3347 = vmatpush.bf16.msra.mxu0 %v2606
  %3348 = vmatmul.bf16.gmra.mxu0 %v3128
  %v3349 = vpop.f32.mrf.mxu0
  %v3350 = vadd.f32 %v3336, %v3349
  %v3351 = vpop.f32.mrf.mxu0
  %v3352 = vadd.f32 %v3338, %v3351
  %3353 = vdwg.mxu0
  %3354 = vmatpush.bf16.msra.mxu0 %v2155
  %3355 = vmatpush.bf16.msra.mxu0 %v2151
  %3356 = vmatpush.bf16.msra.mxu0 %v2147
  %3357 = vmatpush.bf16.msra.mxu0 %v2143
  %3358 = vmatpush.bf16.msra.mxu0 %v2139
  %3359 = vmatpush.bf16.msra.mxu0 %v2135
  %3360 = vmatpush.bf16.msra.mxu0 %v2131
  %3361 = vmatpush.bf16.msra.mxu0 %v2127
  %3362 = vmatmul.bf16.gmra.mxu0 %v595
  %v3363 = vpop.f32.mrf.mxu0
  %v3364 = vadd.f32 %v540, %v3363
  %v3365 = vpop.f32.mrf.mxu0
  %v3366 = vadd.f32 %v540, %v3365
  %3367 = vdwg.mxu0
  %3368 = vmatpush.bf16.msra.mxu0 %v2187
  %3369 = vmatpush.bf16.msra.mxu0 %v2183
  %3370 = vmatpush.bf16.msra.mxu0 %v2179
  %3371 = vmatpush.bf16.msra.mxu0 %v2175
  %3372 = vmatpush.bf16.msra.mxu0 %v2171
  %3373 = vmatpush.bf16.msra.mxu0 %v2167
  %3374 = vmatpush.bf16.msra.mxu0 %v2163
  %3375 = vmatpush.bf16.msra.mxu0 %v2159
  %3376 = vmatmul.bf16.gmra.mxu0 %v596
  %v3377 = vpop.f32.mrf.mxu0
  %v3378 = vadd.f32 %v3364, %v3377
  %v3379 = vpop.f32.mrf.mxu0
  %v3380 = vadd.f32 %v3366, %v3379
  %3381 = vdwg.mxu0
  %3382 = vmatpush.bf16.msra.mxu0 %v2219
  %3383 = vmatpush.bf16.msra.mxu0 %v2215
  %3384 = vmatpush.bf16.msra.mxu0 %v2211
  %3385 = vmatpush.bf16.msra.mxu0 %v2207
  %3386 = vmatpush.bf16.msra.mxu0 %v2203
  %3387 = vmatpush.bf16.msra.mxu0 %v2199
  %3388 = vmatpush.bf16.msra.mxu0 %v2195
  %3389 = vmatpush.bf16.msra.mxu0 %v2191
  %3390 = vmatmul.bf16.gmra.mxu0 %v597
  %v3391 = vpop.f32.mrf.mxu0
  %v3392 = vadd.f32 %v3378, %v3391
  %v3393 = vpop.f32.mrf.mxu0
  %v3394 = vadd.f32 %v3380, %v3393
  %3395 = vdwg.mxu0
  %3396 = vmatpush.bf16.msra.mxu0 %v2251
  %3397 = vmatpush.bf16.msra.mxu0 %v2247
  %3398 = vmatpush.bf16.msra.mxu0 %v2243
  %3399 = vmatpush.bf16.msra.mxu0 %v2239
  %3400 = vmatpush.bf16.msra.mxu0 %v2235
  %3401 = vmatpush.bf16.msra.mxu0 %v2231
  %3402 = vmatpush.bf16.msra.mxu0 %v2227
  %3403 = vmatpush.bf16.msra.mxu0 %v2223
  %3404 = vmatmul.bf16.gmra.mxu0 %v598
  %v3405 = vpop.f32.mrf.mxu0
  %v3406 = vadd.f32 %v3392, %v3405
  %v3407 = vpop.f32.mrf.mxu0
  %v3408 = vadd.f32 %v3394, %v3407
  %3409 = vdwg.mxu0
  %3410 = vmatpush.bf16.msra.mxu0 %v2283
  %3411 = vmatpush.bf16.msra.mxu0 %v2279
  %3412 = vmatpush.bf16.msra.mxu0 %v2275
  %3413 = vmatpush.bf16.msra.mxu0 %v2271
  %3414 = vmatpush.bf16.msra.mxu0 %v2267
  %3415 = vmatpush.bf16.msra.mxu0 %v2263
  %3416 = vmatpush.bf16.msra.mxu0 %v2259
  %3417 = vmatpush.bf16.msra.mxu0 %v2255
  %3418 = vmatmul.bf16.gmra.mxu0 %v599
  %v3419 = vpop.f32.mrf.mxu0
  %v3420 = vadd.f32 %v3406, %v3419
  %v3421 = vpop.f32.mrf.mxu0
  %v3422 = vadd.f32 %v3408, %v3421
  %3423 = vdwg.mxu0
  %3424 = vmatpush.bf16.msra.mxu0 %v2315
  %3425 = vmatpush.bf16.msra.mxu0 %v2311
  %3426 = vmatpush.bf16.msra.mxu0 %v2307
  %3427 = vmatpush.bf16.msra.mxu0 %v2303
  %3428 = vmatpush.bf16.msra.mxu0 %v2299
  %3429 = vmatpush.bf16.msra.mxu0 %v2295
  %3430 = vmatpush.bf16.msra.mxu0 %v2291
  %3431 = vmatpush.bf16.msra.mxu0 %v2287
  %3432 = vmatmul.bf16.gmra.mxu0 %v600
  %v3433 = vpop.f32.mrf.mxu0
  %v3434 = vadd.f32 %v3420, %v3433
  %v3435 = vpop.f32.mrf.mxu0
  %v3436 = vadd.f32 %v3422, %v3435
  %3437 = vdwg.mxu0
  %3438 = vmatpush.bf16.msra.mxu0 %v2347
  %3439 = vmatpush.bf16.msra.mxu0 %v2343
  %3440 = vmatpush.bf16.msra.mxu0 %v2339
  %3441 = vmatpush.bf16.msra.mxu0 %v2335
  %3442 = vmatpush.bf16.msra.mxu0 %v2331
  %3443 = vmatpush.bf16.msra.mxu0 %v2327
  %3444 = vmatpush.bf16.msra.mxu0 %v2323
  %3445 = vmatpush.bf16.msra.mxu0 %v2319
  %3446 = vmatmul.bf16.gmra.mxu0 %v601
  %v3447 = vpop.f32.mrf.mxu0
  %v3448 = vadd.f32 %v3434, %v3447
  %v3449 = vpop.f32.mrf.mxu0
  %v3450 = vadd.f32 %v3436, %v3449
  %3451 = vdwg.mxu0
  %3452 = vmatpush.bf16.msra.mxu0 %v2379
  %3453 = vmatpush.bf16.msra.mxu0 %v2375
  %3454 = vmatpush.bf16.msra.mxu0 %v2371
  %3455 = vmatpush.bf16.msra.mxu0 %v2367
  %3456 = vmatpush.bf16.msra.mxu0 %v2363
  %3457 = vmatpush.bf16.msra.mxu0 %v2359
  %3458 = vmatpush.bf16.msra.mxu0 %v2355
  %3459 = vmatpush.bf16.msra.mxu0 %v2351
  %3460 = vmatmul.bf16.gmra.mxu0 %v602
  %v3461 = vpop.f32.mrf.mxu0
  %v3462 = vadd.f32 %v3448, %v3461
  %v3463 = vpop.f32.mrf.mxu0
  %v3464 = vadd.f32 %v3450, %v3463
  %3465 = vdwg.mxu0
  %3466 = vmatpush.bf16.msra.mxu0 %v2411
  %3467 = vmatpush.bf16.msra.mxu0 %v2407
  %3468 = vmatpush.bf16.msra.mxu0 %v2403
  %3469 = vmatpush.bf16.msra.mxu0 %v2399
  %3470 = vmatpush.bf16.msra.mxu0 %v2395
  %3471 = vmatpush.bf16.msra.mxu0 %v2391
  %3472 = vmatpush.bf16.msra.mxu0 %v2387
  %3473 = vmatpush.bf16.msra.mxu0 %v2383
  %3474 = vmatmul.bf16.gmra.mxu0 %v603
  %v3475 = vpop.f32.mrf.mxu0
  %v3476 = vadd.f32 %v3462, %v3475
  %v3477 = vpop.f32.mrf.mxu0
  %v3478 = vadd.f32 %v3464, %v3477
  %3479 = vdwg.mxu0
  %3480 = vmatpush.bf16.msra.mxu0 %v2443
  %3481 = vmatpush.bf16.msra.mxu0 %v2439
  %3482 = vmatpush.bf16.msra.mxu0 %v2435
  %3483 = vmatpush.bf16.msra.mxu0 %v2431
  %3484 = vmatpush.bf16.msra.mxu0 %v2427
  %3485 = vmatpush.bf16.msra.mxu0 %v2423
  %3486 = vmatpush.bf16.msra.mxu0 %v2419
  %3487 = vmatpush.bf16.msra.mxu0 %v2415
  %3488 = vmatmul.bf16.gmra.mxu0 %v604
  %v3489 = vpop.f32.mrf.mxu0
  %v3490 = vadd.f32 %v3476, %v3489
  %v3491 = vpop.f32.mrf.mxu0
  %v3492 = vadd.f32 %v3478, %v3491
  %3493 = vdwg.mxu0
  %3494 = vmatpush.bf16.msra.mxu0 %v2475
  %3495 = vmatpush.bf16.msra.mxu0 %v2471
  %3496 = vmatpush.bf16.msra.mxu0 %v2467
  %3497 = vmatpush.bf16.msra.mxu0 %v2463
  %3498 = vmatpush.bf16.msra.mxu0 %v2459
  %3499 = vmatpush.bf16.msra.mxu0 %v2455
  %3500 = vmatpush.bf16.msra.mxu0 %v2451
  %3501 = vmatpush.bf16.msra.mxu0 %v2447
  %3502 = vmatmul.bf16.gmra.mxu0 %v605
  %v3503 = vpop.f32.mrf.mxu0
  %v3504 = vadd.f32 %v3490, %v3503
  %v3505 = vpop.f32.mrf.mxu0
  %v3506 = vadd.f32 %v3492, %v3505
  %3507 = vdwg.mxu0
  %3508 = vmatpush.bf16.msra.mxu0 %v2507
  %3509 = vmatpush.bf16.msra.mxu0 %v2503
  %3510 = vmatpush.bf16.msra.mxu0 %v2499
  %3511 = vmatpush.bf16.msra.mxu0 %v2495
  %3512 = vmatpush.bf16.msra.mxu0 %v2491
  %3513 = vmatpush.bf16.msra.mxu0 %v2487
  %3514 = vmatpush.bf16.msra.mxu0 %v2483
  %3515 = vmatpush.bf16.msra.mxu0 %v2479
  %3516 = vmatmul.bf16.gmra.mxu0 %v606
  %v3517 = vpop.f32.mrf.mxu0
  %v3518 = vadd.f32 %v3504, %v3517
  %v3519 = vpop.f32.mrf.mxu0
  %v3520 = vadd.f32 %v3506, %v3519
  %3521 = vdwg.mxu0
  %3522 = vmatpush.bf16.msra.mxu0 %v2539
  %3523 = vmatpush.bf16.msra.mxu0 %v2535
  %3524 = vmatpush.bf16.msra.mxu0 %v2531
  %3525 = vmatpush.bf16.msra.mxu0 %v2527
  %3526 = vmatpush.bf16.msra.mxu0 %v2523
  %3527 = vmatpush.bf16.msra.mxu0 %v2519
  %3528 = vmatpush.bf16.msra.mxu0 %v2515
  %3529 = vmatpush.bf16.msra.mxu0 %v2511
  %3530 = vmatmul.bf16.gmra.mxu0 %v607
  %v3531 = vpop.f32.mrf.mxu0
  %v3532 = vadd.f32 %v3518, %v3531
  %v3533 = vpop.f32.mrf.mxu0
  %v3534 = vadd.f32 %v3520, %v3533
  %3535 = vdwg.mxu0
  %3536 = vmatpush.bf16.msra.mxu0 %v2571
  %3537 = vmatpush.bf16.msra.mxu0 %v2567
  %3538 = vmatpush.bf16.msra.mxu0 %v2563
  %3539 = vmatpush.bf16.msra.mxu0 %v2559
  %3540 = vmatpush.bf16.msra.mxu0 %v2555
  %3541 = vmatpush.bf16.msra.mxu0 %v2551
  %3542 = vmatpush.bf16.msra.mxu0 %v2547
  %3543 = vmatpush.bf16.msra.mxu0 %v2543
  %3544 = vmatmul.bf16.gmra.mxu0 %v608
  %v3545 = vpop.f32.mrf.mxu0
  %v3546 = vadd.f32 %v3532, %v3545
  %v3547 = vpop.f32.mrf.mxu0
  %v3548 = vadd.f32 %v3534, %v3547
  %3549 = vdwg.mxu0
  %3550 = vmatpush.bf16.msra.mxu0 %v2603
  %3551 = vmatpush.bf16.msra.mxu0 %v2599
  %3552 = vmatpush.bf16.msra.mxu0 %v2595
  %3553 = vmatpush.bf16.msra.mxu0 %v2591
  %3554 = vmatpush.bf16.msra.mxu0 %v2587
  %3555 = vmatpush.bf16.msra.mxu0 %v2583
  %3556 = vmatpush.bf16.msra.mxu0 %v2579
  %3557 = vmatpush.bf16.msra.mxu0 %v2575
  %3558 = vmatmul.bf16.gmra.mxu0 %v609
  %v3559 = vpop.f32.mrf.mxu0
  %v3560 = vadd.f32 %v3546, %v3559
  %v3561 = vpop.f32.mrf.mxu0
  %v3562 = vadd.f32 %v3548, %v3561
  %3563 = vdwg.mxu0
  %3564 = vmatpush.bf16.msra.mxu0 0
  %3565 = vmatpush.bf16.msra.mxu0 0
  %3566 = vmatpush.bf16.msra.mxu0 0
  %3567 = vmatpush.bf16.msra.mxu0 %v2623
  %3568 = vmatpush.bf16.msra.mxu0 %v2619
  %3569 = vmatpush.bf16.msra.mxu0 %v2615
  %3570 = vmatpush.bf16.msra.mxu0 %v2611
  %3571 = vmatpush.bf16.msra.mxu0 %v2607
  %3572 = vmatmul.bf16.gmra.mxu0 %v3128
  %v3573 = vpop.f32.mrf.mxu0
  %v3574 = vadd.f32 %v3560, %v3573
  %v3575 = vpop.f32.mrf.mxu0
  %v3576 = vadd.f32 %v3562, %v3575
  %3577 = vdwg.mxu0
  %3578 = vmatpush.bf16.msra.mxu0 %v2156
  %3579 = vmatpush.bf16.msra.mxu0 %v2152
  %3580 = vmatpush.bf16.msra.mxu0 %v2148
  %3581 = vmatpush.bf16.msra.mxu0 %v2144
  %3582 = vmatpush.bf16.msra.mxu0 %v2140
  %3583 = vmatpush.bf16.msra.mxu0 %v2136
  %3584 = vmatpush.bf16.msra.mxu0 %v2132
  %3585 = vmatpush.bf16.msra.mxu0 %v2128
  %3586 = vmatmul.bf16.gmra.mxu0 %v595
  %v3587 = vpop.f32.mrf.mxu0
  %v3588 = vadd.f32 %v541, %v3587
  %v3589 = vpop.f32.mrf.mxu0
  %v3590 = vadd.f32 %v541, %v3589
  %3591 = vdwg.mxu0
  %3592 = vmatpush.bf16.msra.mxu0 %v2188
  %3593 = vmatpush.bf16.msra.mxu0 %v2184
  %3594 = vmatpush.bf16.msra.mxu0 %v2180
  %3595 = vmatpush.bf16.msra.mxu0 %v2176
  %3596 = vmatpush.bf16.msra.mxu0 %v2172
  %3597 = vmatpush.bf16.msra.mxu0 %v2168
  %3598 = vmatpush.bf16.msra.mxu0 %v2164
  %3599 = vmatpush.bf16.msra.mxu0 %v2160
  %3600 = vmatmul.bf16.gmra.mxu0 %v596
  %v3601 = vpop.f32.mrf.mxu0
  %v3602 = vadd.f32 %v3588, %v3601
  %v3603 = vpop.f32.mrf.mxu0
  %v3604 = vadd.f32 %v3590, %v3603
  %3605 = vdwg.mxu0
  %3606 = vmatpush.bf16.msra.mxu0 %v2220
  %3607 = vmatpush.bf16.msra.mxu0 %v2216
  %3608 = vmatpush.bf16.msra.mxu0 %v2212
  %3609 = vmatpush.bf16.msra.mxu0 %v2208
  %3610 = vmatpush.bf16.msra.mxu0 %v2204
  %3611 = vmatpush.bf16.msra.mxu0 %v2200
  %3612 = vmatpush.bf16.msra.mxu0 %v2196
  %3613 = vmatpush.bf16.msra.mxu0 %v2192
  %3614 = vmatmul.bf16.gmra.mxu0 %v597
  %v3615 = vpop.f32.mrf.mxu0
  %v3616 = vadd.f32 %v3602, %v3615
  %v3617 = vpop.f32.mrf.mxu0
  %v3618 = vadd.f32 %v3604, %v3617
  %3619 = vdwg.mxu0
  %3620 = vmatpush.bf16.msra.mxu0 %v2252
  %3621 = vmatpush.bf16.msra.mxu0 %v2248
  %3622 = vmatpush.bf16.msra.mxu0 %v2244
  %3623 = vmatpush.bf16.msra.mxu0 %v2240
  %3624 = vmatpush.bf16.msra.mxu0 %v2236
  %3625 = vmatpush.bf16.msra.mxu0 %v2232
  %3626 = vmatpush.bf16.msra.mxu0 %v2228
  %3627 = vmatpush.bf16.msra.mxu0 %v2224
  %3628 = vmatmul.bf16.gmra.mxu0 %v598
  %v3629 = vpop.f32.mrf.mxu0
  %v3630 = vadd.f32 %v3616, %v3629
  %v3631 = vpop.f32.mrf.mxu0
  %v3632 = vadd.f32 %v3618, %v3631
  %3633 = vdwg.mxu0
  %3634 = vmatpush.bf16.msra.mxu0 %v2284
  %3635 = vmatpush.bf16.msra.mxu0 %v2280
  %3636 = vmatpush.bf16.msra.mxu0 %v2276
  %3637 = vmatpush.bf16.msra.mxu0 %v2272
  %3638 = vmatpush.bf16.msra.mxu0 %v2268
  %3639 = vmatpush.bf16.msra.mxu0 %v2264
  %3640 = vmatpush.bf16.msra.mxu0 %v2260
  %3641 = vmatpush.bf16.msra.mxu0 %v2256
  %3642 = vmatmul.bf16.gmra.mxu0 %v599
  %v3643 = vpop.f32.mrf.mxu0
  %v3644 = vadd.f32 %v3630, %v3643
  %v3645 = vpop.f32.mrf.mxu0
  %v3646 = vadd.f32 %v3632, %v3645
  %3647 = vdwg.mxu0
  %3648 = vmatpush.bf16.msra.mxu0 %v2316
  %3649 = vmatpush.bf16.msra.mxu0 %v2312
  %3650 = vmatpush.bf16.msra.mxu0 %v2308
  %3651 = vmatpush.bf16.msra.mxu0 %v2304
  %3652 = vmatpush.bf16.msra.mxu0 %v2300
  %3653 = vmatpush.bf16.msra.mxu0 %v2296
  %3654 = vmatpush.bf16.msra.mxu0 %v2292
  %3655 = vmatpush.bf16.msra.mxu0 %v2288
  %3656 = vmatmul.bf16.gmra.mxu0 %v600
  %v3657 = vpop.f32.mrf.mxu0
  %v3658 = vadd.f32 %v3644, %v3657
  %v3659 = vpop.f32.mrf.mxu0
  %v3660 = vadd.f32 %v3646, %v3659
  %3661 = vdwg.mxu0
  %3662 = vmatpush.bf16.msra.mxu0 %v2348
  %3663 = vmatpush.bf16.msra.mxu0 %v2344
  %3664 = vmatpush.bf16.msra.mxu0 %v2340
  %3665 = vmatpush.bf16.msra.mxu0 %v2336
  %3666 = vmatpush.bf16.msra.mxu0 %v2332
  %3667 = vmatpush.bf16.msra.mxu0 %v2328
  %3668 = vmatpush.bf16.msra.mxu0 %v2324
  %3669 = vmatpush.bf16.msra.mxu0 %v2320
  %3670 = vmatmul.bf16.gmra.mxu0 %v601
  %v3671 = vpop.f32.mrf.mxu0
  %v3672 = vadd.f32 %v3658, %v3671
  %v3673 = vpop.f32.mrf.mxu0
  %v3674 = vadd.f32 %v3660, %v3673
  %3675 = vdwg.mxu0
  %3676 = vmatpush.bf16.msra.mxu0 %v2380
  %3677 = vmatpush.bf16.msra.mxu0 %v2376
  %3678 = vmatpush.bf16.msra.mxu0 %v2372
  %3679 = vmatpush.bf16.msra.mxu0 %v2368
  %3680 = vmatpush.bf16.msra.mxu0 %v2364
  %3681 = vmatpush.bf16.msra.mxu0 %v2360
  %3682 = vmatpush.bf16.msra.mxu0 %v2356
  %3683 = vmatpush.bf16.msra.mxu0 %v2352
  %3684 = vmatmul.bf16.gmra.mxu0 %v602
  %v3685 = vpop.f32.mrf.mxu0
  %v3686 = vadd.f32 %v3672, %v3685
  %v3687 = vpop.f32.mrf.mxu0
  %v3688 = vadd.f32 %v3674, %v3687
  %3689 = vdwg.mxu0
  %3690 = vmatpush.bf16.msra.mxu0 %v2412
  %3691 = vmatpush.bf16.msra.mxu0 %v2408
  %3692 = vmatpush.bf16.msra.mxu0 %v2404
  %3693 = vmatpush.bf16.msra.mxu0 %v2400
  %3694 = vmatpush.bf16.msra.mxu0 %v2396
  %3695 = vmatpush.bf16.msra.mxu0 %v2392
  %3696 = vmatpush.bf16.msra.mxu0 %v2388
  %3697 = vmatpush.bf16.msra.mxu0 %v2384
  %3698 = vmatmul.bf16.gmra.mxu0 %v603
  %v3699 = vpop.f32.mrf.mxu0
  %v3700 = vadd.f32 %v3686, %v3699
  %v3701 = vpop.f32.mrf.mxu0
  %v3702 = vadd.f32 %v3688, %v3701
  %3703 = vdwg.mxu0
  %3704 = vmatpush.bf16.msra.mxu0 %v2444
  %3705 = vmatpush.bf16.msra.mxu0 %v2440
  %3706 = vmatpush.bf16.msra.mxu0 %v2436
  %3707 = vmatpush.bf16.msra.mxu0 %v2432
  %3708 = vmatpush.bf16.msra.mxu0 %v2428
  %3709 = vmatpush.bf16.msra.mxu0 %v2424
  %3710 = vmatpush.bf16.msra.mxu0 %v2420
  %3711 = vmatpush.bf16.msra.mxu0 %v2416
  %3712 = vmatmul.bf16.gmra.mxu0 %v604
  %v3713 = vpop.f32.mrf.mxu0
  %v3714 = vadd.f32 %v3700, %v3713
  %v3715 = vpop.f32.mrf.mxu0
  %v3716 = vadd.f32 %v3702, %v3715
  %3717 = vdwg.mxu0
  %3718 = vmatpush.bf16.msra.mxu0 %v2476
  %3719 = vmatpush.bf16.msra.mxu0 %v2472
  %3720 = vmatpush.bf16.msra.mxu0 %v2468
  %3721 = vmatpush.bf16.msra.mxu0 %v2464
  %3722 = vmatpush.bf16.msra.mxu0 %v2460
  %3723 = vmatpush.bf16.msra.mxu0 %v2456
  %3724 = vmatpush.bf16.msra.mxu0 %v2452
  %3725 = vmatpush.bf16.msra.mxu0 %v2448
  %3726 = vmatmul.bf16.gmra.mxu0 %v605
  %v3727 = vpop.f32.mrf.mxu0
  %v3728 = vadd.f32 %v3714, %v3727
  %v3729 = vpop.f32.mrf.mxu0
  %v3730 = vadd.f32 %v3716, %v3729
  %3731 = vdwg.mxu0
  %3732 = vmatpush.bf16.msra.mxu0 %v2508
  %3733 = vmatpush.bf16.msra.mxu0 %v2504
  %3734 = vmatpush.bf16.msra.mxu0 %v2500
  %3735 = vmatpush.bf16.msra.mxu0 %v2496
  %3736 = vmatpush.bf16.msra.mxu0 %v2492
  %3737 = vmatpush.bf16.msra.mxu0 %v2488
  %3738 = vmatpush.bf16.msra.mxu0 %v2484
  %3739 = vmatpush.bf16.msra.mxu0 %v2480
  %3740 = vmatmul.bf16.gmra.mxu0 %v606
  %v3741 = vpop.f32.mrf.mxu0
  %v3742 = vadd.f32 %v3728, %v3741
  %v3743 = vpop.f32.mrf.mxu0
  %v3744 = vadd.f32 %v3730, %v3743
  %3745 = vdwg.mxu0
  %3746 = vmatpush.bf16.msra.mxu0 %v2540
  %3747 = vmatpush.bf16.msra.mxu0 %v2536
  %3748 = vmatpush.bf16.msra.mxu0 %v2532
  %3749 = vmatpush.bf16.msra.mxu0 %v2528
  %3750 = vmatpush.bf16.msra.mxu0 %v2524
  %3751 = vmatpush.bf16.msra.mxu0 %v2520
  %3752 = vmatpush.bf16.msra.mxu0 %v2516
  %3753 = vmatpush.bf16.msra.mxu0 %v2512
  %3754 = vmatmul.bf16.gmra.mxu0 %v607
  %v3755 = vpop.f32.mrf.mxu0
  %v3756 = vadd.f32 %v3742, %v3755
  %v3757 = vpop.f32.mrf.mxu0
  %v3758 = vadd.f32 %v3744, %v3757
  %3759 = vdwg.mxu0
  %3760 = vmatpush.bf16.msra.mxu0 %v2572
  %3761 = vmatpush.bf16.msra.mxu0 %v2568
  %3762 = vmatpush.bf16.msra.mxu0 %v2564
  %3763 = vmatpush.bf16.msra.mxu0 %v2560
  %3764 = vmatpush.bf16.msra.mxu0 %v2556
  %3765 = vmatpush.bf16.msra.mxu0 %v2552
  %3766 = vmatpush.bf16.msra.mxu0 %v2548
  %3767 = vmatpush.bf16.msra.mxu0 %v2544
  %3768 = vmatmul.bf16.gmra.mxu0 %v608
  %v3769 = vpop.f32.mrf.mxu0
  %v3770 = vadd.f32 %v3756, %v3769
  %v3771 = vpop.f32.mrf.mxu0
  %v3772 = vadd.f32 %v3758, %v3771
  %3773 = vdwg.mxu0
  %3774 = vmatpush.bf16.msra.mxu0 %v2604
  %3775 = vmatpush.bf16.msra.mxu0 %v2600
  %3776 = vmatpush.bf16.msra.mxu0 %v2596
  %3777 = vmatpush.bf16.msra.mxu0 %v2592
  %3778 = vmatpush.bf16.msra.mxu0 %v2588
  %3779 = vmatpush.bf16.msra.mxu0 %v2584
  %3780 = vmatpush.bf16.msra.mxu0 %v2580
  %3781 = vmatpush.bf16.msra.mxu0 %v2576
  %3782 = vmatmul.bf16.gmra.mxu0 %v609
  %v3783 = vpop.f32.mrf.mxu0
  %v3784 = vadd.f32 %v3770, %v3783
  %v3785 = vpop.f32.mrf.mxu0
  %v3786 = vadd.f32 %v3772, %v3785
  %3787 = vdwg.mxu0
  %3788 = vmatpush.bf16.msra.mxu0 0
  %3789 = vmatpush.bf16.msra.mxu0 0
  %3790 = vmatpush.bf16.msra.mxu0 0
  %3791 = vmatpush.bf16.msra.mxu0 %v2624
  %3792 = vmatpush.bf16.msra.mxu0 %v2620
  %3793 = vmatpush.bf16.msra.mxu0 %v2616
  %3794 = vmatpush.bf16.msra.mxu0 %v2612
  %3795 = vmatpush.bf16.msra.mxu0 %v2608
  %3796 = vmatmul.bf16.gmra.mxu0 %v3128
  %v3797 = vpop.f32.mrf.mxu0
  %v3798 = vadd.f32 %v3784, %v3797
  %v3799 = vpop.f32.mrf.mxu0
  %v3800 = vadd.f32 %v3786, %v3799
  %3801 = vdwg.mxu0
  %3802 = vmatpush.bf16.msra.mxu0 %v2157
  %3803 = vmatpush.bf16.msra.mxu0 %v2153
  %3804 = vmatpush.bf16.msra.mxu0 %v2149
  %3805 = vmatpush.bf16.msra.mxu0 %v2145
  %3806 = vmatpush.bf16.msra.mxu0 %v2141
  %3807 = vmatpush.bf16.msra.mxu0 %v2137
  %3808 = vmatpush.bf16.msra.mxu0 %v2133
  %3809 = vmatpush.bf16.msra.mxu0 %v2129
  %3810 = vmatmul.bf16.gmra.mxu0 %v595
  %v3811 = vpop.f32.mrf.mxu0
  %v3812 = vadd.f32 %v542, %v3811
  %v3813 = vpop.f32.mrf.mxu0
  %v3814 = vadd.f32 %v542, %v3813
  %3815 = vdwg.mxu0
  %3816 = vmatpush.bf16.msra.mxu0 %v2189
  %3817 = vmatpush.bf16.msra.mxu0 %v2185
  %3818 = vmatpush.bf16.msra.mxu0 %v2181
  %3819 = vmatpush.bf16.msra.mxu0 %v2177
  %3820 = vmatpush.bf16.msra.mxu0 %v2173
  %3821 = vmatpush.bf16.msra.mxu0 %v2169
  %3822 = vmatpush.bf16.msra.mxu0 %v2165
  %3823 = vmatpush.bf16.msra.mxu0 %v2161
  %3824 = vmatmul.bf16.gmra.mxu0 %v596
  %v3825 = vpop.f32.mrf.mxu0
  %v3826 = vadd.f32 %v3812, %v3825
  %v3827 = vpop.f32.mrf.mxu0
  %v3828 = vadd.f32 %v3814, %v3827
  %3829 = vdwg.mxu0
  %3830 = vmatpush.bf16.msra.mxu0 %v2221
  %3831 = vmatpush.bf16.msra.mxu0 %v2217
  %3832 = vmatpush.bf16.msra.mxu0 %v2213
  %3833 = vmatpush.bf16.msra.mxu0 %v2209
  %3834 = vmatpush.bf16.msra.mxu0 %v2205
  %3835 = vmatpush.bf16.msra.mxu0 %v2201
  %3836 = vmatpush.bf16.msra.mxu0 %v2197
  %3837 = vmatpush.bf16.msra.mxu0 %v2193
  %3838 = vmatmul.bf16.gmra.mxu0 %v597
  %v3839 = vpop.f32.mrf.mxu0
  %v3840 = vadd.f32 %v3826, %v3839
  %v3841 = vpop.f32.mrf.mxu0
  %v3842 = vadd.f32 %v3828, %v3841
  %3843 = vdwg.mxu0
  %3844 = vmatpush.bf16.msra.mxu0 %v2253
  %3845 = vmatpush.bf16.msra.mxu0 %v2249
  %3846 = vmatpush.bf16.msra.mxu0 %v2245
  %3847 = vmatpush.bf16.msra.mxu0 %v2241
  %3848 = vmatpush.bf16.msra.mxu0 %v2237
  %3849 = vmatpush.bf16.msra.mxu0 %v2233
  %3850 = vmatpush.bf16.msra.mxu0 %v2229
  %3851 = vmatpush.bf16.msra.mxu0 %v2225
  %3852 = vmatmul.bf16.gmra.mxu0 %v598
  %v3853 = vpop.f32.mrf.mxu0
  %v3854 = vadd.f32 %v3840, %v3853
  %v3855 = vpop.f32.mrf.mxu0
  %v3856 = vadd.f32 %v3842, %v3855
  %3857 = vdwg.mxu0
  %3858 = vmatpush.bf16.msra.mxu0 %v2285
  %3859 = vmatpush.bf16.msra.mxu0 %v2281
  %3860 = vmatpush.bf16.msra.mxu0 %v2277
  %3861 = vmatpush.bf16.msra.mxu0 %v2273
  %3862 = vmatpush.bf16.msra.mxu0 %v2269
  %3863 = vmatpush.bf16.msra.mxu0 %v2265
  %3864 = vmatpush.bf16.msra.mxu0 %v2261
  %3865 = vmatpush.bf16.msra.mxu0 %v2257
  %3866 = vmatmul.bf16.gmra.mxu0 %v599
  %v3867 = vpop.f32.mrf.mxu0
  %v3868 = vadd.f32 %v3854, %v3867
  %v3869 = vpop.f32.mrf.mxu0
  %v3870 = vadd.f32 %v3856, %v3869
  %3871 = vdwg.mxu0
  %3872 = vmatpush.bf16.msra.mxu0 %v2317
  %3873 = vmatpush.bf16.msra.mxu0 %v2313
  %3874 = vmatpush.bf16.msra.mxu0 %v2309
  %3875 = vmatpush.bf16.msra.mxu0 %v2305
  %3876 = vmatpush.bf16.msra.mxu0 %v2301
  %3877 = vmatpush.bf16.msra.mxu0 %v2297
  %3878 = vmatpush.bf16.msra.mxu0 %v2293
  %3879 = vmatpush.bf16.msra.mxu0 %v2289
  %3880 = vmatmul.bf16.gmra.mxu0 %v600
  %v3881 = vpop.f32.mrf.mxu0
  %v3882 = vadd.f32 %v3868, %v3881
  %v3883 = vpop.f32.mrf.mxu0
  %v3884 = vadd.f32 %v3870, %v3883
  %3885 = vdwg.mxu0
  %3886 = vmatpush.bf16.msra.mxu0 %v2349
  %3887 = vmatpush.bf16.msra.mxu0 %v2345
  %3888 = vmatpush.bf16.msra.mxu0 %v2341
  %3889 = vmatpush.bf16.msra.mxu0 %v2337
  %3890 = vmatpush.bf16.msra.mxu0 %v2333
  %3891 = vmatpush.bf16.msra.mxu0 %v2329
  %3892 = vmatpush.bf16.msra.mxu0 %v2325
  %3893 = vmatpush.bf16.msra.mxu0 %v2321
  %3894 = vmatmul.bf16.gmra.mxu0 %v601
  %v3895 = vpop.f32.mrf.mxu0
  %v3896 = vadd.f32 %v3882, %v3895
  %v3897 = vpop.f32.mrf.mxu0
  %v3898 = vadd.f32 %v3884, %v3897
  %3899 = vdwg.mxu0
  %3900 = vmatpush.bf16.msra.mxu0 %v2381
  %3901 = vmatpush.bf16.msra.mxu0 %v2377
  %3902 = vmatpush.bf16.msra.mxu0 %v2373
  %3903 = vmatpush.bf16.msra.mxu0 %v2369
  %3904 = vmatpush.bf16.msra.mxu0 %v2365
  %3905 = vmatpush.bf16.msra.mxu0 %v2361
  %3906 = vmatpush.bf16.msra.mxu0 %v2357
  %3907 = vmatpush.bf16.msra.mxu0 %v2353
  %3908 = vmatmul.bf16.gmra.mxu0 %v602
  %v3909 = vpop.f32.mrf.mxu0
  %v3910 = vadd.f32 %v3896, %v3909
  %v3911 = vpop.f32.mrf.mxu0
  %v3912 = vadd.f32 %v3898, %v3911
  %3913 = vdwg.mxu0
  %3914 = vmatpush.bf16.msra.mxu0 %v2413
  %3915 = vmatpush.bf16.msra.mxu0 %v2409
  %3916 = vmatpush.bf16.msra.mxu0 %v2405
  %3917 = vmatpush.bf16.msra.mxu0 %v2401
  %3918 = vmatpush.bf16.msra.mxu0 %v2397
  %3919 = vmatpush.bf16.msra.mxu0 %v2393
  %3920 = vmatpush.bf16.msra.mxu0 %v2389
  %3921 = vmatpush.bf16.msra.mxu0 %v2385
  %3922 = vmatmul.bf16.gmra.mxu0 %v603
  %v3923 = vpop.f32.mrf.mxu0
  %v3924 = vadd.f32 %v3910, %v3923
  %v3925 = vpop.f32.mrf.mxu0
  %v3926 = vadd.f32 %v3912, %v3925
  %3927 = vdwg.mxu0
  %3928 = vmatpush.bf16.msra.mxu0 %v2445
  %3929 = vmatpush.bf16.msra.mxu0 %v2441
  %3930 = vmatpush.bf16.msra.mxu0 %v2437
  %3931 = vmatpush.bf16.msra.mxu0 %v2433
  %3932 = vmatpush.bf16.msra.mxu0 %v2429
  %3933 = vmatpush.bf16.msra.mxu0 %v2425
  %3934 = vmatpush.bf16.msra.mxu0 %v2421
  %3935 = vmatpush.bf16.msra.mxu0 %v2417
  %3936 = vmatmul.bf16.gmra.mxu0 %v604
  %v3937 = vpop.f32.mrf.mxu0
  %v3938 = vadd.f32 %v3924, %v3937
  %v3939 = vpop.f32.mrf.mxu0
  %v3940 = vadd.f32 %v3926, %v3939
  %3941 = vdwg.mxu0
  %3942 = vmatpush.bf16.msra.mxu0 %v2477
  %3943 = vmatpush.bf16.msra.mxu0 %v2473
  %3944 = vmatpush.bf16.msra.mxu0 %v2469
  %3945 = vmatpush.bf16.msra.mxu0 %v2465
  %3946 = vmatpush.bf16.msra.mxu0 %v2461
  %3947 = vmatpush.bf16.msra.mxu0 %v2457
  %3948 = vmatpush.bf16.msra.mxu0 %v2453
  %3949 = vmatpush.bf16.msra.mxu0 %v2449
  %3950 = vmatmul.bf16.gmra.mxu0 %v605
  %v3951 = vpop.f32.mrf.mxu0
  %v3952 = vadd.f32 %v3938, %v3951
  %v3953 = vpop.f32.mrf.mxu0
  %v3954 = vadd.f32 %v3940, %v3953
  %3955 = vdwg.mxu0
  %3956 = vmatpush.bf16.msra.mxu0 %v2509
  %3957 = vmatpush.bf16.msra.mxu0 %v2505
  %3958 = vmatpush.bf16.msra.mxu0 %v2501
  %3959 = vmatpush.bf16.msra.mxu0 %v2497
  %3960 = vmatpush.bf16.msra.mxu0 %v2493
  %3961 = vmatpush.bf16.msra.mxu0 %v2489
  %3962 = vmatpush.bf16.msra.mxu0 %v2485
  %3963 = vmatpush.bf16.msra.mxu0 %v2481
  %3964 = vmatmul.bf16.gmra.mxu0 %v606
  %v3965 = vpop.f32.mrf.mxu0
  %v3966 = vadd.f32 %v3952, %v3965
  %v3967 = vpop.f32.mrf.mxu0
  %v3968 = vadd.f32 %v3954, %v3967
  %3969 = vdwg.mxu0
  %3970 = vmatpush.bf16.msra.mxu0 %v2541
  %3971 = vmatpush.bf16.msra.mxu0 %v2537
  %3972 = vmatpush.bf16.msra.mxu0 %v2533
  %3973 = vmatpush.bf16.msra.mxu0 %v2529
  %3974 = vmatpush.bf16.msra.mxu0 %v2525
  %3975 = vmatpush.bf16.msra.mxu0 %v2521
  %3976 = vmatpush.bf16.msra.mxu0 %v2517
  %3977 = vmatpush.bf16.msra.mxu0 %v2513
  %3978 = vmatmul.bf16.gmra.mxu0 %v607
  %v3979 = vpop.f32.mrf.mxu0
  %v3980 = vadd.f32 %v3966, %v3979
  %v3981 = vpop.f32.mrf.mxu0
  %v3982 = vadd.f32 %v3968, %v3981
  %3983 = vdwg.mxu0
  %3984 = vmatpush.bf16.msra.mxu0 %v2573
  %3985 = vmatpush.bf16.msra.mxu0 %v2569
  %3986 = vmatpush.bf16.msra.mxu0 %v2565
  %3987 = vmatpush.bf16.msra.mxu0 %v2561
  %3988 = vmatpush.bf16.msra.mxu0 %v2557
  %3989 = vmatpush.bf16.msra.mxu0 %v2553
  %3990 = vmatpush.bf16.msra.mxu0 %v2549
  %3991 = vmatpush.bf16.msra.mxu0 %v2545
  %3992 = vmatmul.bf16.gmra.mxu0 %v608
  %v3993 = vpop.f32.mrf.mxu0
  %v3994 = vadd.f32 %v3980, %v3993
  %v3995 = vpop.f32.mrf.mxu0
  %v3996 = vadd.f32 %v3982, %v3995
  %3997 = vdwg.mxu0
  %3998 = vmatpush.bf16.msra.mxu0 %v2605
  %3999 = vmatpush.bf16.msra.mxu0 %v2601
  %4000 = vmatpush.bf16.msra.mxu0 %v2597
  %4001 = vmatpush.bf16.msra.mxu0 %v2593
  %4002 = vmatpush.bf16.msra.mxu0 %v2589
  %4003 = vmatpush.bf16.msra.mxu0 %v2585
  %4004 = vmatpush.bf16.msra.mxu0 %v2581
  %4005 = vmatpush.bf16.msra.mxu0 %v2577
  %4006 = vmatmul.bf16.gmra.mxu0 %v609
  %v4007 = vpop.f32.mrf.mxu0
  %v4008 = vadd.f32 %v3994, %v4007
  %v4009 = vpop.f32.mrf.mxu0
  %v4010 = vadd.f32 %v3996, %v4009
  %4011 = vdwg.mxu0
  %4012 = vmatpush.bf16.msra.mxu0 0
  %4013 = vmatpush.bf16.msra.mxu0 0
  %4014 = vmatpush.bf16.msra.mxu0 0
  %4015 = vmatpush.bf16.msra.mxu0 %v2625
  %4016 = vmatpush.bf16.msra.mxu0 %v2621
  %4017 = vmatpush.bf16.msra.mxu0 %v2617
  %4018 = vmatpush.bf16.msra.mxu0 %v2613
  %4019 = vmatpush.bf16.msra.mxu0 %v2609
  %4020 = vmatmul.bf16.gmra.mxu0 %v3128
  %v4021 = vpop.f32.mrf.mxu0
  %v4022 = vadd.f32 %v4008, %v4021
  %v4023 = vpop.f32.mrf.mxu0
  %v4024 = vadd.f32 %v4010, %v4023
  %4025 = vdwg.mxu0
  %v4026 = vmax.f32 %v3350, 0.0
  %v4027 = vmax.f32 %v3574, 0.0
  %v4028 = vmax.f32 %v3798, 0.0
  %v4029 = vmax.f32 %v4022, 0.0
  %v4030 = vmax.f32 %v3352, 0.0
  %v4031 = vmax.f32 %v3576, 0.0
  %v4032 = vmax.f32 %v3800, 0.0
  %v4033 = vmax.f32 %v4024, 0.0
  %v4034 = vld [vmem:[%s3] sm:$0xff]
  %v4035 = vld [vmem:[%s3 + $0x8] sm:$0xff]
  %v4036 = vld [vmem:[%s3 + $0x10] sm:$0xff]
  %v4037 = vld [vmem:[%s3 + $0x18] sm:$0xff]
  %v4038 = vld [vmem:[%s3 + $0x20] sm:$0xff]
  %v4039 = vld [vmem:[%s3 + $0x28] sm:$0xff]
  %v4040 = vld [vmem:[%s3 + $0x30] sm:$0xff]
  %v4041 = vld [vmem:[%s3 + $0x38] sm:$0xff]
  %v4042 = vld [vmem:[%s3 + $0x40] sm:$0xff]
  %v4043 = vld [vmem:[%s3 + $0x48] sm:$0xff]
  %v4044 = vld [vmem:[%s3 + $0x50] sm:$0xff]
  %v4045 = vld [vmem:[%s3 + $0x58] sm:$0xff]
  %v4046 = vld [vmem:[%s3 + $0x60] sm:$0xff]
  %v4047 = vld [vmem:[%s3 + $0x68] sm:$0xff]
  %v4048 = vld [vmem:[%s3 + $0x70] sm:$0xff]
  %v4049 = vld [vmem:[%s3 + $0x78] sm:$0xff]
  %v4050 = vld [vmem:[%s3 + $0x80] sm:$0xff]
  %v4051 = vld [vmem:[%s3 + $0x88] sm:$0xff]
  %v4052 = vld [vmem:[%s3 + $0x90] sm:$0xff]
  %v4053 = vld [vmem:[%s3 + $0x98] sm:$0xff]
  %v4054 = vld [vmem:[%s3 + $0xa0] sm:$0xff]
  %v4055 = vld [vmem:[%s3 + $0xa8] sm:$0xff]
  %v4056 = vld [vmem:[%s3 + $0xb0] sm:$0xff]
  %v4057 = vld [vmem:[%s3 + $0xb8] sm:$0xff]
  %v4058 = vld [vmem:[%s3 + $0xc0] sm:$0xff]
  %v4059 = vld [vmem:[%s3 + $0xc8] sm:$0xff]
  %v4060 = vld [vmem:[%s3 + $0xd0] sm:$0xff]
  %v4061 = vld [vmem:[%s3 + $0xd8] sm:$0xff]
  %v4062 = vld [vmem:[%s3 + $0xe0] sm:$0xff]
  %v4063 = vld [vmem:[%s3 + $0xe8] sm:$0xff]
  %v4064 = vld [vmem:[%s3 + $0xf0] sm:$0xff]
  %v4065 = vld [vmem:[%s3 + $0xf8] sm:$0xff]
  %v4066 = vld [vmem:[%s3 + $0x100] sm:$0xff]
  %v4067 = vld [vmem:[%s3 + $0x108] sm:$0xff]
  %v4068 = vld [vmem:[%s3 + $0x110] sm:$0xff]
  %v4069 = vld [vmem:[%s3 + $0x118] sm:$0xff]
  %v4070 = vld [vmem:[%s3 + $0x120] sm:$0xff]
  %v4071 = vld [vmem:[%s3 + $0x128] sm:$0xff]
  %v4072 = vld [vmem:[%s3 + $0x130] sm:$0xff]
  %v4073 = vld [vmem:[%s3 + $0x138] sm:$0xff]
  %v4074 = vld [vmem:[%s3 + $0x140] sm:$0xff]
  %v4075 = vld [vmem:[%s3 + $0x148] sm:$0xff]
  %v4076 = vld [vmem:[%s3 + $0x150] sm:$0xff]
  %v4077 = vld [vmem:[%s3 + $0x158] sm:$0xff]
  %v4078 = vld [vmem:[%s3 + $0x160] sm:$0xff]
  %v4079 = vld [vmem:[%s3 + $0x168] sm:$0xff]
  %v4080 = vld [vmem:[%s3 + $0x170] sm:$0xff]
  %v4081 = vld [vmem:[%s3 + $0x178] sm:$0xff]
  %v4082 = vld [vmem:[%s3 + $0x180] sm:$0xff]
  %v4083 = vld [vmem:[%s3 + $0x188] sm:$0xff]
  %v4084 = vld [vmem:[%s3 + $0x190] sm:$0xff]
  %v4085 = vld [vmem:[%s3 + $0x198] sm:$0xff]
  %v4086 = vld [vmem:[%s3 + $0x1a0] sm:$0xff]
  %v4087 = vld [vmem:[%s3 + $0x1a8] sm:$0xff]
  %v4088 = vld [vmem:[%s3 + $0x1b0] sm:$0xff]
  %v4089 = vld [vmem:[%s3 + $0x1b8] sm:$0xff]
  %v4090 = vld [vmem:[%s3 + $0x1c0] sm:$0xff]
  %v4091 = vld [vmem:[%s3 + $0x1c8] sm:$0xff]
  %v4092 = vld [vmem:[%s3 + $0x1d0] sm:$0xff]
  %v4093 = vld [vmem:[%s3 + $0x1d8] sm:$0xff]
  %v4094 = vld [vmem:[%s3 + $0x1e0] sm:$0xff]
  %v4095 = vld [vmem:[%s3 + $0x1e8] sm:$0xff]
  %v4096 = vld [vmem:[%s3 + $0x1f0] sm:$0xff]
  %v4097 = vld [vmem:[%s3 + $0x1f8] sm:$0xff]
  %v4098 = vld [vmem:[%s4] sm:$0x1]
  %v4100 = vperm.slane %v4098, 0
  %4102 = vmatpush.msra.mxu0 %v4049
  %4103 = vmatpush.msra.mxu0 %v4048
  %4104 = vmatpush.msra.mxu0 %v4047
  %4105 = vmatpush.msra.mxu0 %v4046
  %4106 = vmatpush.msra.mxu0 %v4045
  %4107 = vmatpush.msra.mxu0 %v4044
  %4108 = vmatpush.msra.mxu0 %v4043
  %4109 = vmatpush.msra.mxu0 %v4042
  %4110 = vmatpush.msra.mxu0 %v4041
  %4111 = vmatpush.msra.mxu0 %v4040
  %4112 = vmatpush.msra.mxu0 %v4039
  %4113 = vmatpush.msra.mxu0 %v4038
  %4114 = vmatpush.msra.mxu0 %v4037
  %4115 = vmatpush.msra.mxu0 %v4036
  %4116 = vmatpush.msra.mxu0 %v4035
  %4117 = vmatpush.msra.mxu0 %v4034
  %4118 = vmatmul.f32.gmra.mxu0 %v4026
  %v4119 = vpop.f32.mrf.mxu0
  %v4120 = vadd.f32 %v4100, %v4119
  %4121 = vmatmul.f32.gmra.mxu0 %v4030
  %v4122 = vpop.f32.mrf.mxu0
  %v4123 = vadd.f32 %v4100, %v4122
  %4124 = vdwg.mxu0
  %4125 = vmatpush.msra.mxu0 %v4065
  %4126 = vmatpush.msra.mxu0 %v4064
  %4127 = vmatpush.msra.mxu0 %v4063
  %4128 = vmatpush.msra.mxu0 %v4062
  %4129 = vmatpush.msra.mxu0 %v4061
  %4130 = vmatpush.msra.mxu0 %v4060
  %4131 = vmatpush.msra.mxu0 %v4059
  %4132 = vmatpush.msra.mxu0 %v4058
  %4133 = vmatpush.msra.mxu0 %v4057
  %4134 = vmatpush.msra.mxu0 %v4056
  %4135 = vmatpush.msra.mxu0 %v4055
  %4136 = vmatpush.msra.mxu0 %v4054
  %4137 = vmatpush.msra.mxu0 %v4053
  %4138 = vmatpush.msra.mxu0 %v4052
  %4139 = vmatpush.msra.mxu0 %v4051
  %4140 = vmatpush.msra.mxu0 %v4050
  %4141 = vmatmul.f32.gmra.mxu0 %v4027
  %v4142 = vpop.f32.mrf.mxu0
  %v4143 = vadd.f32 %v4120, %v4142
  %4144 = vmatmul.f32.gmra.mxu0 %v4031
  %v4145 = vpop.f32.mrf.mxu0
  %v4146 = vadd.f32 %v4123, %v4145
  %4147 = vdwg.mxu0
  %4148 = vmatpush.msra.mxu0 %v4081
  %4149 = vmatpush.msra.mxu0 %v4080
  %4150 = vmatpush.msra.mxu0 %v4079
  %4151 = vmatpush.msra.mxu0 %v4078
  %4152 = vmatpush.msra.mxu0 %v4077
  %4153 = vmatpush.msra.mxu0 %v4076
  %4154 = vmatpush.msra.mxu0 %v4075
  %4155 = vmatpush.msra.mxu0 %v4074
  %4156 = vmatpush.msra.mxu0 %v4073
  %4157 = vmatpush.msra.mxu0 %v4072
  %4158 = vmatpush.msra.mxu0 %v4071
  %4159 = vmatpush.msra.mxu0 %v4070
  %4160 = vmatpush.msra.mxu0 %v4069
  %4161 = vmatpush.msra.mxu0 %v4068
  %4162 = vmatpush.msra.mxu0 %v4067
  %4163 = vmatpush.msra.mxu0 %v4066
  %4164 = vmatmul.f32.gmra.mxu0 %v4028
  %v4165 = vpop.f32.mrf.mxu0
  %v4166 = vadd.f32 %v4143, %v4165
  %4167 = vmatmul.f32.gmra.mxu0 %v4032
  %v4168 = vpop.f32.mrf.mxu0
  %v4169 = vadd.f32 %v4146, %v4168
  %4170 = vdwg.mxu0
  %4171 = vmatpush.msra.mxu0 %v4097
  %4172 = vmatpush.msra.mxu0 %v4096
  %4173 = vmatpush.msra.mxu0 %v4095
  %4174 = vmatpush.msra.mxu0 %v4094
  %4175 = vmatpush.msra.mxu0 %v4093
  %4176 = vmatpush.msra.mxu0 %v4092
  %4177 = vmatpush.msra.mxu0 %v4091
  %4178 = vmatpush.msra.mxu0 %v4090
  %4179 = vmatpush.msra.mxu0 %v4089
  %4180 = vmatpush.msra.mxu0 %v4088
  %4181 = vmatpush.msra.mxu0 %v4087
  %4182 = vmatpush.msra.mxu0 %v4086
  %4183 = vmatpush.msra.mxu0 %v4085
  %4184 = vmatpush.msra.mxu0 %v4084
  %4185 = vmatpush.msra.mxu0 %v4083
  %4186 = vmatpush.msra.mxu0 %v4082
  %4187 = vmatmul.f32.gmra.mxu0 %v4029
  %v4188 = vpop.f32.mrf.mxu0
  %v4189 = vadd.f32 %v4166, %v4188
  %4190 = vmatmul.f32.gmra.mxu0 %v4033
  %v4191 = vpop.f32.mrf.mxu0
  %v4192 = vadd.f32 %v4169, %v4191
  %4193 = vdwg.mxu0
  %4194 = vst [vmem:[%s5] sm:$0xff] %v4189
  %4195 = vst [vmem:[%s5 + $0x8] sm:$0xff] %v4192
  // Predicated region
  $region22: #{conv2d_mnist_forward.5} parent=0 // pred_check
    _
  $region23: #{conv2d_mnist_forward.5} parent=0 // pred_check_branch
    %4197 = sbr.rel (0) target = $region25
  $region24: #{conv2d_mnist_forward.5} parent=0 // pred_region
    _
  $region25: #{conv2d_mnist_forward.5} parent=0 // pred_fallthru
    _
  // Predicated region
  $region26: #{conv2d_mnist_forward.5} parent=0 // pred_check
    _
  $region27: #{conv2d_mnist_forward.5} parent=0 // pred_check_branch
    %4199 = sbr.rel (0) target = $region29
  $region28: #{conv2d_mnist_forward.5} parent=0 // pred_region
    _
  $region29: #{conv2d_mnist_forward.5} parent=0 // pred_fallthru
    _

</llo_original>
